<compile_context>
chip_gen: v6e
topology: v6e:2x2x1
jax: 0.10.0
libtpu: 0.0.40
codegen_flags: <defaults>
</compile_context>

<pallas_src>
import functools

import jax
import jax.numpy as jnp
import numpy as np
from jax.experimental import pallas as pl
from jax.experimental.pallas import tpu as pltpu


def _lstm_classifier_kernel(xp_ref,    # (B, T, 4H) precomputed x @ W_ih0 + b0
                            whh0_ref,  # (H, 4H)    layer-0 recurrent weights
                            w1_ref,    # (2H, 4H)   concat([W_ih1; W_hh1])
                            b1_ref,    # (1, 4H)    b_ih1 + b_hh1
                            wout_ref,  # (H, Opad)  zero-padded head weights
                            bout_ref,  # (1, Opad)  head bias, -1e30 in padding
                            out_ref):  # (B, Opad)  softmax probabilities
    B, T, G = xp_ref.shape
    H = G // 4

    whh0 = whh0_ref[...]
    w1 = w1_ref[...]
    b1 = b1_ref[...]

    def lstm_nonlin(gates, c):
        # Full-vreg transcendental passes, then slice out the i/f/g/o quarters.
        sig = jax.nn.sigmoid(gates)
        th = jnp.tanh(gates)
        i_g = sig[:, 0 * H:1 * H]
        f_g = sig[:, 1 * H:2 * H]
        g_g = th[:, 2 * H:3 * H]
        o_g = sig[:, 3 * H:4 * H]
        c_new = f_g * c + i_g * g_g
        h_new = o_g * jnp.tanh(c_new)
        return h_new, c_new

    z = jnp.zeros((B, H), jnp.float32)
    h1, c1, h2, c2 = z, z, z, z

    # T is static and small -> fully unrolled; state stays in vregs throughout.
    for t in range(T):
        # Layer 0: input projection hoisted; only the recurrent matmul remains.
        g0 = xp_ref[:, t, :] + jnp.dot(h1, whh0,
                                       preferred_element_type=jnp.float32)
        h1, c1 = lstm_nonlin(g0, c1)
        # Layer 1: both matmuls fused into one via [h1, h2] @ [W_ih1; W_hh1].
        g1 = jnp.dot(jnp.concatenate([h1, h2], axis=1), w1,
                     preferred_element_type=jnp.float32) + b1
        h2, c2 = lstm_nonlin(g1, c2)

    logits = jnp.dot(h2, wout_ref[...],
                     preferred_element_type=jnp.float32) + bout_ref[...]
    m = jnp.max(logits, axis=1, keepdims=True)
    e = jnp.exp(logits - m)
    # Exact divide kept (runs once at the end); pl.reciprocal(approx=True) would
    # be free on the EUP but perturbs the result vs. the reference.
    out_ref[...] = (e / jnp.sum(e, axis=1, keepdims=True)).astype(out_ref.dtype)


@jax.jit
def lstm_classifier_forward(x, params):
    """x: (B, T, D) batch_first, like the PyTorch module. Returns (B, O) probs."""
    B, T, D = x.shape
    H = params["whh0"].shape[0]
    O = params["wout"].shape[1]
    O_pad = pl.cdiv(O, 128) * 128  # lane-dense head/output

    # Hoisted layer-0 input projection (off the serial h-dependence chain).
    xproj = (jnp.einsum("btd,dg->btg", x.astype(jnp.float32), params["wih0"],
                        preferred_element_type=jnp.float32)
             + params["b0"])                                        # (B, T, 4H)

    # Fused layer-1 weights: [h1 ; h2] @ [W_ih1 ; W_hh1].
    w1 = jnp.concatenate([params["wih1"], params["whh1"]], axis=0)  # (2H, 4H)

    # Lane-dense classifier head; -1e30 bias padding vanishes under softmax.
    wout_p = jnp.zeros((H, O_pad), jnp.float32).at[:, :O].set(params["wout"])
    bout_p = jnp.full((1, O_pad), -1e30, jnp.float32).at[:, :O].set(params["bout"])

    vmem = functools.partial(pl.BlockSpec, memory_space=pltpu.MemorySpace.VMEM)
    probs_padded = pl.pallas_call(
        _lstm_classifier_kernel,
        out_shape=jax.ShapeDtypeStruct((B, O_pad), jnp.float32),
        in_specs=[vmem() for _ in range(6)],
        out_specs=vmem(),
    )(xproj, params["whh0"], w1, params["b1"], wout_p, bout_p)

    return probs_padded[:, :O]


def init_params(key, input_dim, hidden_dim, output_dim):
    """Deterministic PyTorch-style init (uniform +-1/sqrt(H)). Weights stored
    pre-transposed so the math is x @ W; b_ih + b_hh pre-summed per layer."""
    H = hidden_dim
    k = 1.0 / np.sqrt(H)
    keys = jax.random.split(key, 10)
    u = lambda kk, shape: jax.random.uniform(kk, shape, jnp.float32, -k, k)
    params = {
        "wih0": u(keys[0], (input_dim, 4 * H)),
        "whh0": u(keys[1], (H, 4 * H)),
        "b0":   (u(keys[2], (1, 4 * H)) + u(keys[3], (1, 4 * H))),
        "wih1": u(keys[4], (H, 4 * H)),
        "whh1": u(keys[5], (H, 4 * H)),
        "b1":   (u(keys[6], (1, 4 * H)) + u(keys[7], (1, 4 * H))),
        "wout": u(keys[8], (H, output_dim)),
        "bout": u(keys[9], (1, output_dim)),
    }
    return params


def reference_forward(x, params):
    """Pure-JAX reference of the PyTorch module forward (for validation)."""
    B, T, D = x.shape
    H = params["whh0"].shape[0]

    def cell(x_in, h, c, wih, whh, b):
        gates = x_in @ wih + h @ whh + b
        i = jax.nn.sigmoid(gates[:, 0 * H:1 * H])
        f = jax.nn.sigmoid(gates[:, 1 * H:2 * H])
        g = jnp.tanh(gates[:, 2 * H:3 * H])
        o = jax.nn.sigmoid(gates[:, 3 * H:4 * H])
        c_new = f * c + i * g
        return o * jnp.tanh(c_new), c_new

    def step(carry, x_t):
        h1, c1, h2, c2 = carry
        h1, c1 = cell(x_t, h1, c1, params["wih0"], params["whh0"], params["b0"])
        h2, c2 = cell(h1, h2, c2, params["wih1"], params["whh1"], params["b1"])
        return (h1, c1, h2, c2), None

    zeros = jnp.zeros((B, H), jnp.float32)
    (h1, c1, h2, c2), _ = jax.lax.scan(step, (zeros, zeros, zeros, zeros),
                                       jnp.transpose(x, (1, 0, 2)))
    logits = h2 @ params["wout"] + params["bout"]
    return jax.nn.softmax(logits, axis=1)


if __name__ == "__main__":
    # small shapes consistent with the module: batch=8, seq=8, D=16, H=32, O=4
    B, T, D, H, O = 8, 8, 16, 32, 4

    key = jax.random.PRNGKey(0)
    k_x, k_p = jax.random.split(key)
    x = jax.random.normal(k_x, (B, T, D), jnp.float32)
    params = init_params(k_p, D, H, O)

    probs = lstm_classifier_forward(x, params)
    probs = jax.block_until_ready(probs)

    ref = reference_forward(x, params)
    np.testing.assert_allclose(np.asarray(probs), np.asarray(ref),
                               rtol=1e-5, atol=1e-5)

    print("KERNEL_OK")
</pallas_src>

<mosaic_0001>
module attributes {stable_mosaic.version = 11 : i64} {
  func.func @_lstm_classifier_kernel(%arg0: memref<8x8x128xf32, #tpu.memory_space<vmem>>, %arg1: memref<32x128xf32, #tpu.memory_space<vmem>>, %arg2: memref<64x128xf32, #tpu.memory_space<vmem>>, %arg3: memref<1x128xf32, #tpu.memory_space<vmem>>, %arg4: memref<32x128xf32, #tpu.memory_space<vmem>>, %arg5: memref<1x128xf32, #tpu.memory_space<vmem>>, %arg6: memref<8x128xf32, #tpu.memory_space<vmem>>) attributes {dimension_semantics = [], scalar_prefetch = 0 : i64, scratch_operands = 0 : i64, tpu.core_type = #tpu.core_type<tc>} {
    %c0 = arith.constant 0 : index
    %c0_0 = arith.constant 0 : index
    %0 = vector.load %arg1[%c0, %c0_0] : memref<32x128xf32, #tpu.memory_space<vmem>>, vector<32x128xf32>
    %c0_1 = arith.constant 0 : index
    %c0_2 = arith.constant 0 : index
    %1 = vector.load %arg2[%c0_1, %c0_2] : memref<64x128xf32, #tpu.memory_space<vmem>>, vector<64x128xf32>
    %c0_3 = arith.constant 0 : index
    %c0_4 = arith.constant 0 : index
    %2 = vector.load %arg3[%c0_3, %c0_4] : memref<1x128xf32, #tpu.memory_space<vmem>>, vector<1x128xf32>
    %cst = arith.constant 0.000000e+00 : f32
    %3 = vector.broadcast %cst : f32 to vector<8x32xf32>
    %c0_5 = arith.constant 0 : index
    %c0_6 = arith.constant 0 : index
    %c0_7 = arith.constant 0 : index
    %4 = vector.load %arg0[%c0_5, %c0_6, %c0_7] : memref<8x8x128xf32, #tpu.memory_space<vmem>>, vector<8x1x128xf32>
    %5 = vector.shape_cast %4 : vector<8x1x128xf32> to vector<8x128xf32>
    %cst_8 = arith.constant dense<0.000000e+00> : vector<8x128xf32>
    %6 = tpu.matmul %3, %0, %cst_8 {dimension_numbers = #tpu.dot_dimension_numbers<[1], [0], [0], [1], [0, 0, 1, 1], [], []>} : vector<8x32xf32>, vector<32x128xf32>, vector<8x128xf32> -> vector<8x128xf32>
    %7 = arith.addf %5, %6 : vector<8x128xf32>
    %8 = arith.negf %7 : vector<8x128xf32>
    %9 = math.exp %8 : vector<8x128xf32>
    %cst_9 = arith.constant 1.000000e+00 : f32
    %10 = vector.broadcast %cst_9 : f32 to vector<8x128xf32>
    %11 = arith.addf %10, %9 : vector<8x128xf32>
    %12 = arith.divf %10, %11 : vector<8x128xf32>
    %13 = math.tanh %7 : vector<8x128xf32>
    %14 = vector.extract_strided_slice %12 {offsets = [0, 0], sizes = [8, 32], strides = [1, 1]} : vector<8x128xf32> to vector<8x32xf32>
    %15 = vector.extract_strided_slice %12 {offsets = [0, 32], sizes = [8, 32], strides = [1, 1]} : vector<8x128xf32> to vector<8x32xf32>
    %16 = vector.extract_strided_slice %13 {offsets = [0, 64], sizes = [8, 32], strides = [1, 1]} : vector<8x128xf32> to vector<8x32xf32>
    %17 = vector.extract_strided_slice %12 {offsets = [0, 96], sizes = [8, 32], strides = [1, 1]} : vector<8x128xf32> to vector<8x32xf32>
    %18 = arith.mulf %15, %3 : vector<8x32xf32>
    %19 = arith.mulf %14, %16 : vector<8x32xf32>
    %20 = arith.addf %18, %19 : vector<8x32xf32>
    %21 = math.tanh %20 : vector<8x32xf32>
    %22 = arith.mulf %17, %21 : vector<8x32xf32>
    %23 = tpu.concatenate %22, %3 in 1 : vector<8x32xf32>, vector<8x32xf32> -> vector<8x64xf32>
    %cst_10 = arith.constant dense<0.000000e+00> : vector<8x128xf32>
    %24 = tpu.matmul %23, %1, %cst_10 {dimension_numbers = #tpu.dot_dimension_numbers<[1], [0], [0], [1], [0, 0, 1, 1], [], []>} : vector<8x64xf32>, vector<64x128xf32>, vector<8x128xf32> -> vector<8x128xf32>
    %25 = vector.broadcast %2 : vector<1x128xf32> to vector<8x128xf32>
    %26 = arith.addf %24, %25 : vector<8x128xf32>
    %27 = arith.negf %26 : vector<8x128xf32>
    %28 = math.exp %27 : vector<8x128xf32>
    %cst_11 = arith.constant 1.000000e+00 : f32
    %29 = vector.broadcast %cst_11 : f32 to vector<8x128xf32>
    %30 = arith.addf %29, %28 : vector<8x128xf32>
    %31 = arith.divf %29, %30 : vector<8x128xf32>
    %32 = math.tanh %26 : vector<8x128xf32>
    %33 = vector.extract_strided_slice %31 {offsets = [0, 0], sizes = [8, 32], strides = [1, 1]} : vector<8x128xf32> to vector<8x32xf32>
    %34 = vector.extract_strided_slice %31 {offsets = [0, 32], sizes = [8, 32], strides = [1, 1]} : vector<8x128xf32> to vector<8x32xf32>
    %35 = vector.extract_strided_slice %32 {offsets = [0, 64], sizes = [8, 32], strides = [1, 1]} : vector<8x128xf32> to vector<8x32xf32>
    %36 = vector.extract_strided_slice %31 {offsets = [0, 96], sizes = [8, 32], strides = [1, 1]} : vector<8x128xf32> to vector<8x32xf32>
    %37 = arith.mulf %34, %3 : vector<8x32xf32>
    %38 = arith.mulf %33, %35 : vector<8x32xf32>
    %39 = arith.addf %37, %38 : vector<8x32xf32>
    %40 = math.tanh %39 : vector<8x32xf32>
    %41 = arith.mulf %36, %40 : vector<8x32xf32>
    %c0_12 = arith.constant 0 : index
    %c1 = arith.constant 1 : index
    %c0_13 = arith.constant 0 : index
    %42 = vector.load %arg0[%c0_12, %c1, %c0_13] : memref<8x8x128xf32, #tpu.memory_space<vmem>>, vector<8x1x128xf32>
    %43 = vector.shape_cast %42 : vector<8x1x128xf32> to vector<8x128xf32>
    %cst_14 = arith.constant dense<0.000000e+00> : vector<8x128xf32>
    %44 = tpu.matmul %22, %0, %cst_14 {dimension_numbers = #tpu.dot_dimension_numbers<[1], [0], [0], [1], [0, 0, 1, 1], [], []>} : vector<8x32xf32>, vector<32x128xf32>, vector<8x128xf32> -> vector<8x128xf32>
    %45 = arith.addf %43, %44 : vector<8x128xf32>
    %46 = arith.negf %45 : vector<8x128xf32>
    %47 = math.exp %46 : vector<8x128xf32>
    %cst_15 = arith.constant 1.000000e+00 : f32
    %48 = vector.broadcast %cst_15 : f32 to vector<8x128xf32>
    %49 = arith.addf %48, %47 : vector<8x128xf32>
    %50 = arith.divf %48, %49 : vector<8x128xf32>
    %51 = math.tanh %45 : vector<8x128xf32>
    %52 = vector.extract_strided_slice %50 {offsets = [0, 0], sizes = [8, 32], strides = [1, 1]} : vector<8x128xf32> to vector<8x32xf32>
    %53 = vector.extract_strided_slice %50 {offsets = [0, 32], sizes = [8, 32], strides = [1, 1]} : vector<8x128xf32> to vector<8x32xf32>
    %54 = vector.extract_strided_slice %51 {offsets = [0, 64], sizes = [8, 32], strides = [1, 1]} : vector<8x128xf32> to vector<8x32xf32>
    %55 = vector.extract_strided_slice %50 {offsets = [0, 96], sizes = [8, 32], strides = [1, 1]} : vector<8x128xf32> to vector<8x32xf32>
    %56 = arith.mulf %53, %20 : vector<8x32xf32>
    %57 = arith.mulf %52, %54 : vector<8x32xf32>
    %58 = arith.addf %56, %57 : vector<8x32xf32>
    %59 = math.tanh %58 : vector<8x32xf32>
    %60 = arith.mulf %55, %59 : vector<8x32xf32>
    %61 = tpu.concatenate %60, %41 in 1 : vector<8x32xf32>, vector<8x32xf32> -> vector<8x64xf32>
    %cst_16 = arith.constant dense<0.000000e+00> : vector<8x128xf32>
    %62 = tpu.matmul %61, %1, %cst_16 {dimension_numbers = #tpu.dot_dimension_numbers<[1], [0], [0], [1], [0, 0, 1, 1], [], []>} : vector<8x64xf32>, vector<64x128xf32>, vector<8x128xf32> -> vector<8x128xf32>
    %63 = vector.broadcast %2 : vector<1x128xf32> to vector<8x128xf32>
    %64 = arith.addf %62, %63 : vector<8x128xf32>
    %65 = arith.negf %64 : vector<8x128xf32>
    %66 = math.exp %65 : vector<8x128xf32>
    %cst_17 = arith.constant 1.000000e+00 : f32
    %67 = vector.broadcast %cst_17 : f32 to vector<8x128xf32>
    %68 = arith.addf %67, %66 : vector<8x128xf32>
    %69 = arith.divf %67, %68 : vector<8x128xf32>
    %70 = math.tanh %64 : vector<8x128xf32>
    %71 = vector.extract_strided_slice %69 {offsets = [0, 0], sizes = [8, 32], strides = [1, 1]} : vector<8x128xf32> to vector<8x32xf32>
    %72 = vector.extract_strided_slice %69 {offsets = [0, 32], sizes = [8, 32], strides = [1, 1]} : vector<8x128xf32> to vector<8x32xf32>
    %73 = vector.extract_strided_slice %70 {offsets = [0, 64], sizes = [8, 32], strides = [1, 1]} : vector<8x128xf32> to vector<8x32xf32>
    %74 = vector.extract_strided_slice %69 {offsets = [0, 96], sizes = [8, 32], strides = [1, 1]} : vector<8x128xf32> to vector<8x32xf32>
    %75 = arith.mulf %72, %39 : vector<8x32xf32>
    %76 = arith.mulf %71, %73 : vector<8x32xf32>
    %77 = arith.addf %75, %76 : vector<8x32xf32>
    %78 = math.tanh %77 : vector<8x32xf32>
    %79 = arith.mulf %74, %78 : vector<8x32xf32>
    %c0_18 = arith.constant 0 : index
    %c2 = arith.constant 2 : index
    %c0_19 = arith.constant 0 : index
    %80 = vector.load %arg0[%c0_18, %c2, %c0_19] : memref<8x8x128xf32, #tpu.memory_space<vmem>>, vector<8x1x128xf32>
    %81 = vector.shape_cast %80 : vector<8x1x128xf32> to vector<8x128xf32>
    %cst_20 = arith.constant dense<0.000000e+00> : vector<8x128xf32>
    %82 = tpu.matmul %60, %0, %cst_20 {dimension_numbers = #tpu.dot_dimension_numbers<[1], [0], [0], [1], [0, 0, 1, 1], [], []>} : vector<8x32xf32>, vector<32x128xf32>, vector<8x128xf32> -> vector<8x128xf32>
    %83 = arith.addf %81, %82 : vector<8x128xf32>
    %84 = arith.negf %83 : vector<8x128xf32>
    %85 = math.exp %84 : vector<8x128xf32>
    %cst_21 = arith.constant 1.000000e+00 : f32
    %86 = vector.broadcast %cst_21 : f32 to vector<8x128xf32>
    %87 = arith.addf %86, %85 : vector<8x128xf32>
    %88 = arith.divf %86, %87 : vector<8x128xf32>
    %89 = math.tanh %83 : vector<8x128xf32>
    %90 = vector.extract_strided_slice %88 {offsets = [0, 0], sizes = [8, 32], strides = [1, 1]} : vector<8x128xf32> to vector<8x32xf32>
    %91 = vector.extract_strided_slice %88 {offsets = [0, 32], sizes = [8, 32], strides = [1, 1]} : vector<8x128xf32> to vector<8x32xf32>
    %92 = vector.extract_strided_slice %89 {offsets = [0, 64], sizes = [8, 32], strides = [1, 1]} : vector<8x128xf32> to vector<8x32xf32>
    %93 = vector.extract_strided_slice %88 {offsets = [0, 96], sizes = [8, 32], strides = [1, 1]} : vector<8x128xf32> to vector<8x32xf32>
    %94 = arith.mulf %91, %58 : vector<8x32xf32>
    %95 = arith.mulf %90, %92 : vector<8x32xf32>
    %96 = arith.addf %94, %95 : vector<8x32xf32>
    %97 = math.tanh %96 : vector<8x32xf32>
    %98 = arith.mulf %93, %97 : vector<8x32xf32>
    %99 = tpu.concatenate %98, %79 in 1 : vector<8x32xf32>, vector<8x32xf32> -> vector<8x64xf32>
    %cst_22 = arith.constant dense<0.000000e+00> : vector<8x128xf32>
    %100 = tpu.matmul %99, %1, %cst_22 {dimension_numbers = #tpu.dot_dimension_numbers<[1], [0], [0], [1], [0, 0, 1, 1], [], []>} : vector<8x64xf32>, vector<64x128xf32>, vector<8x128xf32> -> vector<8x128xf32>
    %101 = vector.broadcast %2 : vector<1x128xf32> to vector<8x128xf32>
    %102 = arith.addf %100, %101 : vector<8x128xf32>
    %103 = arith.negf %102 : vector<8x128xf32>
    %104 = math.exp %103 : vector<8x128xf32>
    %cst_23 = arith.constant 1.000000e+00 : f32
    %105 = vector.broadcast %cst_23 : f32 to vector<8x128xf32>
    %106 = arith.addf %105, %104 : vector<8x128xf32>
    %107 = arith.divf %105, %106 : vector<8x128xf32>
    %108 = math.tanh %102 : vector<8x128xf32>
    %109 = vector.extract_strided_slice %107 {offsets = [0, 0], sizes = [8, 32], strides = [1, 1]} : vector<8x128xf32> to vector<8x32xf32>
    %110 = vector.extract_strided_slice %107 {offsets = [0, 32], sizes = [8, 32], strides = [1, 1]} : vector<8x128xf32> to vector<8x32xf32>
    %111 = vector.extract_strided_slice %108 {offsets = [0, 64], sizes = [8, 32], strides = [1, 1]} : vector<8x128xf32> to vector<8x32xf32>
    %112 = vector.extract_strided_slice %107 {offsets = [0, 96], sizes = [8, 32], strides = [1, 1]} : vector<8x128xf32> to vector<8x32xf32>
    %113 = arith.mulf %110, %77 : vector<8x32xf32>
    %114 = arith.mulf %109, %111 : vector<8x32xf32>
    %115 = arith.addf %113, %114 : vector<8x32xf32>
    %116 = math.tanh %115 : vector<8x32xf32>
    %117 = arith.mulf %112, %116 : vector<8x32xf32>
    %c0_24 = arith.constant 0 : index
    %c3 = arith.constant 3 : index
    %c0_25 = arith.constant 0 : index
    %118 = vector.load %arg0[%c0_24, %c3, %c0_25] : memref<8x8x128xf32, #tpu.memory_space<vmem>>, vector<8x1x128xf32>
    %119 = vector.shape_cast %118 : vector<8x1x128xf32> to vector<8x128xf32>
    %cst_26 = arith.constant dense<0.000000e+00> : vector<8x128xf32>
    %120 = tpu.matmul %98, %0, %cst_26 {dimension_numbers = #tpu.dot_dimension_numbers<[1], [0], [0], [1], [0, 0, 1, 1], [], []>} : vector<8x32xf32>, vector<32x128xf32>, vector<8x128xf32> -> vector<8x128xf32>
    %121 = arith.addf %119, %120 : vector<8x128xf32>
    %122 = arith.negf %121 : vector<8x128xf32>
    %123 = math.exp %122 : vector<8x128xf32>
    %cst_27 = arith.constant 1.000000e+00 : f32
    %124 = vector.broadcast %cst_27 : f32 to vector<8x128xf32>
    %125 = arith.addf %124, %123 : vector<8x128xf32>
    %126 = arith.divf %124, %125 : vector<8x128xf32>
    %127 = math.tanh %121 : vector<8x128xf32>
    %128 = vector.extract_strided_slice %126 {offsets = [0, 0], sizes = [8, 32], strides = [1, 1]} : vector<8x128xf32> to vector<8x32xf32>
    %129 = vector.extract_strided_slice %126 {offsets = [0, 32], sizes = [8, 32], strides = [1, 1]} : vector<8x128xf32> to vector<8x32xf32>
    %130 = vector.extract_strided_slice %127 {offsets = [0, 64], sizes = [8, 32], strides = [1, 1]} : vector<8x128xf32> to vector<8x32xf32>
    %131 = vector.extract_strided_slice %126 {offsets = [0, 96], sizes = [8, 32], strides = [1, 1]} : vector<8x128xf32> to vector<8x32xf32>
    %132 = arith.mulf %129, %96 : vector<8x32xf32>
    %133 = arith.mulf %128, %130 : vector<8x32xf32>
    %134 = arith.addf %132, %133 : vector<8x32xf32>
    %135 = math.tanh %134 : vector<8x32xf32>
    %136 = arith.mulf %131, %135 : vector<8x32xf32>
    %137 = tpu.concatenate %136, %117 in 1 : vector<8x32xf32>, vector<8x32xf32> -> vector<8x64xf32>
    %cst_28 = arith.constant dense<0.000000e+00> : vector<8x128xf32>
    %138 = tpu.matmul %137, %1, %cst_28 {dimension_numbers = #tpu.dot_dimension_numbers<[1], [0], [0], [1], [0, 0, 1, 1], [], []>} : vector<8x64xf32>, vector<64x128xf32>, vector<8x128xf32> -> vector<8x128xf32>
    %139 = vector.broadcast %2 : vector<1x128xf32> to vector<8x128xf32>
    %140 = arith.addf %138, %139 : vector<8x128xf32>
    %141 = arith.negf %140 : vector<8x128xf32>
    %142 = math.exp %141 : vector<8x128xf32>
    %cst_29 = arith.constant 1.000000e+00 : f32
    %143 = vector.broadcast %cst_29 : f32 to vector<8x128xf32>
    %144 = arith.addf %143, %142 : vector<8x128xf32>
    %145 = arith.divf %143, %144 : vector<8x128xf32>
    %146 = math.tanh %140 : vector<8x128xf32>
    %147 = vector.extract_strided_slice %145 {offsets = [0, 0], sizes = [8, 32], strides = [1, 1]} : vector<8x128xf32> to vector<8x32xf32>
    %148 = vector.extract_strided_slice %145 {offsets = [0, 32], sizes = [8, 32], strides = [1, 1]} : vector<8x128xf32> to vector<8x32xf32>
    %149 = vector.extract_strided_slice %146 {offsets = [0, 64], sizes = [8, 32], strides = [1, 1]} : vector<8x128xf32> to vector<8x32xf32>
    %150 = vector.extract_strided_slice %145 {offsets = [0, 96], sizes = [8, 32], strides = [1, 1]} : vector<8x128xf32> to vector<8x32xf32>
    %151 = arith.mulf %148, %115 : vector<8x32xf32>
    %152 = arith.mulf %147, %149 : vector<8x32xf32>
    %153 = arith.addf %151, %152 : vector<8x32xf32>
    %154 = math.tanh %153 : vector<8x32xf32>
    %155 = arith.mulf %150, %154 : vector<8x32xf32>
    %c0_30 = arith.constant 0 : index
    %c4 = arith.constant 4 : index
    %c0_31 = arith.constant 0 : index
    %156 = vector.load %arg0[%c0_30, %c4, %c0_31] : memref<8x8x128xf32, #tpu.memory_space<vmem>>, vector<8x1x128xf32>
    %157 = vector.shape_cast %156 : vector<8x1x128xf32> to vector<8x128xf32>
    %cst_32 = arith.constant dense<0.000000e+00> : vector<8x128xf32>
    %158 = tpu.matmul %136, %0, %cst_32 {dimension_numbers = #tpu.dot_dimension_numbers<[1], [0], [0], [1], [0, 0, 1, 1], [], []>} : vector<8x32xf32>, vector<32x128xf32>, vector<8x128xf32> -> vector<8x128xf32>
    %159 = arith.addf %157, %158 : vector<8x128xf32>
    %160 = arith.negf %159 : vector<8x128xf32>
    %161 = math.exp %160 : vector<8x128xf32>
    %cst_33 = arith.constant 1.000000e+00 : f32
    %162 = vector.broadcast %cst_33 : f32 to vector<8x128xf32>
    %163 = arith.addf %162, %161 : vector<8x128xf32>
    %164 = arith.divf %162, %163 : vector<8x128xf32>
    %165 = math.tanh %159 : vector<8x128xf32>
    %166 = vector.extract_strided_slice %164 {offsets = [0, 0], sizes = [8, 32], strides = [1, 1]} : vector<8x128xf32> to vector<8x32xf32>
    %167 = vector.extract_strided_slice %164 {offsets = [0, 32], sizes = [8, 32], strides = [1, 1]} : vector<8x128xf32> to vector<8x32xf32>
    %168 = vector.extract_strided_slice %165 {offsets = [0, 64], sizes = [8, 32], strides = [1, 1]} : vector<8x128xf32> to vector<8x32xf32>
    %169 = vector.extract_strided_slice %164 {offsets = [0, 96], sizes = [8, 32], strides = [1, 1]} : vector<8x128xf32> to vector<8x32xf32>
    %170 = arith.mulf %167, %134 : vector<8x32xf32>
    %171 = arith.mulf %166, %168 : vector<8x32xf32>
    %172 = arith.addf %170, %171 : vector<8x32xf32>
    %173 = math.tanh %172 : vector<8x32xf32>
    %174 = arith.mulf %169, %173 : vector<8x32xf32>
    %175 = tpu.concatenate %174, %155 in 1 : vector<8x32xf32>, vector<8x32xf32> -> vector<8x64xf32>
    %cst_34 = arith.constant dense<0.000000e+00> : vector<8x128xf32>
    %176 = tpu.matmul %175, %1, %cst_34 {dimension_numbers = #tpu.dot_dimension_numbers<[1], [0], [0], [1], [0, 0, 1, 1], [], []>} : vector<8x64xf32>, vector<64x128xf32>, vector<8x128xf32> -> vector<8x128xf32>
    %177 = vector.broadcast %2 : vector<1x128xf32> to vector<8x128xf32>
    %178 = arith.addf %176, %177 : vector<8x128xf32>
    %179 = arith.negf %178 : vector<8x128xf32>
    %180 = math.exp %179 : vector<8x128xf32>
    %cst_35 = arith.constant 1.000000e+00 : f32
    %181 = vector.broadcast %cst_35 : f32 to vector<8x128xf32>
    %182 = arith.addf %181, %180 : vector<8x128xf32>
    %183 = arith.divf %181, %182 : vector<8x128xf32>
    %184 = math.tanh %178 : vector<8x128xf32>
    %185 = vector.extract_strided_slice %183 {offsets = [0, 0], sizes = [8, 32], strides = [1, 1]} : vector<8x128xf32> to vector<8x32xf32>
    %186 = vector.extract_strided_slice %183 {offsets = [0, 32], sizes = [8, 32], strides = [1, 1]} : vector<8x128xf32> to vector<8x32xf32>
    %187 = vector.extract_strided_slice %184 {offsets = [0, 64], sizes = [8, 32], strides = [1, 1]} : vector<8x128xf32> to vector<8x32xf32>
    %188 = vector.extract_strided_slice %183 {offsets = [0, 96], sizes = [8, 32], strides = [1, 1]} : vector<8x128xf32> to vector<8x32xf32>
    %189 = arith.mulf %186, %153 : vector<8x32xf32>
    %190 = arith.mulf %185, %187 : vector<8x32xf32>
    %191 = arith.addf %189, %190 : vector<8x32xf32>
    %192 = math.tanh %191 : vector<8x32xf32>
    %193 = arith.mulf %188, %192 : vector<8x32xf32>
    %c0_36 = arith.constant 0 : index
    %c5 = arith.constant 5 : index
    %c0_37 = arith.constant 0 : index
    %194 = vector.load %arg0[%c0_36, %c5, %c0_37] : memref<8x8x128xf32, #tpu.memory_space<vmem>>, vector<8x1x128xf32>
    %195 = vector.shape_cast %194 : vector<8x1x128xf32> to vector<8x128xf32>
    %cst_38 = arith.constant dense<0.000000e+00> : vector<8x128xf32>
    %196 = tpu.matmul %174, %0, %cst_38 {dimension_numbers = #tpu.dot_dimension_numbers<[1], [0], [0], [1], [0, 0, 1, 1], [], []>} : vector<8x32xf32>, vector<32x128xf32>, vector<8x128xf32> -> vector<8x128xf32>
    %197 = arith.addf %195, %196 : vector<8x128xf32>
    %198 = arith.negf %197 : vector<8x128xf32>
    %199 = math.exp %198 : vector<8x128xf32>
    %cst_39 = arith.constant 1.000000e+00 : f32
    %200 = vector.broadcast %cst_39 : f32 to vector<8x128xf32>
    %201 = arith.addf %200, %199 : vector<8x128xf32>
    %202 = arith.divf %200, %201 : vector<8x128xf32>
    %203 = math.tanh %197 : vector<8x128xf32>
    %204 = vector.extract_strided_slice %202 {offsets = [0, 0], sizes = [8, 32], strides = [1, 1]} : vector<8x128xf32> to vector<8x32xf32>
    %205 = vector.extract_strided_slice %202 {offsets = [0, 32], sizes = [8, 32], strides = [1, 1]} : vector<8x128xf32> to vector<8x32xf32>
    %206 = vector.extract_strided_slice %203 {offsets = [0, 64], sizes = [8, 32], strides = [1, 1]} : vector<8x128xf32> to vector<8x32xf32>
    %207 = vector.extract_strided_slice %202 {offsets = [0, 96], sizes = [8, 32], strides = [1, 1]} : vector<8x128xf32> to vector<8x32xf32>
    %208 = arith.mulf %205, %172 : vector<8x32xf32>
    %209 = arith.mulf %204, %206 : vector<8x32xf32>
    %210 = arith.addf %208, %209 : vector<8x32xf32>
    %211 = math.tanh %210 : vector<8x32xf32>
    %212 = arith.mulf %207, %211 : vector<8x32xf32>
    %213 = tpu.concatenate %212, %193 in 1 : vector<8x32xf32>, vector<8x32xf32> -> vector<8x64xf32>
    %cst_40 = arith.constant dense<0.000000e+00> : vector<8x128xf32>
    %214 = tpu.matmul %213, %1, %cst_40 {dimension_numbers = #tpu.dot_dimension_numbers<[1], [0], [0], [1], [0, 0, 1, 1], [], []>} : vector<8x64xf32>, vector<64x128xf32>, vector<8x128xf32> -> vector<8x128xf32>
    %215 = vector.broadcast %2 : vector<1x128xf32> to vector<8x128xf32>
    %216 = arith.addf %214, %215 : vector<8x128xf32>
    %217 = arith.negf %216 : vector<8x128xf32>
    %218 = math.exp %217 : vector<8x128xf32>
    %cst_41 = arith.constant 1.000000e+00 : f32
    %219 = vector.broadcast %cst_41 : f32 to vector<8x128xf32>
    %220 = arith.addf %219, %218 : vector<8x128xf32>
    %221 = arith.divf %219, %220 : vector<8x128xf32>
    %222 = math.tanh %216 : vector<8x128xf32>
    %223 = vector.extract_strided_slice %221 {offsets = [0, 0], sizes = [8, 32], strides = [1, 1]} : vector<8x128xf32> to vector<8x32xf32>
    %224 = vector.extract_strided_slice %221 {offsets = [0, 32], sizes = [8, 32], strides = [1, 1]} : vector<8x128xf32> to vector<8x32xf32>
    %225 = vector.extract_strided_slice %222 {offsets = [0, 64], sizes = [8, 32], strides = [1, 1]} : vector<8x128xf32> to vector<8x32xf32>
    %226 = vector.extract_strided_slice %221 {offsets = [0, 96], sizes = [8, 32], strides = [1, 1]} : vector<8x128xf32> to vector<8x32xf32>
    %227 = arith.mulf %224, %191 : vector<8x32xf32>
    %228 = arith.mulf %223, %225 : vector<8x32xf32>
    %229 = arith.addf %227, %228 : vector<8x32xf32>
    %230 = math.tanh %229 : vector<8x32xf32>
    %231 = arith.mulf %226, %230 : vector<8x32xf32>
    %c0_42 = arith.constant 0 : index
    %c6 = arith.constant 6 : index
    %c0_43 = arith.constant 0 : index
    %232 = vector.load %arg0[%c0_42, %c6, %c0_43] : memref<8x8x128xf32, #tpu.memory_space<vmem>>, vector<8x1x128xf32>
    %233 = vector.shape_cast %232 : vector<8x1x128xf32> to vector<8x128xf32>
    %cst_44 = arith.constant dense<0.000000e+00> : vector<8x128xf32>
    %234 = tpu.matmul %212, %0, %cst_44 {dimension_numbers = #tpu.dot_dimension_numbers<[1], [0], [0], [1], [0, 0, 1, 1], [], []>} : vector<8x32xf32>, vector<32x128xf32>, vector<8x128xf32> -> vector<8x128xf32>
    %235 = arith.addf %233, %234 : vector<8x128xf32>
    %236 = arith.negf %235 : vector<8x128xf32>
    %237 = math.exp %236 : vector<8x128xf32>
    %cst_45 = arith.constant 1.000000e+00 : f32
    %238 = vector.broadcast %cst_45 : f32 to vector<8x128xf32>
    %239 = arith.addf %238, %237 : vector<8x128xf32>
    %240 = arith.divf %238, %239 : vector<8x128xf32>
    %241 = math.tanh %235 : vector<8x128xf32>
    %242 = vector.extract_strided_slice %240 {offsets = [0, 0], sizes = [8, 32], strides = [1, 1]} : vector<8x128xf32> to vector<8x32xf32>
    %243 = vector.extract_strided_slice %240 {offsets = [0, 32], sizes = [8, 32], strides = [1, 1]} : vector<8x128xf32> to vector<8x32xf32>
    %244 = vector.extract_strided_slice %241 {offsets = [0, 64], sizes = [8, 32], strides = [1, 1]} : vector<8x128xf32> to vector<8x32xf32>
    %245 = vector.extract_strided_slice %240 {offsets = [0, 96], sizes = [8, 32], strides = [1, 1]} : vector<8x128xf32> to vector<8x32xf32>
    %246 = arith.mulf %243, %210 : vector<8x32xf32>
    %247 = arith.mulf %242, %244 : vector<8x32xf32>
    %248 = arith.addf %246, %247 : vector<8x32xf32>
    %249 = math.tanh %248 : vector<8x32xf32>
    %250 = arith.mulf %245, %249 : vector<8x32xf32>
    %251 = tpu.concatenate %250, %231 in 1 : vector<8x32xf32>, vector<8x32xf32> -> vector<8x64xf32>
    %cst_46 = arith.constant dense<0.000000e+00> : vector<8x128xf32>
    %252 = tpu.matmul %251, %1, %cst_46 {dimension_numbers = #tpu.dot_dimension_numbers<[1], [0], [0], [1], [0, 0, 1, 1], [], []>} : vector<8x64xf32>, vector<64x128xf32>, vector<8x128xf32> -> vector<8x128xf32>
    %253 = vector.broadcast %2 : vector<1x128xf32> to vector<8x128xf32>
    %254 = arith.addf %252, %253 : vector<8x128xf32>
    %255 = arith.negf %254 : vector<8x128xf32>
    %256 = math.exp %255 : vector<8x128xf32>
    %cst_47 = arith.constant 1.000000e+00 : f32
    %257 = vector.broadcast %cst_47 : f32 to vector<8x128xf32>
    %258 = arith.addf %257, %256 : vector<8x128xf32>
    %259 = arith.divf %257, %258 : vector<8x128xf32>
    %260 = math.tanh %254 : vector<8x128xf32>
    %261 = vector.extract_strided_slice %259 {offsets = [0, 0], sizes = [8, 32], strides = [1, 1]} : vector<8x128xf32> to vector<8x32xf32>
    %262 = vector.extract_strided_slice %259 {offsets = [0, 32], sizes = [8, 32], strides = [1, 1]} : vector<8x128xf32> to vector<8x32xf32>
    %263 = vector.extract_strided_slice %260 {offsets = [0, 64], sizes = [8, 32], strides = [1, 1]} : vector<8x128xf32> to vector<8x32xf32>
    %264 = vector.extract_strided_slice %259 {offsets = [0, 96], sizes = [8, 32], strides = [1, 1]} : vector<8x128xf32> to vector<8x32xf32>
    %265 = arith.mulf %262, %229 : vector<8x32xf32>
    %266 = arith.mulf %261, %263 : vector<8x32xf32>
    %267 = arith.addf %265, %266 : vector<8x32xf32>
    %268 = math.tanh %267 : vector<8x32xf32>
    %269 = arith.mulf %264, %268 : vector<8x32xf32>
    %c0_48 = arith.constant 0 : index
    %c7 = arith.constant 7 : index
    %c0_49 = arith.constant 0 : index
    %270 = vector.load %arg0[%c0_48, %c7, %c0_49] : memref<8x8x128xf32, #tpu.memory_space<vmem>>, vector<8x1x128xf32>
    %271 = vector.shape_cast %270 : vector<8x1x128xf32> to vector<8x128xf32>
    %cst_50 = arith.constant dense<0.000000e+00> : vector<8x128xf32>
    %272 = tpu.matmul %250, %0, %cst_50 {dimension_numbers = #tpu.dot_dimension_numbers<[1], [0], [0], [1], [0, 0, 1, 1], [], []>} : vector<8x32xf32>, vector<32x128xf32>, vector<8x128xf32> -> vector<8x128xf32>
    %273 = arith.addf %271, %272 : vector<8x128xf32>
    %274 = arith.negf %273 : vector<8x128xf32>
    %275 = math.exp %274 : vector<8x128xf32>
    %cst_51 = arith.constant 1.000000e+00 : f32
    %276 = vector.broadcast %cst_51 : f32 to vector<8x128xf32>
    %277 = arith.addf %276, %275 : vector<8x128xf32>
    %278 = arith.divf %276, %277 : vector<8x128xf32>
    %279 = math.tanh %273 : vector<8x128xf32>
    %280 = vector.extract_strided_slice %278 {offsets = [0, 0], sizes = [8, 32], strides = [1, 1]} : vector<8x128xf32> to vector<8x32xf32>
    %281 = vector.extract_strided_slice %278 {offsets = [0, 32], sizes = [8, 32], strides = [1, 1]} : vector<8x128xf32> to vector<8x32xf32>
    %282 = vector.extract_strided_slice %279 {offsets = [0, 64], sizes = [8, 32], strides = [1, 1]} : vector<8x128xf32> to vector<8x32xf32>
    %283 = vector.extract_strided_slice %278 {offsets = [0, 96], sizes = [8, 32], strides = [1, 1]} : vector<8x128xf32> to vector<8x32xf32>
    %284 = arith.mulf %281, %248 : vector<8x32xf32>
    %285 = arith.mulf %280, %282 : vector<8x32xf32>
    %286 = arith.addf %284, %285 : vector<8x32xf32>
    %287 = math.tanh %286 : vector<8x32xf32>
    %288 = arith.mulf %283, %287 : vector<8x32xf32>
    %289 = tpu.concatenate %288, %269 in 1 : vector<8x32xf32>, vector<8x32xf32> -> vector<8x64xf32>
    %cst_52 = arith.constant dense<0.000000e+00> : vector<8x128xf32>
    %290 = tpu.matmul %289, %1, %cst_52 {dimension_numbers = #tpu.dot_dimension_numbers<[1], [0], [0], [1], [0, 0, 1, 1], [], []>} : vector<8x64xf32>, vector<64x128xf32>, vector<8x128xf32> -> vector<8x128xf32>
    %291 = vector.broadcast %2 : vector<1x128xf32> to vector<8x128xf32>
    %292 = arith.addf %290, %291 : vector<8x128xf32>
    %293 = arith.negf %292 : vector<8x128xf32>
    %294 = math.exp %293 : vector<8x128xf32>
    %cst_53 = arith.constant 1.000000e+00 : f32
    %295 = vector.broadcast %cst_53 : f32 to vector<8x128xf32>
    %296 = arith.addf %295, %294 : vector<8x128xf32>
    %297 = arith.divf %295, %296 : vector<8x128xf32>
    %298 = math.tanh %292 : vector<8x128xf32>
    %299 = vector.extract_strided_slice %297 {offsets = [0, 0], sizes = [8, 32], strides = [1, 1]} : vector<8x128xf32> to vector<8x32xf32>
    %300 = vector.extract_strided_slice %297 {offsets = [0, 32], sizes = [8, 32], strides = [1, 1]} : vector<8x128xf32> to vector<8x32xf32>
    %301 = vector.extract_strided_slice %298 {offsets = [0, 64], sizes = [8, 32], strides = [1, 1]} : vector<8x128xf32> to vector<8x32xf32>
    %302 = vector.extract_strided_slice %297 {offsets = [0, 96], sizes = [8, 32], strides = [1, 1]} : vector<8x128xf32> to vector<8x32xf32>
    %303 = arith.mulf %300, %267 : vector<8x32xf32>
    %304 = arith.mulf %299, %301 : vector<8x32xf32>
    %305 = arith.addf %303, %304 : vector<8x32xf32>
    %306 = math.tanh %305 : vector<8x32xf32>
    %307 = arith.mulf %302, %306 : vector<8x32xf32>
    %c0_54 = arith.constant 0 : index
    %c0_55 = arith.constant 0 : index
    %308 = vector.load %arg4[%c0_54, %c0_55] : memref<32x128xf32, #tpu.memory_space<vmem>>, vector<32x128xf32>
    %cst_56 = arith.constant dense<0.000000e+00> : vector<8x128xf32>
    %309 = tpu.matmul %307, %308, %cst_56 {dimension_numbers = #tpu.dot_dimension_numbers<[1], [0], [0], [1], [0, 0, 1, 1], [], []>} : vector<8x32xf32>, vector<32x128xf32>, vector<8x128xf32> -> vector<8x128xf32>
    %c0_57 = arith.constant 0 : index
    %c0_58 = arith.constant 0 : index
    %310 = vector.load %arg5[%c0_57, %c0_58] : memref<1x128xf32, #tpu.memory_space<vmem>>, vector<1x128xf32>
    %311 = vector.broadcast %310 : vector<1x128xf32> to vector<8x128xf32>
    %312 = arith.addf %309, %311 : vector<8x128xf32>
    %cst_59 = arith.constant dense<0xFF800000> : vector<8xf32>
    %313 = vector.multi_reduction <maximumf>, %312, %cst_59 [1] : vector<8x128xf32> to vector<8xf32>
    %314 = vector.shape_cast %313 : vector<8xf32> to vector<8x1xf32>
    %315 = vector.broadcast %314 : vector<8x1xf32> to vector<8x128xf32>
    %316 = arith.subf %312, %315 : vector<8x128xf32>
    %317 = math.exp %316 : vector<8x128xf32>
    %cst_60 = arith.constant dense<0.000000e+00> : vector<8xf32>
    %318 = vector.multi_reduction <add>, %317, %cst_60 [1] : vector<8x128xf32> to vector<8xf32>
    %319 = vector.shape_cast %318 : vector<8xf32> to vector<8x1xf32>
    %320 = vector.broadcast %319 : vector<8x1xf32> to vector<8x128xf32>
    %321 = arith.divf %317, %320 : vector<8x128xf32>
    %c0_61 = arith.constant 0 : index
    %c0_62 = arith.constant 0 : index
    %322 = vector.load %arg6[%c0_61, %c0_62] : memref<8x128xf32, #tpu.memory_space<vmem>>, vector<8x128xf32>
    tpu.vector_store %arg6[%c0_61, %c0_62], %321 {strides = array<i32>} : memref<8x128xf32, #tpu.memory_space<vmem>>, vector<8x128xf32>,
    return
  }
}

</mosaic_0001>

<llo_original>
// kernel: lstm_classifier_forward.1
$region0: #{lstm_classifier_forward.1}
  #allocation0 [shape = 'u32[]', space=smem, size = 0x4, offset = 0x4, fixed_abs, tag = 'smem constant byte address 0x4 - core index']
  #allocation1 [shape = 'u32[144,128]{1,0:T(1,128)}', space=vmem, size = 0x12000, scoped, tag = 'internal scratch']
  %s0 = inlined_call_operand.vmem [shape: f32[8,8,128], index: 0, kind: input, shape index: {}]
  %s1 = inlined_call_operand.vmem [shape: f32[32,128], index: 1, kind: input, shape index: {}]
  %s2 = inlined_call_operand.vmem [shape: f32[64,128], index: 2, kind: input, shape index: {}]
  %s3 = inlined_call_operand.vmem [shape: f32[1,128], index: 3, kind: input, shape index: {}]
  %s4 = inlined_call_operand.vmem [shape: f32[32,128], index: 4, kind: input, shape index: {}]
  %s5 = inlined_call_operand.vmem [shape: f32[1,128], index: 5, kind: input, shape index: {}]
  %s6 = inlined_call_operand.vmem [shape: f32[8,128], index: 6, kind: output, shape index: {}]
  %s7 = sld [smem:[#allocation0]]
  $region34: #{lstm_classifier_forward.1} parent=0
    _
  %s9 = ssub.s32 1, %s7
  %s10 = scalar_select 0, %s9, %s7
  // Predicated region
  $region2: #{lstm_classifier_forward.1} parent=0 // pred_check
    _
  $region3: #{lstm_classifier_forward.1} parent=0 // pred_check_branch
    %12 = sbr.rel (0) target = $region5
  $region4: #{lstm_classifier_forward.1} parent=0 // pred_region
    _
  $region5: #{lstm_classifier_forward.1} parent=0 // pred_fallthru
    _
  // Predicated region
  $region6: #{lstm_classifier_forward.1} parent=0 // pred_check
    _
  $region7: #{lstm_classifier_forward.1} parent=0 // pred_check_branch
    %14 = sbr.rel (0) target = $region9
  $region8: #{lstm_classifier_forward.1} parent=0 // pred_region
    _
  $region9: #{lstm_classifier_forward.1} parent=0 // pred_fallthru
    _
  // Predicated region
  $region10: #{lstm_classifier_forward.1} parent=0 // pred_check
    _
  $region11: #{lstm_classifier_forward.1} parent=0 // pred_check_branch
    %16 = sbr.rel (0) target = $region13
  $region12: #{lstm_classifier_forward.1} parent=0 // pred_region
    _
  $region13: #{lstm_classifier_forward.1} parent=0 // pred_fallthru
    _
  // Predicated region
  $region14: #{lstm_classifier_forward.1} parent=0 // pred_check
    _
  $region15: #{lstm_classifier_forward.1} parent=0 // pred_check_branch
    %18 = sbr.rel (0) target = $region17
  $region16: #{lstm_classifier_forward.1} parent=0 // pred_region
    _
  $region17: #{lstm_classifier_forward.1} parent=0 // pred_fallthru
    _
  // Predicated region
  $region18: #{lstm_classifier_forward.1} parent=0 // pred_check
    _
  $region19: #{lstm_classifier_forward.1} parent=0 // pred_check_branch
    %20 = sbr.rel (0) target = $region21
  $region20: #{lstm_classifier_forward.1} parent=0 // pred_region
    _
  $region21: #{lstm_classifier_forward.1} parent=0 // pred_fallthru
    _
  // Predicated region
  $region22: #{lstm_classifier_forward.1} parent=0 // pred_check
    _
  $region23: #{lstm_classifier_forward.1} parent=0 // pred_check_branch
    %22 = sbr.rel (0) target = $region25
  $region24: #{lstm_classifier_forward.1} parent=0 // pred_region
    _
  $region25: #{lstm_classifier_forward.1} parent=0 // pred_fallthru
    _
  %v23 = vld [vmem:[%s1] sm:$0xff]
  %v24 = vld [vmem:[%s1 + $0x8] sm:$0xff]
  %v25 = vld [vmem:[%s1 + $0x10] sm:$0xff]
  %v26 = vld [vmem:[%s1 + $0x18] sm:$0xff]
  %v27 = vld [vmem:[%s2] sm:$0xff]
  %v28 = vld [vmem:[%s2 + $0x8] sm:$0xff]
  %v29 = vld [vmem:[%s2 + $0x10] sm:$0xff]
  %v30 = vld [vmem:[%s2 + $0x18] sm:$0xff]
  %v31 = vld [vmem:[%s2 + $0x20] sm:$0xff]
  %v32 = vld [vmem:[%s2 + $0x28] sm:$0xff]
  %v33 = vld [vmem:[%s2 + $0x30] sm:$0xff]
  %v34 = vld [vmem:[%s2 + $0x38] sm:$0xff]
  %v35 = vld [vmem:[%s3] sm:$0x1]
  %v36 = vld [vmem:[%s0] sm:$0x1]
  %v37 = vld [vmem:[%s0 + $0x8] sm:$0x1]
  %v38 = vld [vmem:[%s0 + $0x10] sm:$0x1]
  %v39 = vld [vmem:[%s0 + $0x18] sm:$0x1]
  %v40 = vld [vmem:[%s0 + $0x20] sm:$0x1]
  %v41 = vld [vmem:[%s0 + $0x28] sm:$0x1]
  %v42 = vld [vmem:[%s0 + $0x30] sm:$0x1]
  %v43 = vld [vmem:[%s0 + $0x38] sm:$0x1]
  %vm44 = vcmask 261120
  %v46 = vsel %vm44, 0.0, 0
  %48 = vmatprep.subr.mxu0 0.0
  %49 = vmatpush1.msra.mxu0 0.0
  %50 = vmatprep.subr.mxu0 0.0
  %51 = vmatpush1.msra.mxu0 0.0
  %52 = vmatprep.subr.mxu0 0.0
  %53 = vmatpush1.msra.mxu0 0.0
  %54 = vmatprep.subr.mxu0 0.0
  %55 = vmatpush1.msra.mxu0 0.0
  %56 = vmatprep.subr.mxu0 0.0
  %57 = vmatpush1.msra.mxu0 0.0
  %58 = vmatprep.subr.mxu0 0.0
  %59 = vmatpush1.msra.mxu0 0.0
  %60 = vmatprep.subr.mxu0 0.0
  %61 = vmatpush1.msra.mxu0 0.0
  %62 = vmatprep.subr.mxu0 0.0
  %63 = vmatpush1.msra.mxu0 0.0
  %64 = vmatprep.subr.mxu0 0.0
  %65 = vmatpush1.msra.mxu0 0.0
  %66 = vmatprep.subr.mxu0 0.0
  %67 = vmatpush1.msra.mxu0 0.0
  %68 = vmatprep.subr.mxu0 0.0
  %69 = vmatpush1.msra.mxu0 0.0
  %70 = vmatprep.subr.mxu0 0.0
  %71 = vmatpush1.msra.mxu0 0.0
  %72 = vmatprep.subr.mxu0 0.0
  %73 = vmatpush1.msra.mxu0 %v26
  %74 = vmatprep.subr.mxu0 0.0
  %75 = vmatpush1.msra.mxu0 %v25
  %76 = vmatprep.subr.mxu0 0.0
  %77 = vmatpush1.msra.mxu0 %v24
  %78 = vmatprep.subr.mxu0 0.0
  %79 = vmatpush1.msra.mxu0 %v23
  %80 = vmatprep.subr.mxu0 0.0
  %81 = vmatpush2.msra.mxu0 0.0
  %82 = vmatprep.subr.mxu0 0.0
  %83 = vmatpush2.msra.mxu0 0.0
  %84 = vmatprep.subr.mxu0 0.0
  %85 = vmatpush2.msra.mxu0 0.0
  %86 = vmatprep.subr.mxu0 0.0
  %87 = vmatpush2.msra.mxu0 0.0
  %88 = vmatprep.subr.mxu0 0.0
  %89 = vmatpush2.msra.mxu0 0.0
  %90 = vmatprep.subr.mxu0 0.0
  %91 = vmatpush2.msra.mxu0 0.0
  %92 = vmatprep.subr.mxu0 0.0
  %93 = vmatpush2.msra.mxu0 0.0
  %94 = vmatprep.subr.mxu0 0.0
  %95 = vmatpush2.msra.mxu0 0.0
  %96 = vmatprep.subr.mxu0 0.0
  %97 = vmatpush2.msra.mxu0 0.0
  %98 = vmatprep.subr.mxu0 0.0
  %99 = vmatpush2.msra.mxu0 0.0
  %100 = vmatprep.subr.mxu0 0.0
  %101 = vmatpush2.msra.mxu0 0.0
  %102 = vmatprep.subr.mxu0 0.0
  %103 = vmatpush2.msra.mxu0 0.0
  %104 = vmatprep.subr.mxu0 0.0
  %105 = vmatpush2.msra.mxu0 0.0
  %106 = vmatprep.subr.mxu0 0.0
  %107 = vmatpush2.msra.mxu0 0.0
  %108 = vmatprep.subr.mxu0 0.0
  %109 = vmatpush2.msra.mxu0 0.0
  %110 = vmatprep.subr.mxu0 0.0
  %111 = vmatpush2.msra.mxu0 0.0
  %112 = vmatprep.mubr.f32.mxu0 0.0
  %113 = vmatmul.mubr.f32.gmra.mxu0 %v46
  %v114 = vpop.f32.mrf.mxu0
  %v115 = vadd.f32 0.0, %v114
  %v116 = vpop.f32.mrf.mxu0
  %117 = vdwg.mxu0
  %v119 = vrot.slane %v115, 1
  %v120 = vrot.slane %v115, 2
  %v121 = vrot.slane %v115, 3
  %v122 = vrot.slane %v115, 4
  %v123 = vrot.slane %v115, 5
  %v124 = vrot.slane %v115, 6
  %v125 = vrot.slane %v115, 7
  %v134 = vadd.f32 %v36, %v115
  %v135 = vadd.f32 %v37, %v119
  %v136 = vadd.f32 %v38, %v120
  %v137 = vadd.f32 %v39, %v121
  %v138 = vadd.f32 %v40, %v122
  %v139 = vadd.f32 %v41, %v123
  %v140 = vadd.f32 %v42, %v124
  %v141 = vadd.f32 %v43, %v125
  %v142 = vxor.u32 %v134, 2147483648
  %v143 = vxor.u32 %v135, 2147483648
  %v144 = vxor.u32 %v136, 2147483648
  %v145 = vxor.u32 %v137, 2147483648
  %v146 = vxor.u32 %v138, 2147483648
  %v147 = vxor.u32 %v139, 2147483648
  %v148 = vxor.u32 %v140, 2147483648
  %v149 = vxor.u32 %v141, 2147483648
  %v150 = vmul.f32 %v142, 1.442695
  %v151 = vpow.pop %v150
  %v152 = vmul.f32 %v143, 1.442695
  %v153 = vpow.pop %v152
  %v154 = vmul.f32 %v144, 1.442695
  %v155 = vpow.pop %v154
  %v156 = vmul.f32 %v145, 1.442695
  %v157 = vpow.pop %v156
  %v158 = vmul.f32 %v146, 1.442695
  %v159 = vpow.pop %v158
  %v160 = vmul.f32 %v147, 1.442695
  %v161 = vpow.pop %v160
  %v162 = vmul.f32 %v148, 1.442695
  %v163 = vpow.pop %v162
  %v164 = vmul.f32 %v149, 1.442695
  %v165 = vpow.pop %v164
  %v166 = vadd.f32 %v151, 1.0
  %v167 = vadd.f32 %v153, 1.0
  %v168 = vadd.f32 %v155, 1.0
  %v169 = vadd.f32 %v157, 1.0
  %v170 = vadd.f32 %v159, 1.0
  %v171 = vadd.f32 %v161, 1.0
  %v172 = vadd.f32 %v163, 1.0
  %v173 = vadd.f32 %v165, 1.0
  %v174 = vrcp.pop %v166
  %v175 = vmul.f32 1.0, %v174
  %v176 = vrcp.pop %v167
  %v177 = vmul.f32 1.0, %v176
  %v178 = vrcp.pop %v168
  %v179 = vmul.f32 1.0, %v178
  %v180 = vrcp.pop %v169
  %v181 = vmul.f32 1.0, %v180
  %v182 = vrcp.pop %v170
  %v183 = vmul.f32 1.0, %v182
  %v184 = vrcp.pop %v171
  %v185 = vmul.f32 1.0, %v184
  %v186 = vrcp.pop %v172
  %v187 = vmul.f32 1.0, %v186
  %v188 = vrcp.pop %v173
  %v189 = vmul.f32 1.0, %v188
  %v190 = vtanh.pop %v134
  %v191 = vtanh.pop %v135
  %v192 = vtanh.pop %v136
  %v193 = vtanh.pop %v137
  %v194 = vtanh.pop %v138
  %v195 = vtanh.pop %v139
  %v196 = vtanh.pop %v140
  %v197 = vtanh.pop %v141
  %v198 = vmul.f32 %v175, 0.0
  %v199 = vmul.f32 %v177, 0.0
  %v200 = vmul.f32 %v179, 0.0
  %v201 = vmul.f32 %v181, 0.0
  %v202 = vmul.f32 %v183, 0.0
  %v203 = vmul.f32 %v185, 0.0
  %v204 = vmul.f32 %v187, 0.0
  %v205 = vmul.f32 %v189, 0.0
  %214 = vrot.lane.b32.xlu0 %v190, 64
  %v215 = vpop.permute.xlu0 %214
  %216 = vrot.lane.b32.xlu0 %v191, 64
  %v217 = vpop.permute.xlu0 %216
  %218 = vrot.lane.b32.xlu0 %v192, 64
  %v219 = vpop.permute.xlu0 %218
  %220 = vrot.lane.b32.xlu0 %v193, 64
  %v221 = vpop.permute.xlu0 %220
  %222 = vrot.lane.b32.xlu0 %v194, 64
  %v223 = vpop.permute.xlu0 %222
  %224 = vrot.lane.b32.xlu0 %v195, 64
  %v225 = vpop.permute.xlu0 %224
  %226 = vrot.lane.b32.xlu0 %v196, 64
  %v227 = vpop.permute.xlu0 %226
  %228 = vrot.lane.b32.xlu0 %v197, 64
  %v229 = vpop.permute.xlu0 %228
  %v238 = vmul.f32 %v175, %v215
  %v239 = vmul.f32 %v177, %v217
  %v240 = vmul.f32 %v179, %v219
  %v241 = vmul.f32 %v181, %v221
  %v242 = vmul.f32 %v183, %v223
  %v243 = vmul.f32 %v185, %v225
  %v244 = vmul.f32 %v187, %v227
  %v245 = vmul.f32 %v189, %v229
  %254 = vrot.lane.b32.xlu0 %v238, 32
  %v255 = vpop.permute.xlu0 %254
  %256 = vrot.lane.b32.xlu0 %v239, 32
  %v257 = vpop.permute.xlu0 %256
  %258 = vrot.lane.b32.xlu0 %v240, 32
  %v259 = vpop.permute.xlu0 %258
  %260 = vrot.lane.b32.xlu0 %v241, 32
  %v261 = vpop.permute.xlu0 %260
  %262 = vrot.lane.b32.xlu0 %v242, 32
  %v263 = vpop.permute.xlu0 %262
  %264 = vrot.lane.b32.xlu0 %v243, 32
  %v265 = vpop.permute.xlu0 %264
  %266 = vrot.lane.b32.xlu0 %v244, 32
  %v267 = vpop.permute.xlu0 %266
  %268 = vrot.lane.b32.xlu0 %v245, 32
  %v269 = vpop.permute.xlu0 %268
  %v278 = vadd.f32 %v198, %v255
  %v279 = vadd.f32 %v199, %v257
  %v280 = vadd.f32 %v200, %v259
  %v281 = vadd.f32 %v201, %v261
  %v282 = vadd.f32 %v202, %v263
  %v283 = vadd.f32 %v203, %v265
  %v284 = vadd.f32 %v204, %v267
  %v285 = vadd.f32 %v205, %v269
  %v286 = vtanh.pop %v278
  %v287 = vtanh.pop %v279
  %v288 = vtanh.pop %v280
  %v289 = vtanh.pop %v281
  %v290 = vtanh.pop %v282
  %v291 = vtanh.pop %v283
  %v292 = vtanh.pop %v284
  %v293 = vtanh.pop %v285
  %302 = vrot.lane.b32.xlu0 %v286, 64
  %v303 = vpop.permute.xlu0 %302
  %304 = vrot.lane.b32.xlu0 %v287, 64
  %v305 = vpop.permute.xlu0 %304
  %306 = vrot.lane.b32.xlu0 %v288, 64
  %v307 = vpop.permute.xlu0 %306
  %308 = vrot.lane.b32.xlu0 %v289, 64
  %v309 = vpop.permute.xlu0 %308
  %310 = vrot.lane.b32.xlu0 %v290, 64
  %v311 = vpop.permute.xlu0 %310
  %312 = vrot.lane.b32.xlu0 %v291, 64
  %v313 = vpop.permute.xlu0 %312
  %314 = vrot.lane.b32.xlu0 %v292, 64
  %v315 = vpop.permute.xlu0 %314
  %316 = vrot.lane.b32.xlu0 %v293, 64
  %v317 = vpop.permute.xlu0 %316
  %v326 = vmul.f32 %v175, %v303
  %v327 = vmul.f32 %v177, %v305
  %v328 = vmul.f32 %v179, %v307
  %v329 = vmul.f32 %v181, %v309
  %v330 = vmul.f32 %v183, %v311
  %v331 = vmul.f32 %v185, %v313
  %v332 = vmul.f32 %v187, %v315
  %v333 = vmul.f32 %v189, %v317
  %v342 = vrot.slane %v327, 7
  %vm343 = vcmask 1041409
  %v344 = vsel %vm343, %v342, %v326
  %v345 = vrot.slane %v328, 6
  %vm346 = vcmask 1042434
  %v347 = vsel %vm346, %v345, %v344
  %v348 = vrot.slane %v329, 5
  %vm349 = vcmask 1043459
  %v350 = vsel %vm349, %v348, %v347
  %v351 = vrot.slane %v330, 4
  %vm352 = vcmask 1044484
  %v353 = vsel %vm352, %v351, %v350
  %v354 = vrot.slane %v331, 3
  %vm355 = vcmask 1045509
  %v356 = vsel %vm355, %v354, %v353
  %v357 = vrot.slane %v332, 2
  %vm358 = vcmask 1046534
  %v359 = vsel %vm358, %v357, %v356
  %v360 = vrot.slane %v333, 1
  %vm361 = vcmask 1047559
  %v362 = vsel %vm361, %v360, %v359
  %363 = vrot.lane.b32.xlu0 %v362, 32
  %v364 = vpop.permute.xlu0 %363
  %v366 = vsel %vm44, %v364, 0.0
  %v368 = vlaneseq
  %v369 = vshrl.u32 %v368, 7
  %v370 = vsub.s32 0, %v369
  %v371 = vrot.slane %v35, %v370
  %vm373 = vcmask 523264
  %v375 = vsel %vm373, %v366, 0
  %377 = vmatprep.subr.mxu0 0.0
  %378 = vmatpush1.msra.mxu0 0.0
  %379 = vmatprep.subr.mxu0 0.0
  %380 = vmatpush1.msra.mxu0 0.0
  %381 = vmatprep.subr.mxu0 0.0
  %382 = vmatpush1.msra.mxu0 0.0
  %383 = vmatprep.subr.mxu0 0.0
  %384 = vmatpush1.msra.mxu0 0.0
  %385 = vmatprep.subr.mxu0 0.0
  %386 = vmatpush1.msra.mxu0 0.0
  %387 = vmatprep.subr.mxu0 0.0
  %388 = vmatpush1.msra.mxu0 0.0
  %389 = vmatprep.subr.mxu0 0.0
  %390 = vmatpush1.msra.mxu0 0.0
  %391 = vmatprep.subr.mxu0 0.0
  %392 = vmatpush1.msra.mxu0 0.0
  %393 = vmatprep.subr.mxu0 0.0
  %394 = vmatpush1.msra.mxu0 %v34
  %395 = vmatprep.subr.mxu0 0.0
  %396 = vmatpush1.msra.mxu0 %v33
  %397 = vmatprep.subr.mxu0 0.0
  %398 = vmatpush1.msra.mxu0 %v32
  %399 = vmatprep.subr.mxu0 0.0
  %400 = vmatpush1.msra.mxu0 %v31
  %401 = vmatprep.subr.mxu0 0.0
  %402 = vmatpush1.msra.mxu0 %v30
  %403 = vmatprep.subr.mxu0 0.0
  %404 = vmatpush1.msra.mxu0 %v29
  %405 = vmatprep.subr.mxu0 0.0
  %406 = vmatpush1.msra.mxu0 %v28
  %407 = vmatprep.subr.mxu0 0.0
  %408 = vmatpush1.msra.mxu0 %v27
  %409 = vmatprep.subr.mxu0 0.0
  %410 = vmatpush2.msra.mxu0 0.0
  %411 = vmatprep.subr.mxu0 0.0
  %412 = vmatpush2.msra.mxu0 0.0
  %413 = vmatprep.subr.mxu0 0.0
  %414 = vmatpush2.msra.mxu0 0.0
  %415 = vmatprep.subr.mxu0 0.0
  %416 = vmatpush2.msra.mxu0 0.0
  %417 = vmatprep.subr.mxu0 0.0
  %418 = vmatpush2.msra.mxu0 0.0
  %419 = vmatprep.subr.mxu0 0.0
  %420 = vmatpush2.msra.mxu0 0.0
  %421 = vmatprep.subr.mxu0 0.0
  %422 = vmatpush2.msra.mxu0 0.0
  %423 = vmatprep.subr.mxu0 0.0
  %424 = vmatpush2.msra.mxu0 0.0
  %425 = vmatprep.subr.mxu0 0.0
  %426 = vmatpush2.msra.mxu0 0.0
  %427 = vmatprep.subr.mxu0 0.0
  %428 = vmatpush2.msra.mxu0 0.0
  %429 = vmatprep.subr.mxu0 0.0
  %430 = vmatpush2.msra.mxu0 0.0
  %431 = vmatprep.subr.mxu0 0.0
  %432 = vmatpush2.msra.mxu0 0.0
  %433 = vmatprep.subr.mxu0 0.0
  %434 = vmatpush2.msra.mxu0 0.0
  %435 = vmatprep.subr.mxu0 0.0
  %436 = vmatpush2.msra.mxu0 0.0
  %437 = vmatprep.subr.mxu0 0.0
  %438 = vmatpush2.msra.mxu0 0.0
  %439 = vmatprep.subr.mxu0 0.0
  %440 = vmatpush2.msra.mxu0 0.0
  %441 = vmatprep.mubr.f32.mxu0 0.0
  %442 = vmatmul.mubr.f32.gmra.mxu0 %v375
  %v443 = vpop.f32.mrf.mxu0
  %v444 = vadd.f32 %v371, %v443
  %v445 = vpop.f32.mrf.mxu0
  %446 = vdwg.mxu0
  %v447 = vxor.u32 %v444, 2147483648
  %v448 = vmul.f32 %v447, 1.442695
  %v449 = vpow.pop %v448
  %v450 = vadd.f32 %v449, 1.0
  %v451 = vrcp.pop %v450
  %v452 = vmul.f32 1.0, %v451
  %v453 = vtanh.pop %v444
  %v454 = vmul.f32 %v452, 0.0
  %456 = vrot.lane.b32.xlu0 %v453, 64
  %v457 = vpop.permute.xlu0 %456
  %v459 = vmul.f32 %v452, %v457
  %461 = vrot.lane.b32.xlu0 %v459, 32
  %v462 = vpop.permute.xlu0 %461
  %v464 = vadd.f32 %v454, %v462
  %v465 = vtanh.pop %v464
  %467 = vrot.lane.b32.xlu0 %v465, 64
  %v468 = vpop.permute.xlu0 %467
  %v470 = vmul.f32 %v452, %v468
  %v471 = vld [vmem:[%s0 + $0x1] sm:$0x1]
  %v472 = vld [vmem:[%s0 + $0x9] sm:$0x1]
  %v473 = vld [vmem:[%s0 + $0x11] sm:$0x1]
  %v474 = vld [vmem:[%s0 + $0x19] sm:$0x1]
  %v475 = vld [vmem:[%s0 + $0x21] sm:$0x1]
  %v476 = vld [vmem:[%s0 + $0x29] sm:$0x1]
  %v477 = vld [vmem:[%s0 + $0x31] sm:$0x1]
  %v478 = vld [vmem:[%s0 + $0x39] sm:$0x1]
  %v479 = vsel %vm44, %v364, 0
  %481 = vmatprep.subr.mxu0 0.0
  %482 = vmatpush1.msra.mxu0 0.0
  %483 = vmatprep.subr.mxu0 0.0
  %484 = vmatpush1.msra.mxu0 0.0
  %485 = vmatprep.subr.mxu0 0.0
  %486 = vmatpush1.msra.mxu0 0.0
  %487 = vmatprep.subr.mxu0 0.0
  %488 = vmatpush1.msra.mxu0 0.0
  %489 = vmatprep.subr.mxu0 0.0
  %490 = vmatpush1.msra.mxu0 0.0
  %491 = vmatprep.subr.mxu0 0.0
  %492 = vmatpush1.msra.mxu0 0.0
  %493 = vmatprep.subr.mxu0 0.0
  %494 = vmatpush1.msra.mxu0 0.0
  %495 = vmatprep.subr.mxu0 0.0
  %496 = vmatpush1.msra.mxu0 0.0
  %497 = vmatprep.subr.mxu0 0.0
  %498 = vmatpush1.msra.mxu0 0.0
  %499 = vmatprep.subr.mxu0 0.0
  %500 = vmatpush1.msra.mxu0 0.0
  %501 = vmatprep.subr.mxu0 0.0
  %502 = vmatpush1.msra.mxu0 0.0
  %503 = vmatprep.subr.mxu0 0.0
  %504 = vmatpush1.msra.mxu0 0.0
  %505 = vmatprep.subr.mxu0 0.0
  %506 = vmatpush1.msra.mxu0 %v26
  %507 = vmatprep.subr.mxu0 0.0
  %508 = vmatpush1.msra.mxu0 %v25
  %509 = vmatprep.subr.mxu0 0.0
  %510 = vmatpush1.msra.mxu0 %v24
  %511 = vmatprep.subr.mxu0 0.0
  %512 = vmatpush1.msra.mxu0 %v23
  %513 = vmatprep.subr.mxu0 0.0
  %514 = vmatpush2.msra.mxu0 0.0
  %515 = vmatprep.subr.mxu0 0.0
  %516 = vmatpush2.msra.mxu0 0.0
  %517 = vmatprep.subr.mxu0 0.0
  %518 = vmatpush2.msra.mxu0 0.0
  %519 = vmatprep.subr.mxu0 0.0
  %520 = vmatpush2.msra.mxu0 0.0
  %521 = vmatprep.subr.mxu0 0.0
  %522 = vmatpush2.msra.mxu0 0.0
  %523 = vmatprep.subr.mxu0 0.0
  %524 = vmatpush2.msra.mxu0 0.0
  %525 = vmatprep.subr.mxu0 0.0
  %526 = vmatpush2.msra.mxu0 0.0
  %527 = vmatprep.subr.mxu0 0.0
  %528 = vmatpush2.msra.mxu0 0.0
  %529 = vmatprep.subr.mxu0 0.0
  %530 = vmatpush2.msra.mxu0 0.0
  %531 = vmatprep.subr.mxu0 0.0
  %532 = vmatpush2.msra.mxu0 0.0
  %533 = vmatprep.subr.mxu0 0.0
  %534 = vmatpush2.msra.mxu0 0.0
  %535 = vmatprep.subr.mxu0 0.0
  %536 = vmatpush2.msra.mxu0 0.0
  %537 = vmatprep.subr.mxu0 0.0
  %538 = vmatpush2.msra.mxu0 0.0
  %539 = vmatprep.subr.mxu0 0.0
  %540 = vmatpush2.msra.mxu0 0.0
  %541 = vmatprep.subr.mxu0 0.0
  %542 = vmatpush2.msra.mxu0 0.0
  %543 = vmatprep.subr.mxu0 0.0
  %544 = vmatpush2.msra.mxu0 0.0
  %545 = vmatprep.mubr.f32.mxu0 0.0
  %546 = vmatmul.mubr.f32.gmra.mxu0 %v479
  %v547 = vpop.f32.mrf.mxu0
  %v548 = vadd.f32 0.0, %v547
  %v549 = vpop.f32.mrf.mxu0
  %550 = vdwg.mxu0
  %v552 = vrot.slane %v548, 1
  %v553 = vrot.slane %v548, 2
  %v554 = vrot.slane %v548, 3
  %v555 = vrot.slane %v548, 4
  %v556 = vrot.slane %v548, 5
  %v557 = vrot.slane %v548, 6
  %v558 = vrot.slane %v548, 7
  %v567 = vadd.f32 %v471, %v548
  %v568 = vadd.f32 %v472, %v552
  %v569 = vadd.f32 %v473, %v553
  %v570 = vadd.f32 %v474, %v554
  %v571 = vadd.f32 %v475, %v555
  %v572 = vadd.f32 %v476, %v556
  %v573 = vadd.f32 %v477, %v557
  %v574 = vadd.f32 %v478, %v558
  %v575 = vxor.u32 %v567, 2147483648
  %v576 = vxor.u32 %v568, 2147483648
  %v577 = vxor.u32 %v569, 2147483648
  %v578 = vxor.u32 %v570, 2147483648
  %v579 = vxor.u32 %v571, 2147483648
  %v580 = vxor.u32 %v572, 2147483648
  %v581 = vxor.u32 %v573, 2147483648
  %v582 = vxor.u32 %v574, 2147483648
  %v583 = vmul.f32 %v575, 1.442695
  %v584 = vpow.pop %v583
  %v585 = vmul.f32 %v576, 1.442695
  %v586 = vpow.pop %v585
  %v587 = vmul.f32 %v577, 1.442695
  %v588 = vpow.pop %v587
  %v589 = vmul.f32 %v578, 1.442695
  %v590 = vpow.pop %v589
  %v591 = vmul.f32 %v579, 1.442695
  %v592 = vpow.pop %v591
  %v593 = vmul.f32 %v580, 1.442695
  %v594 = vpow.pop %v593
  %v595 = vmul.f32 %v581, 1.442695
  %v596 = vpow.pop %v595
  %v597 = vmul.f32 %v582, 1.442695
  %v598 = vpow.pop %v597
  %v599 = vadd.f32 %v584, 1.0
  %v600 = vadd.f32 %v586, 1.0
  %v601 = vadd.f32 %v588, 1.0
  %v602 = vadd.f32 %v590, 1.0
  %v603 = vadd.f32 %v592, 1.0
  %v604 = vadd.f32 %v594, 1.0
  %v605 = vadd.f32 %v596, 1.0
  %v606 = vadd.f32 %v598, 1.0
  %v607 = vrcp.pop %v599
  %v608 = vmul.f32 1.0, %v607
  %v609 = vrcp.pop %v600
  %v610 = vmul.f32 1.0, %v609
  %v611 = vrcp.pop %v601
  %v612 = vmul.f32 1.0, %v611
  %v613 = vrcp.pop %v602
  %v614 = vmul.f32 1.0, %v613
  %v615 = vrcp.pop %v603
  %v616 = vmul.f32 1.0, %v615
  %v617 = vrcp.pop %v604
  %v618 = vmul.f32 1.0, %v617
  %v619 = vrcp.pop %v605
  %v620 = vmul.f32 1.0, %v619
  %v621 = vrcp.pop %v606
  %v622 = vmul.f32 1.0, %v621
  %v623 = vtanh.pop %v567
  %v624 = vtanh.pop %v568
  %v625 = vtanh.pop %v569
  %v626 = vtanh.pop %v570
  %v627 = vtanh.pop %v571
  %v628 = vtanh.pop %v572
  %v629 = vtanh.pop %v573
  %v630 = vtanh.pop %v574
  %v631 = vmul.f32 %v608, %v278
  %v632 = vmul.f32 %v610, %v279
  %v633 = vmul.f32 %v612, %v280
  %v634 = vmul.f32 %v614, %v281
  %v635 = vmul.f32 %v616, %v282
  %v636 = vmul.f32 %v618, %v283
  %v637 = vmul.f32 %v620, %v284
  %v638 = vmul.f32 %v622, %v285
  %647 = vrot.lane.b32.xlu0 %v623, 64
  %v648 = vpop.permute.xlu0 %647
  %649 = vrot.lane.b32.xlu0 %v624, 64
  %v650 = vpop.permute.xlu0 %649
  %651 = vrot.lane.b32.xlu0 %v625, 64
  %v652 = vpop.permute.xlu0 %651
  %653 = vrot.lane.b32.xlu0 %v626, 64
  %v654 = vpop.permute.xlu0 %653
  %655 = vrot.lane.b32.xlu0 %v627, 64
  %v656 = vpop.permute.xlu0 %655
  %657 = vrot.lane.b32.xlu0 %v628, 64
  %v658 = vpop.permute.xlu0 %657
  %659 = vrot.lane.b32.xlu0 %v629, 64
  %v660 = vpop.permute.xlu0 %659
  %661 = vrot.lane.b32.xlu0 %v630, 64
  %v662 = vpop.permute.xlu0 %661
  %v671 = vmul.f32 %v608, %v648
  %v672 = vmul.f32 %v610, %v650
  %v673 = vmul.f32 %v612, %v652
  %v674 = vmul.f32 %v614, %v654
  %v675 = vmul.f32 %v616, %v656
  %v676 = vmul.f32 %v618, %v658
  %v677 = vmul.f32 %v620, %v660
  %v678 = vmul.f32 %v622, %v662
  %687 = vrot.lane.b32.xlu0 %v671, 32
  %v688 = vpop.permute.xlu0 %687
  %689 = vrot.lane.b32.xlu0 %v672, 32
  %v690 = vpop.permute.xlu0 %689
  %691 = vrot.lane.b32.xlu0 %v673, 32
  %v692 = vpop.permute.xlu0 %691
  %693 = vrot.lane.b32.xlu0 %v674, 32
  %v694 = vpop.permute.xlu0 %693
  %695 = vrot.lane.b32.xlu0 %v675, 32
  %v696 = vpop.permute.xlu0 %695
  %697 = vrot.lane.b32.xlu0 %v676, 32
  %v698 = vpop.permute.xlu0 %697
  %699 = vrot.lane.b32.xlu0 %v677, 32
  %v700 = vpop.permute.xlu0 %699
  %701 = vrot.lane.b32.xlu0 %v678, 32
  %v702 = vpop.permute.xlu0 %701
  %v711 = vadd.f32 %v631, %v688
  %v712 = vadd.f32 %v632, %v690
  %v713 = vadd.f32 %v633, %v692
  %v714 = vadd.f32 %v634, %v694
  %v715 = vadd.f32 %v635, %v696
  %v716 = vadd.f32 %v636, %v698
  %v717 = vadd.f32 %v637, %v700
  %v718 = vadd.f32 %v638, %v702
  %v719 = vtanh.pop %v711
  %v720 = vtanh.pop %v712
  %v721 = vtanh.pop %v713
  %v722 = vtanh.pop %v714
  %v723 = vtanh.pop %v715
  %v724 = vtanh.pop %v716
  %v725 = vtanh.pop %v717
  %v726 = vtanh.pop %v718
  %735 = vrot.lane.b32.xlu0 %v719, 64
  %v736 = vpop.permute.xlu0 %735
  %737 = vrot.lane.b32.xlu0 %v720, 64
  %v738 = vpop.permute.xlu0 %737
  %739 = vrot.lane.b32.xlu0 %v721, 64
  %v740 = vpop.permute.xlu0 %739
  %741 = vrot.lane.b32.xlu0 %v722, 64
  %v742 = vpop.permute.xlu0 %741
  %743 = vrot.lane.b32.xlu0 %v723, 64
  %v744 = vpop.permute.xlu0 %743
  %745 = vrot.lane.b32.xlu0 %v724, 64
  %v746 = vpop.permute.xlu0 %745
  %747 = vrot.lane.b32.xlu0 %v725, 64
  %v748 = vpop.permute.xlu0 %747
  %749 = vrot.lane.b32.xlu0 %v726, 64
  %v750 = vpop.permute.xlu0 %749
  %v759 = vmul.f32 %v608, %v736
  %v760 = vmul.f32 %v610, %v738
  %v761 = vmul.f32 %v612, %v740
  %v762 = vmul.f32 %v614, %v742
  %v763 = vmul.f32 %v616, %v744
  %v764 = vmul.f32 %v618, %v746
  %v765 = vmul.f32 %v620, %v748
  %v766 = vmul.f32 %v622, %v750
  %v775 = vrot.slane %v760, 7
  %v776 = vsel %vm343, %v775, %v759
  %v777 = vrot.slane %v761, 6
  %v778 = vsel %vm346, %v777, %v776
  %v779 = vrot.slane %v762, 5
  %v780 = vsel %vm349, %v779, %v778
  %v781 = vrot.slane %v763, 4
  %v782 = vsel %vm352, %v781, %v780
  %v783 = vrot.slane %v764, 3
  %v784 = vsel %vm355, %v783, %v782
  %v785 = vrot.slane %v765, 2
  %v786 = vsel %vm358, %v785, %v784
  %v787 = vrot.slane %v766, 1
  %v788 = vsel %vm361, %v787, %v786
  %789 = vrot.lane.b32.xlu0 %v788, 32
  %v790 = vpop.permute.xlu0 %789
  %793 = vrot.lane.b32.xlu0 %v470, 64
  %v794 = vpop.permute.xlu0 %793
  %v796 = vsel %vm44, %v790, %v794
  %v798 = vsel %vm373, %v796, 0
  %800 = vmatprep.subr.mxu0 0.0
  %801 = vmatpush1.msra.mxu0 0.0
  %802 = vmatprep.subr.mxu0 0.0
  %803 = vmatpush1.msra.mxu0 0.0
  %804 = vmatprep.subr.mxu0 0.0
  %805 = vmatpush1.msra.mxu0 0.0
  %806 = vmatprep.subr.mxu0 0.0
  %807 = vmatpush1.msra.mxu0 0.0
  %808 = vmatprep.subr.mxu0 0.0
  %809 = vmatpush1.msra.mxu0 0.0
  %810 = vmatprep.subr.mxu0 0.0
  %811 = vmatpush1.msra.mxu0 0.0
  %812 = vmatprep.subr.mxu0 0.0
  %813 = vmatpush1.msra.mxu0 0.0
  %814 = vmatprep.subr.mxu0 0.0
  %815 = vmatpush1.msra.mxu0 0.0
  %816 = vmatprep.subr.mxu0 0.0
  %817 = vmatpush1.msra.mxu0 %v34
  %818 = vmatprep.subr.mxu0 0.0
  %819 = vmatpush1.msra.mxu0 %v33
  %820 = vmatprep.subr.mxu0 0.0
  %821 = vmatpush1.msra.mxu0 %v32
  %822 = vmatprep.subr.mxu0 0.0
  %823 = vmatpush1.msra.mxu0 %v31
  %824 = vmatprep.subr.mxu0 0.0
  %825 = vmatpush1.msra.mxu0 %v30
  %826 = vmatprep.subr.mxu0 0.0
  %827 = vmatpush1.msra.mxu0 %v29
  %828 = vmatprep.subr.mxu0 0.0
  %829 = vmatpush1.msra.mxu0 %v28
  %830 = vmatprep.subr.mxu0 0.0
  %831 = vmatpush1.msra.mxu0 %v27
  %832 = vmatprep.subr.mxu0 0.0
  %833 = vmatpush2.msra.mxu0 0.0
  %834 = vmatprep.subr.mxu0 0.0
  %835 = vmatpush2.msra.mxu0 0.0
  %836 = vmatprep.subr.mxu0 0.0
  %837 = vmatpush2.msra.mxu0 0.0
  %838 = vmatprep.subr.mxu0 0.0
  %839 = vmatpush2.msra.mxu0 0.0
  %840 = vmatprep.subr.mxu0 0.0
  %841 = vmatpush2.msra.mxu0 0.0
  %842 = vmatprep.subr.mxu0 0.0
  %843 = vmatpush2.msra.mxu0 0.0
  %844 = vmatprep.subr.mxu0 0.0
  %845 = vmatpush2.msra.mxu0 0.0
  %846 = vmatprep.subr.mxu0 0.0
  %847 = vmatpush2.msra.mxu0 0.0
  %848 = vmatprep.subr.mxu0 0.0
  %849 = vmatpush2.msra.mxu0 0.0
  %850 = vmatprep.subr.mxu0 0.0
  %851 = vmatpush2.msra.mxu0 0.0
  %852 = vmatprep.subr.mxu0 0.0
  %853 = vmatpush2.msra.mxu0 0.0
  %854 = vmatprep.subr.mxu0 0.0
  %855 = vmatpush2.msra.mxu0 0.0
  %856 = vmatprep.subr.mxu0 0.0
  %857 = vmatpush2.msra.mxu0 0.0
  %858 = vmatprep.subr.mxu0 0.0
  %859 = vmatpush2.msra.mxu0 0.0
  %860 = vmatprep.subr.mxu0 0.0
  %861 = vmatpush2.msra.mxu0 0.0
  %862 = vmatprep.subr.mxu0 0.0
  %863 = vmatpush2.msra.mxu0 0.0
  %864 = vmatprep.mubr.f32.mxu0 0.0
  %865 = vmatmul.mubr.f32.gmra.mxu0 %v798
  %v866 = vpop.f32.mrf.mxu0
  %v867 = vadd.f32 %v371, %v866
  %v868 = vpop.f32.mrf.mxu0
  %869 = vdwg.mxu0
  %v870 = vxor.u32 %v867, 2147483648
  %v871 = vmul.f32 %v870, 1.442695
  %v872 = vpow.pop %v871
  %v873 = vadd.f32 %v872, 1.0
  %v874 = vrcp.pop %v873
  %v875 = vmul.f32 1.0, %v874
  %v876 = vtanh.pop %v867
  %v877 = vmul.f32 %v875, %v464
  %879 = vrot.lane.b32.xlu0 %v876, 64
  %v880 = vpop.permute.xlu0 %879
  %v882 = vmul.f32 %v875, %v880
  %884 = vrot.lane.b32.xlu0 %v882, 32
  %v885 = vpop.permute.xlu0 %884
  %v887 = vadd.f32 %v877, %v885
  %v888 = vtanh.pop %v887
  %890 = vrot.lane.b32.xlu0 %v888, 64
  %v891 = vpop.permute.xlu0 %890
  %v893 = vmul.f32 %v875, %v891
  %v894 = vld [vmem:[%s0 + $0x2] sm:$0x1]
  %v895 = vld [vmem:[%s0 + $0xa] sm:$0x1]
  %v896 = vld [vmem:[%s0 + $0x12] sm:$0x1]
  %v897 = vld [vmem:[%s0 + $0x1a] sm:$0x1]
  %v898 = vld [vmem:[%s0 + $0x22] sm:$0x1]
  %v899 = vld [vmem:[%s0 + $0x2a] sm:$0x1]
  %v900 = vld [vmem:[%s0 + $0x32] sm:$0x1]
  %v901 = vld [vmem:[%s0 + $0x3a] sm:$0x1]
  %v902 = vsel %vm44, %v790, 0
  %904 = vmatprep.subr.mxu0 0.0
  %905 = vmatpush1.msra.mxu0 0.0
  %906 = vmatprep.subr.mxu0 0.0
  %907 = vmatpush1.msra.mxu0 0.0
  %908 = vmatprep.subr.mxu0 0.0
  %909 = vmatpush1.msra.mxu0 0.0
  %910 = vmatprep.subr.mxu0 0.0
  %911 = vmatpush1.msra.mxu0 0.0
  %912 = vmatprep.subr.mxu0 0.0
  %913 = vmatpush1.msra.mxu0 0.0
  %914 = vmatprep.subr.mxu0 0.0
  %915 = vmatpush1.msra.mxu0 0.0
  %916 = vmatprep.subr.mxu0 0.0
  %917 = vmatpush1.msra.mxu0 0.0
  %918 = vmatprep.subr.mxu0 0.0
  %919 = vmatpush1.msra.mxu0 0.0
  %920 = vmatprep.subr.mxu0 0.0
  %921 = vmatpush1.msra.mxu0 0.0
  %922 = vmatprep.subr.mxu0 0.0
  %923 = vmatpush1.msra.mxu0 0.0
  %924 = vmatprep.subr.mxu0 0.0
  %925 = vmatpush1.msra.mxu0 0.0
  %926 = vmatprep.subr.mxu0 0.0
  %927 = vmatpush1.msra.mxu0 0.0
  %928 = vmatprep.subr.mxu0 0.0
  %929 = vmatpush1.msra.mxu0 %v26
  %930 = vmatprep.subr.mxu0 0.0
  %931 = vmatpush1.msra.mxu0 %v25
  %932 = vmatprep.subr.mxu0 0.0
  %933 = vmatpush1.msra.mxu0 %v24
  %934 = vmatprep.subr.mxu0 0.0
  %935 = vmatpush1.msra.mxu0 %v23
  %936 = vmatprep.subr.mxu0 0.0
  %937 = vmatpush2.msra.mxu0 0.0
  %938 = vmatprep.subr.mxu0 0.0
  %939 = vmatpush2.msra.mxu0 0.0
  %940 = vmatprep.subr.mxu0 0.0
  %941 = vmatpush2.msra.mxu0 0.0
  %942 = vmatprep.subr.mxu0 0.0
  %943 = vmatpush2.msra.mxu0 0.0
  %944 = vmatprep.subr.mxu0 0.0
  %945 = vmatpush2.msra.mxu0 0.0
  %946 = vmatprep.subr.mxu0 0.0
  %947 = vmatpush2.msra.mxu0 0.0
  %948 = vmatprep.subr.mxu0 0.0
  %949 = vmatpush2.msra.mxu0 0.0
  %950 = vmatprep.subr.mxu0 0.0
  %951 = vmatpush2.msra.mxu0 0.0
  %952 = vmatprep.subr.mxu0 0.0
  %953 = vmatpush2.msra.mxu0 0.0
  %954 = vmatprep.subr.mxu0 0.0
  %955 = vmatpush2.msra.mxu0 0.0
  %956 = vmatprep.subr.mxu0 0.0
  %957 = vmatpush2.msra.mxu0 0.0
  %958 = vmatprep.subr.mxu0 0.0
  %959 = vmatpush2.msra.mxu0 0.0
  %960 = vmatprep.subr.mxu0 0.0
  %961 = vmatpush2.msra.mxu0 0.0
  %962 = vmatprep.subr.mxu0 0.0
  %963 = vmatpush2.msra.mxu0 0.0
  %964 = vmatprep.subr.mxu0 0.0
  %965 = vmatpush2.msra.mxu0 0.0
  %966 = vmatprep.subr.mxu0 0.0
  %967 = vmatpush2.msra.mxu0 0.0
  %968 = vmatprep.mubr.f32.mxu0 0.0
  %969 = vmatmul.mubr.f32.gmra.mxu0 %v902
  %v970 = vpop.f32.mrf.mxu0
  %v971 = vadd.f32 0.0, %v970
  %v972 = vpop.f32.mrf.mxu0
  %973 = vdwg.mxu0
  %v975 = vrot.slane %v971, 1
  %v976 = vrot.slane %v971, 2
  %v977 = vrot.slane %v971, 3
  %v978 = vrot.slane %v971, 4
  %v979 = vrot.slane %v971, 5
  %v980 = vrot.slane %v971, 6
  %v981 = vrot.slane %v971, 7
  %v990 = vadd.f32 %v894, %v971
  %v991 = vadd.f32 %v895, %v975
  %v992 = vadd.f32 %v896, %v976
  %v993 = vadd.f32 %v897, %v977
  %v994 = vadd.f32 %v898, %v978
  %v995 = vadd.f32 %v899, %v979
  %v996 = vadd.f32 %v900, %v980
  %v997 = vadd.f32 %v901, %v981
  %v998 = vxor.u32 %v990, 2147483648
  %v999 = vxor.u32 %v991, 2147483648
  %v1000 = vxor.u32 %v992, 2147483648
  %v1001 = vxor.u32 %v993, 2147483648
  %v1002 = vxor.u32 %v994, 2147483648
  %v1003 = vxor.u32 %v995, 2147483648
  %v1004 = vxor.u32 %v996, 2147483648
  %v1005 = vxor.u32 %v997, 2147483648
  %v1006 = vmul.f32 %v998, 1.442695
  %v1007 = vpow.pop %v1006
  %v1008 = vmul.f32 %v999, 1.442695
  %v1009 = vpow.pop %v1008
  %v1010 = vmul.f32 %v1000, 1.442695
  %v1011 = vpow.pop %v1010
  %v1012 = vmul.f32 %v1001, 1.442695
  %v1013 = vpow.pop %v1012
  %v1014 = vmul.f32 %v1002, 1.442695
  %v1015 = vpow.pop %v1014
  %v1016 = vmul.f32 %v1003, 1.442695
  %v1017 = vpow.pop %v1016
  %v1018 = vmul.f32 %v1004, 1.442695
  %v1019 = vpow.pop %v1018
  %v1020 = vmul.f32 %v1005, 1.442695
  %v1021 = vpow.pop %v1020
  %v1022 = vadd.f32 %v1007, 1.0
  %v1023 = vadd.f32 %v1009, 1.0
  %v1024 = vadd.f32 %v1011, 1.0
  %v1025 = vadd.f32 %v1013, 1.0
  %v1026 = vadd.f32 %v1015, 1.0
  %v1027 = vadd.f32 %v1017, 1.0
  %v1028 = vadd.f32 %v1019, 1.0
  %v1029 = vadd.f32 %v1021, 1.0
  %v1030 = vrcp.pop %v1022
  %v1031 = vmul.f32 1.0, %v1030
  %v1032 = vrcp.pop %v1023
  %v1033 = vmul.f32 1.0, %v1032
  %v1034 = vrcp.pop %v1024
  %v1035 = vmul.f32 1.0, %v1034
  %v1036 = vrcp.pop %v1025
  %v1037 = vmul.f32 1.0, %v1036
  %v1038 = vrcp.pop %v1026
  %v1039 = vmul.f32 1.0, %v1038
  %v1040 = vrcp.pop %v1027
  %v1041 = vmul.f32 1.0, %v1040
  %v1042 = vrcp.pop %v1028
  %v1043 = vmul.f32 1.0, %v1042
  %v1044 = vrcp.pop %v1029
  %v1045 = vmul.f32 1.0, %v1044
  %v1046 = vtanh.pop %v990
  %v1047 = vtanh.pop %v991
  %v1048 = vtanh.pop %v992
  %v1049 = vtanh.pop %v993
  %v1050 = vtanh.pop %v994
  %v1051 = vtanh.pop %v995
  %v1052 = vtanh.pop %v996
  %v1053 = vtanh.pop %v997
  %v1054 = vmul.f32 %v1031, %v711
  %v1055 = vmul.f32 %v1033, %v712
  %v1056 = vmul.f32 %v1035, %v713
  %v1057 = vmul.f32 %v1037, %v714
  %v1058 = vmul.f32 %v1039, %v715
  %v1059 = vmul.f32 %v1041, %v716
  %v1060 = vmul.f32 %v1043, %v717
  %v1061 = vmul.f32 %v1045, %v718
  %1070 = vrot.lane.b32.xlu0 %v1046, 64
  %v1071 = vpop.permute.xlu0 %1070
  %1072 = vrot.lane.b32.xlu0 %v1047, 64
  %v1073 = vpop.permute.xlu0 %1072
  %1074 = vrot.lane.b32.xlu0 %v1048, 64
  %v1075 = vpop.permute.xlu0 %1074
  %1076 = vrot.lane.b32.xlu0 %v1049, 64
  %v1077 = vpop.permute.xlu0 %1076
  %1078 = vrot.lane.b32.xlu0 %v1050, 64
  %v1079 = vpop.permute.xlu0 %1078
  %1080 = vrot.lane.b32.xlu0 %v1051, 64
  %v1081 = vpop.permute.xlu0 %1080
  %1082 = vrot.lane.b32.xlu0 %v1052, 64
  %v1083 = vpop.permute.xlu0 %1082
  %1084 = vrot.lane.b32.xlu0 %v1053, 64
  %v1085 = vpop.permute.xlu0 %1084
  %v1094 = vmul.f32 %v1031, %v1071
  %v1095 = vmul.f32 %v1033, %v1073
  %v1096 = vmul.f32 %v1035, %v1075
  %v1097 = vmul.f32 %v1037, %v1077
  %v1098 = vmul.f32 %v1039, %v1079
  %v1099 = vmul.f32 %v1041, %v1081
  %v1100 = vmul.f32 %v1043, %v1083
  %v1101 = vmul.f32 %v1045, %v1085
  %1110 = vrot.lane.b32.xlu0 %v1094, 32
  %v1111 = vpop.permute.xlu0 %1110
  %1112 = vrot.lane.b32.xlu0 %v1095, 32
  %v1113 = vpop.permute.xlu0 %1112
  %1114 = vrot.lane.b32.xlu0 %v1096, 32
  %v1115 = vpop.permute.xlu0 %1114
  %1116 = vrot.lane.b32.xlu0 %v1097, 32
  %v1117 = vpop.permute.xlu0 %1116
  %1118 = vrot.lane.b32.xlu0 %v1098, 32
  %v1119 = vpop.permute.xlu0 %1118
  %1120 = vrot.lane.b32.xlu0 %v1099, 32
  %v1121 = vpop.permute.xlu0 %1120
  %1122 = vrot.lane.b32.xlu0 %v1100, 32
  %v1123 = vpop.permute.xlu0 %1122
  %1124 = vrot.lane.b32.xlu0 %v1101, 32
  %v1125 = vpop.permute.xlu0 %1124
  %v1134 = vadd.f32 %v1054, %v1111
  %v1135 = vadd.f32 %v1055, %v1113
  %v1136 = vadd.f32 %v1056, %v1115
  %v1137 = vadd.f32 %v1057, %v1117
  %v1138 = vadd.f32 %v1058, %v1119
  %v1139 = vadd.f32 %v1059, %v1121
  %v1140 = vadd.f32 %v1060, %v1123
  %v1141 = vadd.f32 %v1061, %v1125
  %v1142 = vtanh.pop %v1134
  %v1143 = vtanh.pop %v1135
  %v1144 = vtanh.pop %v1136
  %v1145 = vtanh.pop %v1137
  %v1146 = vtanh.pop %v1138
  %v1147 = vtanh.pop %v1139
  %v1148 = vtanh.pop %v1140
  %v1149 = vtanh.pop %v1141
  %1158 = vrot.lane.b32.xlu0 %v1142, 64
  %v1159 = vpop.permute.xlu0 %1158
  %1160 = vrot.lane.b32.xlu0 %v1143, 64
  %v1161 = vpop.permute.xlu0 %1160
  %1162 = vrot.lane.b32.xlu0 %v1144, 64
  %v1163 = vpop.permute.xlu0 %1162
  %1164 = vrot.lane.b32.xlu0 %v1145, 64
  %v1165 = vpop.permute.xlu0 %1164
  %1166 = vrot.lane.b32.xlu0 %v1146, 64
  %v1167 = vpop.permute.xlu0 %1166
  %1168 = vrot.lane.b32.xlu0 %v1147, 64
  %v1169 = vpop.permute.xlu0 %1168
  %1170 = vrot.lane.b32.xlu0 %v1148, 64
  %v1171 = vpop.permute.xlu0 %1170
  %1172 = vrot.lane.b32.xlu0 %v1149, 64
  %v1173 = vpop.permute.xlu0 %1172
  %v1182 = vmul.f32 %v1031, %v1159
  %v1183 = vmul.f32 %v1033, %v1161
  %v1184 = vmul.f32 %v1035, %v1163
  %v1185 = vmul.f32 %v1037, %v1165
  %v1186 = vmul.f32 %v1039, %v1167
  %v1187 = vmul.f32 %v1041, %v1169
  %v1188 = vmul.f32 %v1043, %v1171
  %v1189 = vmul.f32 %v1045, %v1173
  %v1198 = vrot.slane %v1183, 7
  %v1199 = vsel %vm343, %v1198, %v1182
  %v1200 = vrot.slane %v1184, 6
  %v1201 = vsel %vm346, %v1200, %v1199
  %v1202 = vrot.slane %v1185, 5
  %v1203 = vsel %vm349, %v1202, %v1201
  %v1204 = vrot.slane %v1186, 4
  %v1205 = vsel %vm352, %v1204, %v1203
  %v1206 = vrot.slane %v1187, 3
  %v1207 = vsel %vm355, %v1206, %v1205
  %v1208 = vrot.slane %v1188, 2
  %v1209 = vsel %vm358, %v1208, %v1207
  %v1210 = vrot.slane %v1189, 1
  %v1211 = vsel %vm361, %v1210, %v1209
  %1212 = vrot.lane.b32.xlu0 %v1211, 32
  %v1213 = vpop.permute.xlu0 %1212
  %1216 = vrot.lane.b32.xlu0 %v893, 64
  %v1217 = vpop.permute.xlu0 %1216
  %v1219 = vsel %vm44, %v1213, %v1217
  %v1221 = vsel %vm373, %v1219, 0
  %1223 = vmatprep.subr.mxu0 0.0
  %1224 = vmatpush1.msra.mxu0 0.0
  %1225 = vmatprep.subr.mxu0 0.0
  %1226 = vmatpush1.msra.mxu0 0.0
  %1227 = vmatprep.subr.mxu0 0.0
  %1228 = vmatpush1.msra.mxu0 0.0
  %1229 = vmatprep.subr.mxu0 0.0
  %1230 = vmatpush1.msra.mxu0 0.0
  %1231 = vmatprep.subr.mxu0 0.0
  %1232 = vmatpush1.msra.mxu0 0.0
  %1233 = vmatprep.subr.mxu0 0.0
  %1234 = vmatpush1.msra.mxu0 0.0
  %1235 = vmatprep.subr.mxu0 0.0
  %1236 = vmatpush1.msra.mxu0 0.0
  %1237 = vmatprep.subr.mxu0 0.0
  %1238 = vmatpush1.msra.mxu0 0.0
  %1239 = vmatprep.subr.mxu0 0.0
  %1240 = vmatpush1.msra.mxu0 %v34
  %1241 = vmatprep.subr.mxu0 0.0
  %1242 = vmatpush1.msra.mxu0 %v33
  %1243 = vmatprep.subr.mxu0 0.0
  %1244 = vmatpush1.msra.mxu0 %v32
  %1245 = vmatprep.subr.mxu0 0.0
  %1246 = vmatpush1.msra.mxu0 %v31
  %1247 = vmatprep.subr.mxu0 0.0
  %1248 = vmatpush1.msra.mxu0 %v30
  %1249 = vmatprep.subr.mxu0 0.0
  %1250 = vmatpush1.msra.mxu0 %v29
  %1251 = vmatprep.subr.mxu0 0.0
  %1252 = vmatpush1.msra.mxu0 %v28
  %1253 = vmatprep.subr.mxu0 0.0
  %1254 = vmatpush1.msra.mxu0 %v27
  %1255 = vmatprep.subr.mxu0 0.0
  %1256 = vmatpush2.msra.mxu0 0.0
  %1257 = vmatprep.subr.mxu0 0.0
  %1258 = vmatpush2.msra.mxu0 0.0
  %1259 = vmatprep.subr.mxu0 0.0
  %1260 = vmatpush2.msra.mxu0 0.0
  %1261 = vmatprep.subr.mxu0 0.0
  %1262 = vmatpush2.msra.mxu0 0.0
  %1263 = vmatprep.subr.mxu0 0.0
  %1264 = vmatpush2.msra.mxu0 0.0
  %1265 = vmatprep.subr.mxu0 0.0
  %1266 = vmatpush2.msra.mxu0 0.0
  %1267 = vmatprep.subr.mxu0 0.0
  %1268 = vmatpush2.msra.mxu0 0.0
  %1269 = vmatprep.subr.mxu0 0.0
  %1270 = vmatpush2.msra.mxu0 0.0
  %1271 = vmatprep.subr.mxu0 0.0
  %1272 = vmatpush2.msra.mxu0 0.0
  %1273 = vmatprep.subr.mxu0 0.0
  %1274 = vmatpush2.msra.mxu0 0.0
  %1275 = vmatprep.subr.mxu0 0.0
  %1276 = vmatpush2.msra.mxu0 0.0
  %1277 = vmatprep.subr.mxu0 0.0
  %1278 = vmatpush2.msra.mxu0 0.0
  %1279 = vmatprep.subr.mxu0 0.0
  %1280 = vmatpush2.msra.mxu0 0.0
  %1281 = vmatprep.subr.mxu0 0.0
  %1282 = vmatpush2.msra.mxu0 0.0
  %1283 = vmatprep.subr.mxu0 0.0
  %1284 = vmatpush2.msra.mxu0 0.0
  %1285 = vmatprep.subr.mxu0 0.0
  %1286 = vmatpush2.msra.mxu0 0.0
  %1287 = vmatprep.mubr.f32.mxu0 0.0
  %1288 = vmatmul.mubr.f32.gmra.mxu0 %v1221
  %v1289 = vpop.f32.mrf.mxu0
  %v1290 = vadd.f32 %v371, %v1289
  %v1291 = vpop.f32.mrf.mxu0
  %1292 = vdwg.mxu0
  %v1293 = vxor.u32 %v1290, 2147483648
  %v1294 = vmul.f32 %v1293, 1.442695
  %v1295 = vpow.pop %v1294
  %v1296 = vadd.f32 %v1295, 1.0
  %v1297 = vrcp.pop %v1296
  %v1298 = vmul.f32 1.0, %v1297
  %v1299 = vtanh.pop %v1290
  %v1300 = vmul.f32 %v1298, %v887
  %1302 = vrot.lane.b32.xlu0 %v1299, 64
  %v1303 = vpop.permute.xlu0 %1302
  %v1305 = vmul.f32 %v1298, %v1303
  %1307 = vrot.lane.b32.xlu0 %v1305, 32
  %v1308 = vpop.permute.xlu0 %1307
  %v1310 = vadd.f32 %v1300, %v1308
  %v1311 = vtanh.pop %v1310
  %1313 = vrot.lane.b32.xlu0 %v1311, 64
  %v1314 = vpop.permute.xlu0 %1313
  %v1316 = vmul.f32 %v1298, %v1314
  %v1317 = vld [vmem:[%s0 + $0x3] sm:$0x1]
  %v1318 = vld [vmem:[%s0 + $0xb] sm:$0x1]
  %v1319 = vld [vmem:[%s0 + $0x13] sm:$0x1]
  %v1320 = vld [vmem:[%s0 + $0x1b] sm:$0x1]
  %v1321 = vld [vmem:[%s0 + $0x23] sm:$0x1]
  %v1322 = vld [vmem:[%s0 + $0x2b] sm:$0x1]
  %v1323 = vld [vmem:[%s0 + $0x33] sm:$0x1]
  %v1324 = vld [vmem:[%s0 + $0x3b] sm:$0x1]
  %v1325 = vsel %vm44, %v1213, 0
  %1327 = vmatprep.subr.mxu0 0.0
  %1328 = vmatpush1.msra.mxu0 0.0
  %1329 = vmatprep.subr.mxu0 0.0
  %1330 = vmatpush1.msra.mxu0 0.0
  %1331 = vmatprep.subr.mxu0 0.0
  %1332 = vmatpush1.msra.mxu0 0.0
  %1333 = vmatprep.subr.mxu0 0.0
  %1334 = vmatpush1.msra.mxu0 0.0
  %1335 = vmatprep.subr.mxu0 0.0
  %1336 = vmatpush1.msra.mxu0 0.0
  %1337 = vmatprep.subr.mxu0 0.0
  %1338 = vmatpush1.msra.mxu0 0.0
  %1339 = vmatprep.subr.mxu0 0.0
  %1340 = vmatpush1.msra.mxu0 0.0
  %1341 = vmatprep.subr.mxu0 0.0
  %1342 = vmatpush1.msra.mxu0 0.0
  %1343 = vmatprep.subr.mxu0 0.0
  %1344 = vmatpush1.msra.mxu0 0.0
  %1345 = vmatprep.subr.mxu0 0.0
  %1346 = vmatpush1.msra.mxu0 0.0
  %1347 = vmatprep.subr.mxu0 0.0
  %1348 = vmatpush1.msra.mxu0 0.0
  %1349 = vmatprep.subr.mxu0 0.0
  %1350 = vmatpush1.msra.mxu0 0.0
  %1351 = vmatprep.subr.mxu0 0.0
  %1352 = vmatpush1.msra.mxu0 %v26
  %1353 = vmatprep.subr.mxu0 0.0
  %1354 = vmatpush1.msra.mxu0 %v25
  %1355 = vmatprep.subr.mxu0 0.0
  %1356 = vmatpush1.msra.mxu0 %v24
  %1357 = vmatprep.subr.mxu0 0.0
  %1358 = vmatpush1.msra.mxu0 %v23
  %1359 = vmatprep.subr.mxu0 0.0
  %1360 = vmatpush2.msra.mxu0 0.0
  %1361 = vmatprep.subr.mxu0 0.0
  %1362 = vmatpush2.msra.mxu0 0.0
  %1363 = vmatprep.subr.mxu0 0.0
  %1364 = vmatpush2.msra.mxu0 0.0
  %1365 = vmatprep.subr.mxu0 0.0
  %1366 = vmatpush2.msra.mxu0 0.0
  %1367 = vmatprep.subr.mxu0 0.0
  %1368 = vmatpush2.msra.mxu0 0.0
  %1369 = vmatprep.subr.mxu0 0.0
  %1370 = vmatpush2.msra.mxu0 0.0
  %1371 = vmatprep.subr.mxu0 0.0
  %1372 = vmatpush2.msra.mxu0 0.0
  %1373 = vmatprep.subr.mxu0 0.0
  %1374 = vmatpush2.msra.mxu0 0.0
  %1375 = vmatprep.subr.mxu0 0.0
  %1376 = vmatpush2.msra.mxu0 0.0
  %1377 = vmatprep.subr.mxu0 0.0
  %1378 = vmatpush2.msra.mxu0 0.0
  %1379 = vmatprep.subr.mxu0 0.0
  %1380 = vmatpush2.msra.mxu0 0.0
  %1381 = vmatprep.subr.mxu0 0.0
  %1382 = vmatpush2.msra.mxu0 0.0
  %1383 = vmatprep.subr.mxu0 0.0
  %1384 = vmatpush2.msra.mxu0 0.0
  %1385 = vmatprep.subr.mxu0 0.0
  %1386 = vmatpush2.msra.mxu0 0.0
  %1387 = vmatprep.subr.mxu0 0.0
  %1388 = vmatpush2.msra.mxu0 0.0
  %1389 = vmatprep.subr.mxu0 0.0
  %1390 = vmatpush2.msra.mxu0 0.0
  %1391 = vmatprep.mubr.f32.mxu0 0.0
  %1392 = vmatmul.mubr.f32.gmra.mxu0 %v1325
  %v1393 = vpop.f32.mrf.mxu0
  %v1394 = vadd.f32 0.0, %v1393
  %v1395 = vpop.f32.mrf.mxu0
  %1396 = vdwg.mxu0
  %v1398 = vrot.slane %v1394, 1
  %v1399 = vrot.slane %v1394, 2
  %v1400 = vrot.slane %v1394, 3
  %v1401 = vrot.slane %v1394, 4
  %v1402 = vrot.slane %v1394, 5
  %v1403 = vrot.slane %v1394, 6
  %v1404 = vrot.slane %v1394, 7
  %v1413 = vadd.f32 %v1317, %v1394
  %v1414 = vadd.f32 %v1318, %v1398
  %v1415 = vadd.f32 %v1319, %v1399
  %v1416 = vadd.f32 %v1320, %v1400
  %v1417 = vadd.f32 %v1321, %v1401
  %v1418 = vadd.f32 %v1322, %v1402
  %v1419 = vadd.f32 %v1323, %v1403
  %v1420 = vadd.f32 %v1324, %v1404
  %v1421 = vxor.u32 %v1413, 2147483648
  %v1422 = vxor.u32 %v1414, 2147483648
  %v1423 = vxor.u32 %v1415, 2147483648
  %v1424 = vxor.u32 %v1416, 2147483648
  %v1425 = vxor.u32 %v1417, 2147483648
  %v1426 = vxor.u32 %v1418, 2147483648
  %v1427 = vxor.u32 %v1419, 2147483648
  %v1428 = vxor.u32 %v1420, 2147483648
  %v1429 = vmul.f32 %v1421, 1.442695
  %v1430 = vpow.pop %v1429
  %v1431 = vmul.f32 %v1422, 1.442695
  %v1432 = vpow.pop %v1431
  %v1433 = vmul.f32 %v1423, 1.442695
  %v1434 = vpow.pop %v1433
  %v1435 = vmul.f32 %v1424, 1.442695
  %v1436 = vpow.pop %v1435
  %v1437 = vmul.f32 %v1425, 1.442695
  %v1438 = vpow.pop %v1437
  %v1439 = vmul.f32 %v1426, 1.442695
  %v1440 = vpow.pop %v1439
  %v1441 = vmul.f32 %v1427, 1.442695
  %v1442 = vpow.pop %v1441
  %v1443 = vmul.f32 %v1428, 1.442695
  %v1444 = vpow.pop %v1443
  %v1445 = vadd.f32 %v1430, 1.0
  %v1446 = vadd.f32 %v1432, 1.0
  %v1447 = vadd.f32 %v1434, 1.0
  %v1448 = vadd.f32 %v1436, 1.0
  %v1449 = vadd.f32 %v1438, 1.0
  %v1450 = vadd.f32 %v1440, 1.0
  %v1451 = vadd.f32 %v1442, 1.0
  %v1452 = vadd.f32 %v1444, 1.0
  %v1453 = vrcp.pop %v1445
  %v1454 = vmul.f32 1.0, %v1453
  %v1455 = vrcp.pop %v1446
  %v1456 = vmul.f32 1.0, %v1455
  %v1457 = vrcp.pop %v1447
  %v1458 = vmul.f32 1.0, %v1457
  %v1459 = vrcp.pop %v1448
  %v1460 = vmul.f32 1.0, %v1459
  %v1461 = vrcp.pop %v1449
  %v1462 = vmul.f32 1.0, %v1461
  %v1463 = vrcp.pop %v1450
  %v1464 = vmul.f32 1.0, %v1463
  %v1465 = vrcp.pop %v1451
  %v1466 = vmul.f32 1.0, %v1465
  %v1467 = vrcp.pop %v1452
  %v1468 = vmul.f32 1.0, %v1467
  %v1469 = vtanh.pop %v1413
  %v1470 = vtanh.pop %v1414
  %v1471 = vtanh.pop %v1415
  %v1472 = vtanh.pop %v1416
  %v1473 = vtanh.pop %v1417
  %v1474 = vtanh.pop %v1418
  %v1475 = vtanh.pop %v1419
  %v1476 = vtanh.pop %v1420
  %v1477 = vmul.f32 %v1454, %v1134
  %v1478 = vmul.f32 %v1456, %v1135
  %v1479 = vmul.f32 %v1458, %v1136
  %v1480 = vmul.f32 %v1460, %v1137
  %v1481 = vmul.f32 %v1462, %v1138
  %v1482 = vmul.f32 %v1464, %v1139
  %v1483 = vmul.f32 %v1466, %v1140
  %v1484 = vmul.f32 %v1468, %v1141
  %1493 = vrot.lane.b32.xlu0 %v1469, 64
  %v1494 = vpop.permute.xlu0 %1493
  %1495 = vrot.lane.b32.xlu0 %v1470, 64
  %v1496 = vpop.permute.xlu0 %1495
  %1497 = vrot.lane.b32.xlu0 %v1471, 64
  %v1498 = vpop.permute.xlu0 %1497
  %1499 = vrot.lane.b32.xlu0 %v1472, 64
  %v1500 = vpop.permute.xlu0 %1499
  %1501 = vrot.lane.b32.xlu0 %v1473, 64
  %v1502 = vpop.permute.xlu0 %1501
  %1503 = vrot.lane.b32.xlu0 %v1474, 64
  %v1504 = vpop.permute.xlu0 %1503
  %1505 = vrot.lane.b32.xlu0 %v1475, 64
  %v1506 = vpop.permute.xlu0 %1505
  %1507 = vrot.lane.b32.xlu0 %v1476, 64
  %v1508 = vpop.permute.xlu0 %1507
  %v1517 = vmul.f32 %v1454, %v1494
  %v1518 = vmul.f32 %v1456, %v1496
  %v1519 = vmul.f32 %v1458, %v1498
  %v1520 = vmul.f32 %v1460, %v1500
  %v1521 = vmul.f32 %v1462, %v1502
  %v1522 = vmul.f32 %v1464, %v1504
  %v1523 = vmul.f32 %v1466, %v1506
  %v1524 = vmul.f32 %v1468, %v1508
  %1533 = vrot.lane.b32.xlu0 %v1517, 32
  %v1534 = vpop.permute.xlu0 %1533
  %1535 = vrot.lane.b32.xlu0 %v1518, 32
  %v1536 = vpop.permute.xlu0 %1535
  %1537 = vrot.lane.b32.xlu0 %v1519, 32
  %v1538 = vpop.permute.xlu0 %1537
  %1539 = vrot.lane.b32.xlu0 %v1520, 32
  %v1540 = vpop.permute.xlu0 %1539
  %1541 = vrot.lane.b32.xlu0 %v1521, 32
  %v1542 = vpop.permute.xlu0 %1541
  %1543 = vrot.lane.b32.xlu0 %v1522, 32
  %v1544 = vpop.permute.xlu0 %1543
  %1545 = vrot.lane.b32.xlu0 %v1523, 32
  %v1546 = vpop.permute.xlu0 %1545
  %1547 = vrot.lane.b32.xlu0 %v1524, 32
  %v1548 = vpop.permute.xlu0 %1547
  %v1557 = vadd.f32 %v1477, %v1534
  %v1558 = vadd.f32 %v1478, %v1536
  %v1559 = vadd.f32 %v1479, %v1538
  %v1560 = vadd.f32 %v1480, %v1540
  %v1561 = vadd.f32 %v1481, %v1542
  %v1562 = vadd.f32 %v1482, %v1544
  %v1563 = vadd.f32 %v1483, %v1546
  %v1564 = vadd.f32 %v1484, %v1548
  %v1565 = vtanh.pop %v1557
  %v1566 = vtanh.pop %v1558
  %v1567 = vtanh.pop %v1559
  %v1568 = vtanh.pop %v1560
  %v1569 = vtanh.pop %v1561
  %v1570 = vtanh.pop %v1562
  %v1571 = vtanh.pop %v1563
  %v1572 = vtanh.pop %v1564
  %1581 = vrot.lane.b32.xlu0 %v1565, 64
  %v1582 = vpop.permute.xlu0 %1581
  %1583 = vrot.lane.b32.xlu0 %v1566, 64
  %v1584 = vpop.permute.xlu0 %1583
  %1585 = vrot.lane.b32.xlu0 %v1567, 64
  %v1586 = vpop.permute.xlu0 %1585
  %1587 = vrot.lane.b32.xlu0 %v1568, 64
  %v1588 = vpop.permute.xlu0 %1587
  %1589 = vrot.lane.b32.xlu0 %v1569, 64
  %v1590 = vpop.permute.xlu0 %1589
  %1591 = vrot.lane.b32.xlu0 %v1570, 64
  %v1592 = vpop.permute.xlu0 %1591
  %1593 = vrot.lane.b32.xlu0 %v1571, 64
  %v1594 = vpop.permute.xlu0 %1593
  %1595 = vrot.lane.b32.xlu0 %v1572, 64
  %v1596 = vpop.permute.xlu0 %1595
  %v1605 = vmul.f32 %v1454, %v1582
  %v1606 = vmul.f32 %v1456, %v1584
  %v1607 = vmul.f32 %v1458, %v1586
  %v1608 = vmul.f32 %v1460, %v1588
  %v1609 = vmul.f32 %v1462, %v1590
  %v1610 = vmul.f32 %v1464, %v1592
  %v1611 = vmul.f32 %v1466, %v1594
  %v1612 = vmul.f32 %v1468, %v1596
  %v1621 = vrot.slane %v1606, 7
  %v1622 = vsel %vm343, %v1621, %v1605
  %v1623 = vrot.slane %v1607, 6
  %v1624 = vsel %vm346, %v1623, %v1622
  %v1625 = vrot.slane %v1608, 5
  %v1626 = vsel %vm349, %v1625, %v1624
  %v1627 = vrot.slane %v1609, 4
  %v1628 = vsel %vm352, %v1627, %v1626
  %v1629 = vrot.slane %v1610, 3
  %v1630 = vsel %vm355, %v1629, %v1628
  %v1631 = vrot.slane %v1611, 2
  %v1632 = vsel %vm358, %v1631, %v1630
  %v1633 = vrot.slane %v1612, 1
  %v1634 = vsel %vm361, %v1633, %v1632
  %1635 = vrot.lane.b32.xlu0 %v1634, 32
  %v1636 = vpop.permute.xlu0 %1635
  %1639 = vrot.lane.b32.xlu0 %v1316, 64
  %v1640 = vpop.permute.xlu0 %1639
  %v1642 = vsel %vm44, %v1636, %v1640
  %v1644 = vsel %vm373, %v1642, 0
  %1646 = vmatprep.subr.mxu0 0.0
  %1647 = vmatpush1.msra.mxu0 0.0
  %1648 = vmatprep.subr.mxu0 0.0
  %1649 = vmatpush1.msra.mxu0 0.0
  %1650 = vmatprep.subr.mxu0 0.0
  %1651 = vmatpush1.msra.mxu0 0.0
  %1652 = vmatprep.subr.mxu0 0.0
  %1653 = vmatpush1.msra.mxu0 0.0
  %1654 = vmatprep.subr.mxu0 0.0
  %1655 = vmatpush1.msra.mxu0 0.0
  %1656 = vmatprep.subr.mxu0 0.0
  %1657 = vmatpush1.msra.mxu0 0.0
  %1658 = vmatprep.subr.mxu0 0.0
  %1659 = vmatpush1.msra.mxu0 0.0
  %1660 = vmatprep.subr.mxu0 0.0
  %1661 = vmatpush1.msra.mxu0 0.0
  %1662 = vmatprep.subr.mxu0 0.0
  %1663 = vmatpush1.msra.mxu0 %v34
  %1664 = vmatprep.subr.mxu0 0.0
  %1665 = vmatpush1.msra.mxu0 %v33
  %1666 = vmatprep.subr.mxu0 0.0
  %1667 = vmatpush1.msra.mxu0 %v32
  %1668 = vmatprep.subr.mxu0 0.0
  %1669 = vmatpush1.msra.mxu0 %v31
  %1670 = vmatprep.subr.mxu0 0.0
  %1671 = vmatpush1.msra.mxu0 %v30
  %1672 = vmatprep.subr.mxu0 0.0
  %1673 = vmatpush1.msra.mxu0 %v29
  %1674 = vmatprep.subr.mxu0 0.0
  %1675 = vmatpush1.msra.mxu0 %v28
  %1676 = vmatprep.subr.mxu0 0.0
  %1677 = vmatpush1.msra.mxu0 %v27
  %1678 = vmatprep.subr.mxu0 0.0
  %1679 = vmatpush2.msra.mxu0 0.0
  %1680 = vmatprep.subr.mxu0 0.0
  %1681 = vmatpush2.msra.mxu0 0.0
  %1682 = vmatprep.subr.mxu0 0.0
  %1683 = vmatpush2.msra.mxu0 0.0
  %1684 = vmatprep.subr.mxu0 0.0
  %1685 = vmatpush2.msra.mxu0 0.0
  %1686 = vmatprep.subr.mxu0 0.0
  %1687 = vmatpush2.msra.mxu0 0.0
  %1688 = vmatprep.subr.mxu0 0.0
  %1689 = vmatpush2.msra.mxu0 0.0
  %1690 = vmatprep.subr.mxu0 0.0
  %1691 = vmatpush2.msra.mxu0 0.0
  %1692 = vmatprep.subr.mxu0 0.0
  %1693 = vmatpush2.msra.mxu0 0.0
  %1694 = vmatprep.subr.mxu0 0.0
  %1695 = vmatpush2.msra.mxu0 0.0
  %1696 = vmatprep.subr.mxu0 0.0
  %1697 = vmatpush2.msra.mxu0 0.0
  %1698 = vmatprep.subr.mxu0 0.0
  %1699 = vmatpush2.msra.mxu0 0.0
  %1700 = vmatprep.subr.mxu0 0.0
  %1701 = vmatpush2.msra.mxu0 0.0
  %1702 = vmatprep.subr.mxu0 0.0
  %1703 = vmatpush2.msra.mxu0 0.0
  %1704 = vmatprep.subr.mxu0 0.0
  %1705 = vmatpush2.msra.mxu0 0.0
  %1706 = vmatprep.subr.mxu0 0.0
  %1707 = vmatpush2.msra.mxu0 0.0
  %1708 = vmatprep.subr.mxu0 0.0
  %1709 = vmatpush2.msra.mxu0 0.0
  %1710 = vmatprep.mubr.f32.mxu0 0.0
  %1711 = vmatmul.mubr.f32.gmra.mxu0 %v1644
  %v1712 = vpop.f32.mrf.mxu0
  %v1713 = vadd.f32 %v371, %v1712
  %v1714 = vpop.f32.mrf.mxu0
  %1715 = vdwg.mxu0
  %v1716 = vxor.u32 %v1713, 2147483648
  %v1717 = vmul.f32 %v1716, 1.442695
  %v1718 = vpow.pop %v1717
  %v1719 = vadd.f32 %v1718, 1.0
  %v1720 = vrcp.pop %v1719
  %v1721 = vmul.f32 1.0, %v1720
  %v1722 = vtanh.pop %v1713
  %v1723 = vmul.f32 %v1721, %v1310
  %1725 = vrot.lane.b32.xlu0 %v1722, 64
  %v1726 = vpop.permute.xlu0 %1725
  %v1728 = vmul.f32 %v1721, %v1726
  %1730 = vrot.lane.b32.xlu0 %v1728, 32
  %v1731 = vpop.permute.xlu0 %1730
  %v1733 = vadd.f32 %v1723, %v1731
  %v1734 = vtanh.pop %v1733
  %1736 = vrot.lane.b32.xlu0 %v1734, 64
  %v1737 = vpop.permute.xlu0 %1736
  %v1739 = vmul.f32 %v1721, %v1737
  %v1740 = vld [vmem:[%s0 + $0x4] sm:$0x1]
  %v1741 = vld [vmem:[%s0 + $0xc] sm:$0x1]
  %v1742 = vld [vmem:[%s0 + $0x14] sm:$0x1]
  %v1743 = vld [vmem:[%s0 + $0x1c] sm:$0x1]
  %v1744 = vld [vmem:[%s0 + $0x24] sm:$0x1]
  %v1745 = vld [vmem:[%s0 + $0x2c] sm:$0x1]
  %v1746 = vld [vmem:[%s0 + $0x34] sm:$0x1]
  %v1747 = vld [vmem:[%s0 + $0x3c] sm:$0x1]
  %v1748 = vsel %vm44, %v1636, 0
  %1750 = vmatprep.subr.mxu0 0.0
  %1751 = vmatpush1.msra.mxu0 0.0
  %1752 = vmatprep.subr.mxu0 0.0
  %1753 = vmatpush1.msra.mxu0 0.0
  %1754 = vmatprep.subr.mxu0 0.0
  %1755 = vmatpush1.msra.mxu0 0.0
  %1756 = vmatprep.subr.mxu0 0.0
  %1757 = vmatpush1.msra.mxu0 0.0
  %1758 = vmatprep.subr.mxu0 0.0
  %1759 = vmatpush1.msra.mxu0 0.0
  %1760 = vmatprep.subr.mxu0 0.0
  %1761 = vmatpush1.msra.mxu0 0.0
  %1762 = vmatprep.subr.mxu0 0.0
  %1763 = vmatpush1.msra.mxu0 0.0
  %1764 = vmatprep.subr.mxu0 0.0
  %1765 = vmatpush1.msra.mxu0 0.0
  %1766 = vmatprep.subr.mxu0 0.0
  %1767 = vmatpush1.msra.mxu0 0.0
  %1768 = vmatprep.subr.mxu0 0.0
  %1769 = vmatpush1.msra.mxu0 0.0
  %1770 = vmatprep.subr.mxu0 0.0
  %1771 = vmatpush1.msra.mxu0 0.0
  %1772 = vmatprep.subr.mxu0 0.0
  %1773 = vmatpush1.msra.mxu0 0.0
  %1774 = vmatprep.subr.mxu0 0.0
  %1775 = vmatpush1.msra.mxu0 %v26
  %1776 = vmatprep.subr.mxu0 0.0
  %1777 = vmatpush1.msra.mxu0 %v25
  %1778 = vmatprep.subr.mxu0 0.0
  %1779 = vmatpush1.msra.mxu0 %v24
  %1780 = vmatprep.subr.mxu0 0.0
  %1781 = vmatpush1.msra.mxu0 %v23
  %1782 = vmatprep.subr.mxu0 0.0
  %1783 = vmatpush2.msra.mxu0 0.0
  %1784 = vmatprep.subr.mxu0 0.0
  %1785 = vmatpush2.msra.mxu0 0.0
  %1786 = vmatprep.subr.mxu0 0.0
  %1787 = vmatpush2.msra.mxu0 0.0
  %1788 = vmatprep.subr.mxu0 0.0
  %1789 = vmatpush2.msra.mxu0 0.0
  %1790 = vmatprep.subr.mxu0 0.0
  %1791 = vmatpush2.msra.mxu0 0.0
  %1792 = vmatprep.subr.mxu0 0.0
  %1793 = vmatpush2.msra.mxu0 0.0
  %1794 = vmatprep.subr.mxu0 0.0
  %1795 = vmatpush2.msra.mxu0 0.0
  %1796 = vmatprep.subr.mxu0 0.0
  %1797 = vmatpush2.msra.mxu0 0.0
  %1798 = vmatprep.subr.mxu0 0.0
  %1799 = vmatpush2.msra.mxu0 0.0
  %1800 = vmatprep.subr.mxu0 0.0
  %1801 = vmatpush2.msra.mxu0 0.0
  %1802 = vmatprep.subr.mxu0 0.0
  %1803 = vmatpush2.msra.mxu0 0.0
  %1804 = vmatprep.subr.mxu0 0.0
  %1805 = vmatpush2.msra.mxu0 0.0
  %1806 = vmatprep.subr.mxu0 0.0
  %1807 = vmatpush2.msra.mxu0 0.0
  %1808 = vmatprep.subr.mxu0 0.0
  %1809 = vmatpush2.msra.mxu0 0.0
  %1810 = vmatprep.subr.mxu0 0.0
  %1811 = vmatpush2.msra.mxu0 0.0
  %1812 = vmatprep.subr.mxu0 0.0
  %1813 = vmatpush2.msra.mxu0 0.0
  %1814 = vmatprep.mubr.f32.mxu0 0.0
  %1815 = vmatmul.mubr.f32.gmra.mxu0 %v1748
  %v1816 = vpop.f32.mrf.mxu0
  %v1817 = vadd.f32 0.0, %v1816
  %v1818 = vpop.f32.mrf.mxu0
  %1819 = vdwg.mxu0
  %v1821 = vrot.slane %v1817, 1
  %v1822 = vrot.slane %v1817, 2
  %v1823 = vrot.slane %v1817, 3
  %v1824 = vrot.slane %v1817, 4
  %v1825 = vrot.slane %v1817, 5
  %v1826 = vrot.slane %v1817, 6
  %v1827 = vrot.slane %v1817, 7
  %v1836 = vadd.f32 %v1740, %v1817
  %v1837 = vadd.f32 %v1741, %v1821
  %v1838 = vadd.f32 %v1742, %v1822
  %v1839 = vadd.f32 %v1743, %v1823
  %v1840 = vadd.f32 %v1744, %v1824
  %v1841 = vadd.f32 %v1745, %v1825
  %v1842 = vadd.f32 %v1746, %v1826
  %v1843 = vadd.f32 %v1747, %v1827
  %v1844 = vxor.u32 %v1836, 2147483648
  %v1845 = vxor.u32 %v1837, 2147483648
  %v1846 = vxor.u32 %v1838, 2147483648
  %v1847 = vxor.u32 %v1839, 2147483648
  %v1848 = vxor.u32 %v1840, 2147483648
  %v1849 = vxor.u32 %v1841, 2147483648
  %v1850 = vxor.u32 %v1842, 2147483648
  %v1851 = vxor.u32 %v1843, 2147483648
  %v1852 = vmul.f32 %v1844, 1.442695
  %v1853 = vpow.pop %v1852
  %v1854 = vmul.f32 %v1845, 1.442695
  %v1855 = vpow.pop %v1854
  %v1856 = vmul.f32 %v1846, 1.442695
  %v1857 = vpow.pop %v1856
  %v1858 = vmul.f32 %v1847, 1.442695
  %v1859 = vpow.pop %v1858
  %v1860 = vmul.f32 %v1848, 1.442695
  %v1861 = vpow.pop %v1860
  %v1862 = vmul.f32 %v1849, 1.442695
  %v1863 = vpow.pop %v1862
  %v1864 = vmul.f32 %v1850, 1.442695
  %v1865 = vpow.pop %v1864
  %v1866 = vmul.f32 %v1851, 1.442695
  %v1867 = vpow.pop %v1866
  %v1868 = vadd.f32 %v1853, 1.0
  %v1869 = vadd.f32 %v1855, 1.0
  %v1870 = vadd.f32 %v1857, 1.0
  %v1871 = vadd.f32 %v1859, 1.0
  %v1872 = vadd.f32 %v1861, 1.0
  %v1873 = vadd.f32 %v1863, 1.0
  %v1874 = vadd.f32 %v1865, 1.0
  %v1875 = vadd.f32 %v1867, 1.0
  %v1876 = vrcp.pop %v1868
  %v1877 = vmul.f32 1.0, %v1876
  %v1878 = vrcp.pop %v1869
  %v1879 = vmul.f32 1.0, %v1878
  %v1880 = vrcp.pop %v1870
  %v1881 = vmul.f32 1.0, %v1880
  %v1882 = vrcp.pop %v1871
  %v1883 = vmul.f32 1.0, %v1882
  %v1884 = vrcp.pop %v1872
  %v1885 = vmul.f32 1.0, %v1884
  %v1886 = vrcp.pop %v1873
  %v1887 = vmul.f32 1.0, %v1886
  %v1888 = vrcp.pop %v1874
  %v1889 = vmul.f32 1.0, %v1888
  %v1890 = vrcp.pop %v1875
  %v1891 = vmul.f32 1.0, %v1890
  %v1892 = vtanh.pop %v1836
  %v1893 = vtanh.pop %v1837
  %v1894 = vtanh.pop %v1838
  %v1895 = vtanh.pop %v1839
  %v1896 = vtanh.pop %v1840
  %v1897 = vtanh.pop %v1841
  %v1898 = vtanh.pop %v1842
  %v1899 = vtanh.pop %v1843
  %v1900 = vmul.f32 %v1877, %v1557
  %v1901 = vmul.f32 %v1879, %v1558
  %v1902 = vmul.f32 %v1881, %v1559
  %v1903 = vmul.f32 %v1883, %v1560
  %v1904 = vmul.f32 %v1885, %v1561
  %v1905 = vmul.f32 %v1887, %v1562
  %v1906 = vmul.f32 %v1889, %v1563
  %v1907 = vmul.f32 %v1891, %v1564
  %1916 = vrot.lane.b32.xlu0 %v1892, 64
  %v1917 = vpop.permute.xlu0 %1916
  %1918 = vrot.lane.b32.xlu0 %v1893, 64
  %v1919 = vpop.permute.xlu0 %1918
  %1920 = vrot.lane.b32.xlu0 %v1894, 64
  %v1921 = vpop.permute.xlu0 %1920
  %1922 = vrot.lane.b32.xlu0 %v1895, 64
  %v1923 = vpop.permute.xlu0 %1922
  %1924 = vrot.lane.b32.xlu0 %v1896, 64
  %v1925 = vpop.permute.xlu0 %1924
  %1926 = vrot.lane.b32.xlu0 %v1897, 64
  %v1927 = vpop.permute.xlu0 %1926
  %1928 = vrot.lane.b32.xlu0 %v1898, 64
  %v1929 = vpop.permute.xlu0 %1928
  %1930 = vrot.lane.b32.xlu0 %v1899, 64
  %v1931 = vpop.permute.xlu0 %1930
  %v1940 = vmul.f32 %v1877, %v1917
  %v1941 = vmul.f32 %v1879, %v1919
  %v1942 = vmul.f32 %v1881, %v1921
  %v1943 = vmul.f32 %v1883, %v1923
  %v1944 = vmul.f32 %v1885, %v1925
  %v1945 = vmul.f32 %v1887, %v1927
  %v1946 = vmul.f32 %v1889, %v1929
  %v1947 = vmul.f32 %v1891, %v1931
  %1956 = vrot.lane.b32.xlu0 %v1940, 32
  %v1957 = vpop.permute.xlu0 %1956
  %1958 = vrot.lane.b32.xlu0 %v1941, 32
  %v1959 = vpop.permute.xlu0 %1958
  %1960 = vrot.lane.b32.xlu0 %v1942, 32
  %v1961 = vpop.permute.xlu0 %1960
  %1962 = vrot.lane.b32.xlu0 %v1943, 32
  %v1963 = vpop.permute.xlu0 %1962
  %1964 = vrot.lane.b32.xlu0 %v1944, 32
  %v1965 = vpop.permute.xlu0 %1964
  %1966 = vrot.lane.b32.xlu0 %v1945, 32
  %v1967 = vpop.permute.xlu0 %1966
  %1968 = vrot.lane.b32.xlu0 %v1946, 32
  %v1969 = vpop.permute.xlu0 %1968
  %1970 = vrot.lane.b32.xlu0 %v1947, 32
  %v1971 = vpop.permute.xlu0 %1970
  %v1980 = vadd.f32 %v1900, %v1957
  %v1981 = vadd.f32 %v1901, %v1959
  %v1982 = vadd.f32 %v1902, %v1961
  %v1983 = vadd.f32 %v1903, %v1963
  %v1984 = vadd.f32 %v1904, %v1965
  %v1985 = vadd.f32 %v1905, %v1967
  %v1986 = vadd.f32 %v1906, %v1969
  %v1987 = vadd.f32 %v1907, %v1971
  %v1988 = vtanh.pop %v1980
  %v1989 = vtanh.pop %v1981
  %v1990 = vtanh.pop %v1982
  %v1991 = vtanh.pop %v1983
  %v1992 = vtanh.pop %v1984
  %v1993 = vtanh.pop %v1985
  %v1994 = vtanh.pop %v1986
  %v1995 = vtanh.pop %v1987
  %2004 = vrot.lane.b32.xlu0 %v1988, 64
  %v2005 = vpop.permute.xlu0 %2004
  %2006 = vrot.lane.b32.xlu0 %v1989, 64
  %v2007 = vpop.permute.xlu0 %2006
  %2008 = vrot.lane.b32.xlu0 %v1990, 64
  %v2009 = vpop.permute.xlu0 %2008
  %2010 = vrot.lane.b32.xlu0 %v1991, 64
  %v2011 = vpop.permute.xlu0 %2010
  %2012 = vrot.lane.b32.xlu0 %v1992, 64
  %v2013 = vpop.permute.xlu0 %2012
  %2014 = vrot.lane.b32.xlu0 %v1993, 64
  %v2015 = vpop.permute.xlu0 %2014
  %2016 = vrot.lane.b32.xlu0 %v1994, 64
  %v2017 = vpop.permute.xlu0 %2016
  %2018 = vrot.lane.b32.xlu0 %v1995, 64
  %v2019 = vpop.permute.xlu0 %2018
  %v2028 = vmul.f32 %v1877, %v2005
  %v2029 = vmul.f32 %v1879, %v2007
  %v2030 = vmul.f32 %v1881, %v2009
  %v2031 = vmul.f32 %v1883, %v2011
  %v2032 = vmul.f32 %v1885, %v2013
  %v2033 = vmul.f32 %v1887, %v2015
  %v2034 = vmul.f32 %v1889, %v2017
  %v2035 = vmul.f32 %v1891, %v2019
  %v2044 = vrot.slane %v2029, 7
  %v2045 = vsel %vm343, %v2044, %v2028
  %v2046 = vrot.slane %v2030, 6
  %v2047 = vsel %vm346, %v2046, %v2045
  %v2048 = vrot.slane %v2031, 5
  %v2049 = vsel %vm349, %v2048, %v2047
  %v2050 = vrot.slane %v2032, 4
  %v2051 = vsel %vm352, %v2050, %v2049
  %v2052 = vrot.slane %v2033, 3
  %v2053 = vsel %vm355, %v2052, %v2051
  %v2054 = vrot.slane %v2034, 2
  %v2055 = vsel %vm358, %v2054, %v2053
  %v2056 = vrot.slane %v2035, 1
  %v2057 = vsel %vm361, %v2056, %v2055
  %2058 = vrot.lane.b32.xlu0 %v2057, 32
  %v2059 = vpop.permute.xlu0 %2058
  %2062 = vrot.lane.b32.xlu0 %v1739, 64
  %v2063 = vpop.permute.xlu0 %2062
  %v2065 = vsel %vm44, %v2059, %v2063
  %v2067 = vsel %vm373, %v2065, 0
  %2069 = vmatprep.subr.mxu0 0.0
  %2070 = vmatpush1.msra.mxu0 0.0
  %2071 = vmatprep.subr.mxu0 0.0
  %2072 = vmatpush1.msra.mxu0 0.0
  %2073 = vmatprep.subr.mxu0 0.0
  %2074 = vmatpush1.msra.mxu0 0.0
  %2075 = vmatprep.subr.mxu0 0.0
  %2076 = vmatpush1.msra.mxu0 0.0
  %2077 = vmatprep.subr.mxu0 0.0
  %2078 = vmatpush1.msra.mxu0 0.0
  %2079 = vmatprep.subr.mxu0 0.0
  %2080 = vmatpush1.msra.mxu0 0.0
  %2081 = vmatprep.subr.mxu0 0.0
  %2082 = vmatpush1.msra.mxu0 0.0
  %2083 = vmatprep.subr.mxu0 0.0
  %2084 = vmatpush1.msra.mxu0 0.0
  %2085 = vmatprep.subr.mxu0 0.0
  %2086 = vmatpush1.msra.mxu0 %v34
  %2087 = vmatprep.subr.mxu0 0.0
  %2088 = vmatpush1.msra.mxu0 %v33
  %2089 = vmatprep.subr.mxu0 0.0
  %2090 = vmatpush1.msra.mxu0 %v32
  %2091 = vmatprep.subr.mxu0 0.0
  %2092 = vmatpush1.msra.mxu0 %v31
  %2093 = vmatprep.subr.mxu0 0.0
  %2094 = vmatpush1.msra.mxu0 %v30
  %2095 = vmatprep.subr.mxu0 0.0
  %2096 = vmatpush1.msra.mxu0 %v29
  %2097 = vmatprep.subr.mxu0 0.0
  %2098 = vmatpush1.msra.mxu0 %v28
  %2099 = vmatprep.subr.mxu0 0.0
  %2100 = vmatpush1.msra.mxu0 %v27
  %2101 = vmatprep.subr.mxu0 0.0
  %2102 = vmatpush2.msra.mxu0 0.0
  %2103 = vmatprep.subr.mxu0 0.0
  %2104 = vmatpush2.msra.mxu0 0.0
  %2105 = vmatprep.subr.mxu0 0.0
  %2106 = vmatpush2.msra.mxu0 0.0
  %2107 = vmatprep.subr.mxu0 0.0
  %2108 = vmatpush2.msra.mxu0 0.0
  %2109 = vmatprep.subr.mxu0 0.0
  %2110 = vmatpush2.msra.mxu0 0.0
  %2111 = vmatprep.subr.mxu0 0.0
  %2112 = vmatpush2.msra.mxu0 0.0
  %2113 = vmatprep.subr.mxu0 0.0
  %2114 = vmatpush2.msra.mxu0 0.0
  %2115 = vmatprep.subr.mxu0 0.0
  %2116 = vmatpush2.msra.mxu0 0.0
  %2117 = vmatprep.subr.mxu0 0.0
  %2118 = vmatpush2.msra.mxu0 0.0
  %2119 = vmatprep.subr.mxu0 0.0
  %2120 = vmatpush2.msra.mxu0 0.0
  %2121 = vmatprep.subr.mxu0 0.0
  %2122 = vmatpush2.msra.mxu0 0.0
  %2123 = vmatprep.subr.mxu0 0.0
  %2124 = vmatpush2.msra.mxu0 0.0
  %2125 = vmatprep.subr.mxu0 0.0
  %2126 = vmatpush2.msra.mxu0 0.0
  %2127 = vmatprep.subr.mxu0 0.0
  %2128 = vmatpush2.msra.mxu0 0.0
  %2129 = vmatprep.subr.mxu0 0.0
  %2130 = vmatpush2.msra.mxu0 0.0
  %2131 = vmatprep.subr.mxu0 0.0
  %2132 = vmatpush2.msra.mxu0 0.0
  %2133 = vmatprep.mubr.f32.mxu0 0.0
  %2134 = vmatmul.mubr.f32.gmra.mxu0 %v2067
  %v2135 = vpop.f32.mrf.mxu0
  %v2136 = vadd.f32 %v371, %v2135
  %v2137 = vpop.f32.mrf.mxu0
  %2138 = vdwg.mxu0
  %v2139 = vxor.u32 %v2136, 2147483648
  %v2140 = vmul.f32 %v2139, 1.442695
  %v2141 = vpow.pop %v2140
  %v2142 = vadd.f32 %v2141, 1.0
  %v2143 = vrcp.pop %v2142
  %v2144 = vmul.f32 1.0, %v2143
  %v2145 = vtanh.pop %v2136
  %v2146 = vmul.f32 %v2144, %v1733
  %2148 = vrot.lane.b32.xlu0 %v2145, 64
  %v2149 = vpop.permute.xlu0 %2148
  %v2151 = vmul.f32 %v2144, %v2149
  %2153 = vrot.lane.b32.xlu0 %v2151, 32
  %v2154 = vpop.permute.xlu0 %2153
  %v2156 = vadd.f32 %v2146, %v2154
  %v2157 = vtanh.pop %v2156
  %2159 = vrot.lane.b32.xlu0 %v2157, 64
  %v2160 = vpop.permute.xlu0 %2159
  %v2162 = vmul.f32 %v2144, %v2160
  %v2163 = vld [vmem:[%s0 + $0x5] sm:$0x1]
  %v2164 = vld [vmem:[%s0 + $0xd] sm:$0x1]
  %v2165 = vld [vmem:[%s0 + $0x15] sm:$0x1]
  %v2166 = vld [vmem:[%s0 + $0x1d] sm:$0x1]
  %v2167 = vld [vmem:[%s0 + $0x25] sm:$0x1]
  %v2168 = vld [vmem:[%s0 + $0x2d] sm:$0x1]
  %v2169 = vld [vmem:[%s0 + $0x35] sm:$0x1]
  %v2170 = vld [vmem:[%s0 + $0x3d] sm:$0x1]
  %v2171 = vsel %vm44, %v2059, 0
  %2173 = vmatprep.subr.mxu0 0.0
  %2174 = vmatpush1.msra.mxu0 0.0
  %2175 = vmatprep.subr.mxu0 0.0
  %2176 = vmatpush1.msra.mxu0 0.0
  %2177 = vmatprep.subr.mxu0 0.0
  %2178 = vmatpush1.msra.mxu0 0.0
  %2179 = vmatprep.subr.mxu0 0.0
  %2180 = vmatpush1.msra.mxu0 0.0
  %2181 = vmatprep.subr.mxu0 0.0
  %2182 = vmatpush1.msra.mxu0 0.0
  %2183 = vmatprep.subr.mxu0 0.0
  %2184 = vmatpush1.msra.mxu0 0.0
  %2185 = vmatprep.subr.mxu0 0.0
  %2186 = vmatpush1.msra.mxu0 0.0
  %2187 = vmatprep.subr.mxu0 0.0
  %2188 = vmatpush1.msra.mxu0 0.0
  %2189 = vmatprep.subr.mxu0 0.0
  %2190 = vmatpush1.msra.mxu0 0.0
  %2191 = vmatprep.subr.mxu0 0.0
  %2192 = vmatpush1.msra.mxu0 0.0
  %2193 = vmatprep.subr.mxu0 0.0
  %2194 = vmatpush1.msra.mxu0 0.0
  %2195 = vmatprep.subr.mxu0 0.0
  %2196 = vmatpush1.msra.mxu0 0.0
  %2197 = vmatprep.subr.mxu0 0.0
  %2198 = vmatpush1.msra.mxu0 %v26
  %2199 = vmatprep.subr.mxu0 0.0
  %2200 = vmatpush1.msra.mxu0 %v25
  %2201 = vmatprep.subr.mxu0 0.0
  %2202 = vmatpush1.msra.mxu0 %v24
  %2203 = vmatprep.subr.mxu0 0.0
  %2204 = vmatpush1.msra.mxu0 %v23
  %2205 = vmatprep.subr.mxu0 0.0
  %2206 = vmatpush2.msra.mxu0 0.0
  %2207 = vmatprep.subr.mxu0 0.0
  %2208 = vmatpush2.msra.mxu0 0.0
  %2209 = vmatprep.subr.mxu0 0.0
  %2210 = vmatpush2.msra.mxu0 0.0
  %2211 = vmatprep.subr.mxu0 0.0
  %2212 = vmatpush2.msra.mxu0 0.0
  %2213 = vmatprep.subr.mxu0 0.0
  %2214 = vmatpush2.msra.mxu0 0.0
  %2215 = vmatprep.subr.mxu0 0.0
  %2216 = vmatpush2.msra.mxu0 0.0
  %2217 = vmatprep.subr.mxu0 0.0
  %2218 = vmatpush2.msra.mxu0 0.0
  %2219 = vmatprep.subr.mxu0 0.0
  %2220 = vmatpush2.msra.mxu0 0.0
  %2221 = vmatprep.subr.mxu0 0.0
  %2222 = vmatpush2.msra.mxu0 0.0
  %2223 = vmatprep.subr.mxu0 0.0
  %2224 = vmatpush2.msra.mxu0 0.0
  %2225 = vmatprep.subr.mxu0 0.0
  %2226 = vmatpush2.msra.mxu0 0.0
  %2227 = vmatprep.subr.mxu0 0.0
  %2228 = vmatpush2.msra.mxu0 0.0
  %2229 = vmatprep.subr.mxu0 0.0
  %2230 = vmatpush2.msra.mxu0 0.0
  %2231 = vmatprep.subr.mxu0 0.0
  %2232 = vmatpush2.msra.mxu0 0.0
  %2233 = vmatprep.subr.mxu0 0.0
  %2234 = vmatpush2.msra.mxu0 0.0
  %2235 = vmatprep.subr.mxu0 0.0
  %2236 = vmatpush2.msra.mxu0 0.0
  %2237 = vmatprep.mubr.f32.mxu0 0.0
  %2238 = vmatmul.mubr.f32.gmra.mxu0 %v2171
  %v2239 = vpop.f32.mrf.mxu0
  %v2240 = vadd.f32 0.0, %v2239
  %v2241 = vpop.f32.mrf.mxu0
  %2242 = vdwg.mxu0
  %v2244 = vrot.slane %v2240, 1
  %v2245 = vrot.slane %v2240, 2
  %v2246 = vrot.slane %v2240, 3
  %v2247 = vrot.slane %v2240, 4
  %v2248 = vrot.slane %v2240, 5
  %v2249 = vrot.slane %v2240, 6
  %v2250 = vrot.slane %v2240, 7
  %v2259 = vadd.f32 %v2163, %v2240
  %v2260 = vadd.f32 %v2164, %v2244
  %v2261 = vadd.f32 %v2165, %v2245
  %v2262 = vadd.f32 %v2166, %v2246
  %v2263 = vadd.f32 %v2167, %v2247
  %v2264 = vadd.f32 %v2168, %v2248
  %v2265 = vadd.f32 %v2169, %v2249
  %v2266 = vadd.f32 %v2170, %v2250
  %v2267 = vxor.u32 %v2259, 2147483648
  %v2268 = vxor.u32 %v2260, 2147483648
  %v2269 = vxor.u32 %v2261, 2147483648
  %v2270 = vxor.u32 %v2262, 2147483648
  %v2271 = vxor.u32 %v2263, 2147483648
  %v2272 = vxor.u32 %v2264, 2147483648
  %v2273 = vxor.u32 %v2265, 2147483648
  %v2274 = vxor.u32 %v2266, 2147483648
  %v2275 = vmul.f32 %v2267, 1.442695
  %v2276 = vpow.pop %v2275
  %v2277 = vmul.f32 %v2268, 1.442695
  %v2278 = vpow.pop %v2277
  %v2279 = vmul.f32 %v2269, 1.442695
  %v2280 = vpow.pop %v2279
  %v2281 = vmul.f32 %v2270, 1.442695
  %v2282 = vpow.pop %v2281
  %v2283 = vmul.f32 %v2271, 1.442695
  %v2284 = vpow.pop %v2283
  %v2285 = vmul.f32 %v2272, 1.442695
  %v2286 = vpow.pop %v2285
  %v2287 = vmul.f32 %v2273, 1.442695
  %v2288 = vpow.pop %v2287
  %v2289 = vmul.f32 %v2274, 1.442695
  %v2290 = vpow.pop %v2289
  %v2291 = vadd.f32 %v2276, 1.0
  %v2292 = vadd.f32 %v2278, 1.0
  %v2293 = vadd.f32 %v2280, 1.0
  %v2294 = vadd.f32 %v2282, 1.0
  %v2295 = vadd.f32 %v2284, 1.0
  %v2296 = vadd.f32 %v2286, 1.0
  %v2297 = vadd.f32 %v2288, 1.0
  %v2298 = vadd.f32 %v2290, 1.0
  %v2299 = vrcp.pop %v2291
  %v2300 = vmul.f32 1.0, %v2299
  %v2301 = vrcp.pop %v2292
  %v2302 = vmul.f32 1.0, %v2301
  %v2303 = vrcp.pop %v2293
  %v2304 = vmul.f32 1.0, %v2303
  %v2305 = vrcp.pop %v2294
  %v2306 = vmul.f32 1.0, %v2305
  %v2307 = vrcp.pop %v2295
  %v2308 = vmul.f32 1.0, %v2307
  %v2309 = vrcp.pop %v2296
  %v2310 = vmul.f32 1.0, %v2309
  %v2311 = vrcp.pop %v2297
  %v2312 = vmul.f32 1.0, %v2311
  %v2313 = vrcp.pop %v2298
  %v2314 = vmul.f32 1.0, %v2313
  %v2315 = vtanh.pop %v2259
  %v2316 = vtanh.pop %v2260
  %v2317 = vtanh.pop %v2261
  %v2318 = vtanh.pop %v2262
  %v2319 = vtanh.pop %v2263
  %v2320 = vtanh.pop %v2264
  %v2321 = vtanh.pop %v2265
  %v2322 = vtanh.pop %v2266
  %v2323 = vmul.f32 %v2300, %v1980
  %v2324 = vmul.f32 %v2302, %v1981
  %v2325 = vmul.f32 %v2304, %v1982
  %v2326 = vmul.f32 %v2306, %v1983
  %v2327 = vmul.f32 %v2308, %v1984
  %v2328 = vmul.f32 %v2310, %v1985
  %v2329 = vmul.f32 %v2312, %v1986
  %v2330 = vmul.f32 %v2314, %v1987
  %2339 = vrot.lane.b32.xlu0 %v2315, 64
  %v2340 = vpop.permute.xlu0 %2339
  %2341 = vrot.lane.b32.xlu0 %v2316, 64
  %v2342 = vpop.permute.xlu0 %2341
  %2343 = vrot.lane.b32.xlu0 %v2317, 64
  %v2344 = vpop.permute.xlu0 %2343
  %2345 = vrot.lane.b32.xlu0 %v2318, 64
  %v2346 = vpop.permute.xlu0 %2345
  %2347 = vrot.lane.b32.xlu0 %v2319, 64
  %v2348 = vpop.permute.xlu0 %2347
  %2349 = vrot.lane.b32.xlu0 %v2320, 64
  %v2350 = vpop.permute.xlu0 %2349
  %2351 = vrot.lane.b32.xlu0 %v2321, 64
  %v2352 = vpop.permute.xlu0 %2351
  %2353 = vrot.lane.b32.xlu0 %v2322, 64
  %v2354 = vpop.permute.xlu0 %2353
  %v2363 = vmul.f32 %v2300, %v2340
  %v2364 = vmul.f32 %v2302, %v2342
  %v2365 = vmul.f32 %v2304, %v2344
  %v2366 = vmul.f32 %v2306, %v2346
  %v2367 = vmul.f32 %v2308, %v2348
  %v2368 = vmul.f32 %v2310, %v2350
  %v2369 = vmul.f32 %v2312, %v2352
  %v2370 = vmul.f32 %v2314, %v2354
  %2379 = vrot.lane.b32.xlu0 %v2363, 32
  %v2380 = vpop.permute.xlu0 %2379
  %2381 = vrot.lane.b32.xlu0 %v2364, 32
  %v2382 = vpop.permute.xlu0 %2381
  %2383 = vrot.lane.b32.xlu0 %v2365, 32
  %v2384 = vpop.permute.xlu0 %2383
  %2385 = vrot.lane.b32.xlu0 %v2366, 32
  %v2386 = vpop.permute.xlu0 %2385
  %2387 = vrot.lane.b32.xlu0 %v2367, 32
  %v2388 = vpop.permute.xlu0 %2387
  %2389 = vrot.lane.b32.xlu0 %v2368, 32
  %v2390 = vpop.permute.xlu0 %2389
  %2391 = vrot.lane.b32.xlu0 %v2369, 32
  %v2392 = vpop.permute.xlu0 %2391
  %2393 = vrot.lane.b32.xlu0 %v2370, 32
  %v2394 = vpop.permute.xlu0 %2393
  %v2403 = vadd.f32 %v2323, %v2380
  %v2404 = vadd.f32 %v2324, %v2382
  %v2405 = vadd.f32 %v2325, %v2384
  %v2406 = vadd.f32 %v2326, %v2386
  %v2407 = vadd.f32 %v2327, %v2388
  %v2408 = vadd.f32 %v2328, %v2390
  %v2409 = vadd.f32 %v2329, %v2392
  %v2410 = vadd.f32 %v2330, %v2394
  %v2411 = vtanh.pop %v2403
  %v2412 = vtanh.pop %v2404
  %v2413 = vtanh.pop %v2405
  %v2414 = vtanh.pop %v2406
  %v2415 = vtanh.pop %v2407
  %v2416 = vtanh.pop %v2408
  %v2417 = vtanh.pop %v2409
  %v2418 = vtanh.pop %v2410
  %2427 = vrot.lane.b32.xlu0 %v2411, 64
  %v2428 = vpop.permute.xlu0 %2427
  %2429 = vrot.lane.b32.xlu0 %v2412, 64
  %v2430 = vpop.permute.xlu0 %2429
  %2431 = vrot.lane.b32.xlu0 %v2413, 64
  %v2432 = vpop.permute.xlu0 %2431
  %2433 = vrot.lane.b32.xlu0 %v2414, 64
  %v2434 = vpop.permute.xlu0 %2433
  %2435 = vrot.lane.b32.xlu0 %v2415, 64
  %v2436 = vpop.permute.xlu0 %2435
  %2437 = vrot.lane.b32.xlu0 %v2416, 64
  %v2438 = vpop.permute.xlu0 %2437
  %2439 = vrot.lane.b32.xlu0 %v2417, 64
  %v2440 = vpop.permute.xlu0 %2439
  %2441 = vrot.lane.b32.xlu0 %v2418, 64
  %v2442 = vpop.permute.xlu0 %2441
  %v2451 = vmul.f32 %v2300, %v2428
  %v2452 = vmul.f32 %v2302, %v2430
  %v2453 = vmul.f32 %v2304, %v2432
  %v2454 = vmul.f32 %v2306, %v2434
  %v2455 = vmul.f32 %v2308, %v2436
  %v2456 = vmul.f32 %v2310, %v2438
  %v2457 = vmul.f32 %v2312, %v2440
  %v2458 = vmul.f32 %v2314, %v2442
  %v2467 = vrot.slane %v2452, 7
  %v2468 = vsel %vm343, %v2467, %v2451
  %v2469 = vrot.slane %v2453, 6
  %v2470 = vsel %vm346, %v2469, %v2468
  %v2471 = vrot.slane %v2454, 5
  %v2472 = vsel %vm349, %v2471, %v2470
  %v2473 = vrot.slane %v2455, 4
  %v2474 = vsel %vm352, %v2473, %v2472
  %v2475 = vrot.slane %v2456, 3
  %v2476 = vsel %vm355, %v2475, %v2474
  %v2477 = vrot.slane %v2457, 2
  %v2478 = vsel %vm358, %v2477, %v2476
  %v2479 = vrot.slane %v2458, 1
  %v2480 = vsel %vm361, %v2479, %v2478
  %2481 = vrot.lane.b32.xlu0 %v2480, 32
  %v2482 = vpop.permute.xlu0 %2481
  %2485 = vrot.lane.b32.xlu0 %v2162, 64
  %v2486 = vpop.permute.xlu0 %2485
  %v2488 = vsel %vm44, %v2482, %v2486
  %v2490 = vsel %vm373, %v2488, 0
  %2492 = vmatprep.subr.mxu0 0.0
  %2493 = vmatpush1.msra.mxu0 0.0
  %2494 = vmatprep.subr.mxu0 0.0
  %2495 = vmatpush1.msra.mxu0 0.0
  %2496 = vmatprep.subr.mxu0 0.0
  %2497 = vmatpush1.msra.mxu0 0.0
  %2498 = vmatprep.subr.mxu0 0.0
  %2499 = vmatpush1.msra.mxu0 0.0
  %2500 = vmatprep.subr.mxu0 0.0
  %2501 = vmatpush1.msra.mxu0 0.0
  %2502 = vmatprep.subr.mxu0 0.0
  %2503 = vmatpush1.msra.mxu0 0.0
  %2504 = vmatprep.subr.mxu0 0.0
  %2505 = vmatpush1.msra.mxu0 0.0
  %2506 = vmatprep.subr.mxu0 0.0
  %2507 = vmatpush1.msra.mxu0 0.0
  %2508 = vmatprep.subr.mxu0 0.0
  %2509 = vmatpush1.msra.mxu0 %v34
  %2510 = vmatprep.subr.mxu0 0.0
  %2511 = vmatpush1.msra.mxu0 %v33
  %2512 = vmatprep.subr.mxu0 0.0
  %2513 = vmatpush1.msra.mxu0 %v32
  %2514 = vmatprep.subr.mxu0 0.0
  %2515 = vmatpush1.msra.mxu0 %v31
  %2516 = vmatprep.subr.mxu0 0.0
  %2517 = vmatpush1.msra.mxu0 %v30
  %2518 = vmatprep.subr.mxu0 0.0
  %2519 = vmatpush1.msra.mxu0 %v29
  %2520 = vmatprep.subr.mxu0 0.0
  %2521 = vmatpush1.msra.mxu0 %v28
  %2522 = vmatprep.subr.mxu0 0.0
  %2523 = vmatpush1.msra.mxu0 %v27
  %2524 = vmatprep.subr.mxu0 0.0
  %2525 = vmatpush2.msra.mxu0 0.0
  %2526 = vmatprep.subr.mxu0 0.0
  %2527 = vmatpush2.msra.mxu0 0.0
  %2528 = vmatprep.subr.mxu0 0.0
  %2529 = vmatpush2.msra.mxu0 0.0
  %2530 = vmatprep.subr.mxu0 0.0
  %2531 = vmatpush2.msra.mxu0 0.0
  %2532 = vmatprep.subr.mxu0 0.0
  %2533 = vmatpush2.msra.mxu0 0.0
  %2534 = vmatprep.subr.mxu0 0.0
  %2535 = vmatpush2.msra.mxu0 0.0
  %2536 = vmatprep.subr.mxu0 0.0
  %2537 = vmatpush2.msra.mxu0 0.0
  %2538 = vmatprep.subr.mxu0 0.0
  %2539 = vmatpush2.msra.mxu0 0.0
  %2540 = vmatprep.subr.mxu0 0.0
  %2541 = vmatpush2.msra.mxu0 0.0
  %2542 = vmatprep.subr.mxu0 0.0
  %2543 = vmatpush2.msra.mxu0 0.0
  %2544 = vmatprep.subr.mxu0 0.0
  %2545 = vmatpush2.msra.mxu0 0.0
  %2546 = vmatprep.subr.mxu0 0.0
  %2547 = vmatpush2.msra.mxu0 0.0
  %2548 = vmatprep.subr.mxu0 0.0
  %2549 = vmatpush2.msra.mxu0 0.0
  %2550 = vmatprep.subr.mxu0 0.0
  %2551 = vmatpush2.msra.mxu0 0.0
  %2552 = vmatprep.subr.mxu0 0.0
  %2553 = vmatpush2.msra.mxu0 0.0
  %2554 = vmatprep.subr.mxu0 0.0
  %2555 = vmatpush2.msra.mxu0 0.0
  %2556 = vmatprep.mubr.f32.mxu0 0.0
  %2557 = vmatmul.mubr.f32.gmra.mxu0 %v2490
  %v2558 = vpop.f32.mrf.mxu0
  %v2559 = vadd.f32 %v371, %v2558
  %v2560 = vpop.f32.mrf.mxu0
  %2561 = vdwg.mxu0
  %v2562 = vxor.u32 %v2559, 2147483648
  %v2563 = vmul.f32 %v2562, 1.442695
  %v2564 = vpow.pop %v2563
  %v2565 = vadd.f32 %v2564, 1.0
  %v2566 = vrcp.pop %v2565
  %v2567 = vmul.f32 1.0, %v2566
  %v2568 = vtanh.pop %v2559
  %v2569 = vmul.f32 %v2567, %v2156
  %2571 = vrot.lane.b32.xlu0 %v2568, 64
  %v2572 = vpop.permute.xlu0 %2571
  %v2574 = vmul.f32 %v2567, %v2572
  %2576 = vrot.lane.b32.xlu0 %v2574, 32
  %v2577 = vpop.permute.xlu0 %2576
  %v2579 = vadd.f32 %v2569, %v2577
  %v2580 = vtanh.pop %v2579
  %2582 = vrot.lane.b32.xlu0 %v2580, 64
  %v2583 = vpop.permute.xlu0 %2582
  %v2585 = vmul.f32 %v2567, %v2583
  %v2586 = vld [vmem:[%s0 + $0x6] sm:$0x1]
  %v2587 = vld [vmem:[%s0 + $0xe] sm:$0x1]
  %v2588 = vld [vmem:[%s0 + $0x16] sm:$0x1]
  %v2589 = vld [vmem:[%s0 + $0x1e] sm:$0x1]
  %v2590 = vld [vmem:[%s0 + $0x26] sm:$0x1]
  %v2591 = vld [vmem:[%s0 + $0x2e] sm:$0x1]
  %v2592 = vld [vmem:[%s0 + $0x36] sm:$0x1]
  %v2593 = vld [vmem:[%s0 + $0x3e] sm:$0x1]
  %v2594 = vsel %vm44, %v2482, 0
  %2596 = vmatprep.subr.mxu0 0.0
  %2597 = vmatpush1.msra.mxu0 0.0
  %2598 = vmatprep.subr.mxu0 0.0
  %2599 = vmatpush1.msra.mxu0 0.0
  %2600 = vmatprep.subr.mxu0 0.0
  %2601 = vmatpush1.msra.mxu0 0.0
  %2602 = vmatprep.subr.mxu0 0.0
  %2603 = vmatpush1.msra.mxu0 0.0
  %2604 = vmatprep.subr.mxu0 0.0
  %2605 = vmatpush1.msra.mxu0 0.0
  %2606 = vmatprep.subr.mxu0 0.0
  %2607 = vmatpush1.msra.mxu0 0.0
  %2608 = vmatprep.subr.mxu0 0.0
  %2609 = vmatpush1.msra.mxu0 0.0
  %2610 = vmatprep.subr.mxu0 0.0
  %2611 = vmatpush1.msra.mxu0 0.0
  %2612 = vmatprep.subr.mxu0 0.0
  %2613 = vmatpush1.msra.mxu0 0.0
  %2614 = vmatprep.subr.mxu0 0.0
  %2615 = vmatpush1.msra.mxu0 0.0
  %2616 = vmatprep.subr.mxu0 0.0
  %2617 = vmatpush1.msra.mxu0 0.0
  %2618 = vmatprep.subr.mxu0 0.0
  %2619 = vmatpush1.msra.mxu0 0.0
  %2620 = vmatprep.subr.mxu0 0.0
  %2621 = vmatpush1.msra.mxu0 %v26
  %2622 = vmatprep.subr.mxu0 0.0
  %2623 = vmatpush1.msra.mxu0 %v25
  %2624 = vmatprep.subr.mxu0 0.0
  %2625 = vmatpush1.msra.mxu0 %v24
  %2626 = vmatprep.subr.mxu0 0.0
  %2627 = vmatpush1.msra.mxu0 %v23
  %2628 = vmatprep.subr.mxu0 0.0
  %2629 = vmatpush2.msra.mxu0 0.0
  %2630 = vmatprep.subr.mxu0 0.0
  %2631 = vmatpush2.msra.mxu0 0.0
  %2632 = vmatprep.subr.mxu0 0.0
  %2633 = vmatpush2.msra.mxu0 0.0
  %2634 = vmatprep.subr.mxu0 0.0
  %2635 = vmatpush2.msra.mxu0 0.0
  %2636 = vmatprep.subr.mxu0 0.0
  %2637 = vmatpush2.msra.mxu0 0.0
  %2638 = vmatprep.subr.mxu0 0.0
  %2639 = vmatpush2.msra.mxu0 0.0
  %2640 = vmatprep.subr.mxu0 0.0
  %2641 = vmatpush2.msra.mxu0 0.0
  %2642 = vmatprep.subr.mxu0 0.0
  %2643 = vmatpush2.msra.mxu0 0.0
  %2644 = vmatprep.subr.mxu0 0.0
  %2645 = vmatpush2.msra.mxu0 0.0
  %2646 = vmatprep.subr.mxu0 0.0
  %2647 = vmatpush2.msra.mxu0 0.0
  %2648 = vmatprep.subr.mxu0 0.0
  %2649 = vmatpush2.msra.mxu0 0.0
  %2650 = vmatprep.subr.mxu0 0.0
  %2651 = vmatpush2.msra.mxu0 0.0
  %2652 = vmatprep.subr.mxu0 0.0
  %2653 = vmatpush2.msra.mxu0 0.0
  %2654 = vmatprep.subr.mxu0 0.0
  %2655 = vmatpush2.msra.mxu0 0.0
  %2656 = vmatprep.subr.mxu0 0.0
  %2657 = vmatpush2.msra.mxu0 0.0
  %2658 = vmatprep.subr.mxu0 0.0
  %2659 = vmatpush2.msra.mxu0 0.0
  %2660 = vmatprep.mubr.f32.mxu0 0.0
  %2661 = vmatmul.mubr.f32.gmra.mxu0 %v2594
  %v2662 = vpop.f32.mrf.mxu0
  %v2663 = vadd.f32 0.0, %v2662
  %v2664 = vpop.f32.mrf.mxu0
  %2665 = vdwg.mxu0
  %v2667 = vrot.slane %v2663, 1
  %v2668 = vrot.slane %v2663, 2
  %v2669 = vrot.slane %v2663, 3
  %v2670 = vrot.slane %v2663, 4
  %v2671 = vrot.slane %v2663, 5
  %v2672 = vrot.slane %v2663, 6
  %v2673 = vrot.slane %v2663, 7
  %v2682 = vadd.f32 %v2586, %v2663
  %v2683 = vadd.f32 %v2587, %v2667
  %v2684 = vadd.f32 %v2588, %v2668
  %v2685 = vadd.f32 %v2589, %v2669
  %v2686 = vadd.f32 %v2590, %v2670
  %v2687 = vadd.f32 %v2591, %v2671
  %v2688 = vadd.f32 %v2592, %v2672
  %v2689 = vadd.f32 %v2593, %v2673
  %v2690 = vxor.u32 %v2682, 2147483648
  %v2691 = vxor.u32 %v2683, 2147483648
  %v2692 = vxor.u32 %v2684, 2147483648
  %v2693 = vxor.u32 %v2685, 2147483648
  %v2694 = vxor.u32 %v2686, 2147483648
  %v2695 = vxor.u32 %v2687, 2147483648
  %v2696 = vxor.u32 %v2688, 2147483648
  %v2697 = vxor.u32 %v2689, 2147483648
  %v2698 = vmul.f32 %v2690, 1.442695
  %v2699 = vpow.pop %v2698
  %v2700 = vmul.f32 %v2691, 1.442695
  %v2701 = vpow.pop %v2700
  %v2702 = vmul.f32 %v2692, 1.442695
  %v2703 = vpow.pop %v2702
  %v2704 = vmul.f32 %v2693, 1.442695
  %v2705 = vpow.pop %v2704
  %v2706 = vmul.f32 %v2694, 1.442695
  %v2707 = vpow.pop %v2706
  %v2708 = vmul.f32 %v2695, 1.442695
  %v2709 = vpow.pop %v2708
  %v2710 = vmul.f32 %v2696, 1.442695
  %v2711 = vpow.pop %v2710
  %v2712 = vmul.f32 %v2697, 1.442695
  %v2713 = vpow.pop %v2712
  %v2714 = vadd.f32 %v2699, 1.0
  %v2715 = vadd.f32 %v2701, 1.0
  %v2716 = vadd.f32 %v2703, 1.0
  %v2717 = vadd.f32 %v2705, 1.0
  %v2718 = vadd.f32 %v2707, 1.0
  %v2719 = vadd.f32 %v2709, 1.0
  %v2720 = vadd.f32 %v2711, 1.0
  %v2721 = vadd.f32 %v2713, 1.0
  %v2722 = vrcp.pop %v2714
  %v2723 = vmul.f32 1.0, %v2722
  %v2724 = vrcp.pop %v2715
  %v2725 = vmul.f32 1.0, %v2724
  %v2726 = vrcp.pop %v2716
  %v2727 = vmul.f32 1.0, %v2726
  %v2728 = vrcp.pop %v2717
  %v2729 = vmul.f32 1.0, %v2728
  %v2730 = vrcp.pop %v2718
  %v2731 = vmul.f32 1.0, %v2730
  %v2732 = vrcp.pop %v2719
  %v2733 = vmul.f32 1.0, %v2732
  %v2734 = vrcp.pop %v2720
  %v2735 = vmul.f32 1.0, %v2734
  %v2736 = vrcp.pop %v2721
  %v2737 = vmul.f32 1.0, %v2736
  %v2738 = vtanh.pop %v2682
  %v2739 = vtanh.pop %v2683
  %v2740 = vtanh.pop %v2684
  %v2741 = vtanh.pop %v2685
  %v2742 = vtanh.pop %v2686
  %v2743 = vtanh.pop %v2687
  %v2744 = vtanh.pop %v2688
  %v2745 = vtanh.pop %v2689
  %v2746 = vmul.f32 %v2723, %v2403
  %v2747 = vmul.f32 %v2725, %v2404
  %v2748 = vmul.f32 %v2727, %v2405
  %v2749 = vmul.f32 %v2729, %v2406
  %v2750 = vmul.f32 %v2731, %v2407
  %v2751 = vmul.f32 %v2733, %v2408
  %v2752 = vmul.f32 %v2735, %v2409
  %v2753 = vmul.f32 %v2737, %v2410
  %2762 = vrot.lane.b32.xlu0 %v2738, 64
  %v2763 = vpop.permute.xlu0 %2762
  %2764 = vrot.lane.b32.xlu0 %v2739, 64
  %v2765 = vpop.permute.xlu0 %2764
  %2766 = vrot.lane.b32.xlu0 %v2740, 64
  %v2767 = vpop.permute.xlu0 %2766
  %2768 = vrot.lane.b32.xlu0 %v2741, 64
  %v2769 = vpop.permute.xlu0 %2768
  %2770 = vrot.lane.b32.xlu0 %v2742, 64
  %v2771 = vpop.permute.xlu0 %2770
  %2772 = vrot.lane.b32.xlu0 %v2743, 64
  %v2773 = vpop.permute.xlu0 %2772
  %2774 = vrot.lane.b32.xlu0 %v2744, 64
  %v2775 = vpop.permute.xlu0 %2774
  %2776 = vrot.lane.b32.xlu0 %v2745, 64
  %v2777 = vpop.permute.xlu0 %2776
  %v2786 = vmul.f32 %v2723, %v2763
  %v2787 = vmul.f32 %v2725, %v2765
  %v2788 = vmul.f32 %v2727, %v2767
  %v2789 = vmul.f32 %v2729, %v2769
  %v2790 = vmul.f32 %v2731, %v2771
  %v2791 = vmul.f32 %v2733, %v2773
  %v2792 = vmul.f32 %v2735, %v2775
  %v2793 = vmul.f32 %v2737, %v2777
  %2802 = vrot.lane.b32.xlu0 %v2786, 32
  %v2803 = vpop.permute.xlu0 %2802
  %2804 = vrot.lane.b32.xlu0 %v2787, 32
  %v2805 = vpop.permute.xlu0 %2804
  %2806 = vrot.lane.b32.xlu0 %v2788, 32
  %v2807 = vpop.permute.xlu0 %2806
  %2808 = vrot.lane.b32.xlu0 %v2789, 32
  %v2809 = vpop.permute.xlu0 %2808
  %2810 = vrot.lane.b32.xlu0 %v2790, 32
  %v2811 = vpop.permute.xlu0 %2810
  %2812 = vrot.lane.b32.xlu0 %v2791, 32
  %v2813 = vpop.permute.xlu0 %2812
  %2814 = vrot.lane.b32.xlu0 %v2792, 32
  %v2815 = vpop.permute.xlu0 %2814
  %2816 = vrot.lane.b32.xlu0 %v2793, 32
  %v2817 = vpop.permute.xlu0 %2816
  %v2826 = vadd.f32 %v2746, %v2803
  %v2827 = vadd.f32 %v2747, %v2805
  %v2828 = vadd.f32 %v2748, %v2807
  %v2829 = vadd.f32 %v2749, %v2809
  %v2830 = vadd.f32 %v2750, %v2811
  %v2831 = vadd.f32 %v2751, %v2813
  %v2832 = vadd.f32 %v2752, %v2815
  %v2833 = vadd.f32 %v2753, %v2817
  %v2834 = vtanh.pop %v2826
  %v2835 = vtanh.pop %v2827
  %v2836 = vtanh.pop %v2828
  %v2837 = vtanh.pop %v2829
  %v2838 = vtanh.pop %v2830
  %v2839 = vtanh.pop %v2831
  %v2840 = vtanh.pop %v2832
  %v2841 = vtanh.pop %v2833
  %2850 = vrot.lane.b32.xlu0 %v2834, 64
  %v2851 = vpop.permute.xlu0 %2850
  %2852 = vrot.lane.b32.xlu0 %v2835, 64
  %v2853 = vpop.permute.xlu0 %2852
  %2854 = vrot.lane.b32.xlu0 %v2836, 64
  %v2855 = vpop.permute.xlu0 %2854
  %2856 = vrot.lane.b32.xlu0 %v2837, 64
  %v2857 = vpop.permute.xlu0 %2856
  %2858 = vrot.lane.b32.xlu0 %v2838, 64
  %v2859 = vpop.permute.xlu0 %2858
  %2860 = vrot.lane.b32.xlu0 %v2839, 64
  %v2861 = vpop.permute.xlu0 %2860
  %2862 = vrot.lane.b32.xlu0 %v2840, 64
  %v2863 = vpop.permute.xlu0 %2862
  %2864 = vrot.lane.b32.xlu0 %v2841, 64
  %v2865 = vpop.permute.xlu0 %2864
  %v2874 = vmul.f32 %v2723, %v2851
  %v2875 = vmul.f32 %v2725, %v2853
  %v2876 = vmul.f32 %v2727, %v2855
  %v2877 = vmul.f32 %v2729, %v2857
  %v2878 = vmul.f32 %v2731, %v2859
  %v2879 = vmul.f32 %v2733, %v2861
  %v2880 = vmul.f32 %v2735, %v2863
  %v2881 = vmul.f32 %v2737, %v2865
  %v2890 = vrot.slane %v2875, 7
  %v2891 = vsel %vm343, %v2890, %v2874
  %v2892 = vrot.slane %v2876, 6
  %v2893 = vsel %vm346, %v2892, %v2891
  %v2894 = vrot.slane %v2877, 5
  %v2895 = vsel %vm349, %v2894, %v2893
  %v2896 = vrot.slane %v2878, 4
  %v2897 = vsel %vm352, %v2896, %v2895
  %v2898 = vrot.slane %v2879, 3
  %v2899 = vsel %vm355, %v2898, %v2897
  %v2900 = vrot.slane %v2880, 2
  %v2901 = vsel %vm358, %v2900, %v2899
  %v2902 = vrot.slane %v2881, 1
  %v2903 = vsel %vm361, %v2902, %v2901
  %2904 = vrot.lane.b32.xlu0 %v2903, 32
  %v2905 = vpop.permute.xlu0 %2904
  %2908 = vrot.lane.b32.xlu0 %v2585, 64
  %v2909 = vpop.permute.xlu0 %2908
  %v2911 = vsel %vm44, %v2905, %v2909
  %v2913 = vsel %vm373, %v2911, 0
  %2915 = vmatprep.subr.mxu0 0.0
  %2916 = vmatpush1.msra.mxu0 0.0
  %2917 = vmatprep.subr.mxu0 0.0
  %2918 = vmatpush1.msra.mxu0 0.0
  %2919 = vmatprep.subr.mxu0 0.0
  %2920 = vmatpush1.msra.mxu0 0.0
  %2921 = vmatprep.subr.mxu0 0.0
  %2922 = vmatpush1.msra.mxu0 0.0
  %2923 = vmatprep.subr.mxu0 0.0
  %2924 = vmatpush1.msra.mxu0 0.0
  %2925 = vmatprep.subr.mxu0 0.0
  %2926 = vmatpush1.msra.mxu0 0.0
  %2927 = vmatprep.subr.mxu0 0.0
  %2928 = vmatpush1.msra.mxu0 0.0
  %2929 = vmatprep.subr.mxu0 0.0
  %2930 = vmatpush1.msra.mxu0 0.0
  %2931 = vmatprep.subr.mxu0 0.0
  %2932 = vmatpush1.msra.mxu0 %v34
  %2933 = vmatprep.subr.mxu0 0.0
  %2934 = vmatpush1.msra.mxu0 %v33
  %2935 = vmatprep.subr.mxu0 0.0
  %2936 = vmatpush1.msra.mxu0 %v32
  %2937 = vmatprep.subr.mxu0 0.0
  %2938 = vmatpush1.msra.mxu0 %v31
  %2939 = vmatprep.subr.mxu0 0.0
  %2940 = vmatpush1.msra.mxu0 %v30
  %2941 = vmatprep.subr.mxu0 0.0
  %2942 = vmatpush1.msra.mxu0 %v29
  %2943 = vmatprep.subr.mxu0 0.0
  %2944 = vmatpush1.msra.mxu0 %v28
  %2945 = vmatprep.subr.mxu0 0.0
  %2946 = vmatpush1.msra.mxu0 %v27
  %2947 = vmatprep.subr.mxu0 0.0
  %2948 = vmatpush2.msra.mxu0 0.0
  %2949 = vmatprep.subr.mxu0 0.0
  %2950 = vmatpush2.msra.mxu0 0.0
  %2951 = vmatprep.subr.mxu0 0.0
  %2952 = vmatpush2.msra.mxu0 0.0
  %2953 = vmatprep.subr.mxu0 0.0
  %2954 = vmatpush2.msra.mxu0 0.0
  %2955 = vmatprep.subr.mxu0 0.0
  %2956 = vmatpush2.msra.mxu0 0.0
  %2957 = vmatprep.subr.mxu0 0.0
  %2958 = vmatpush2.msra.mxu0 0.0
  %2959 = vmatprep.subr.mxu0 0.0
  %2960 = vmatpush2.msra.mxu0 0.0
  %2961 = vmatprep.subr.mxu0 0.0
  %2962 = vmatpush2.msra.mxu0 0.0
  %2963 = vmatprep.subr.mxu0 0.0
  %2964 = vmatpush2.msra.mxu0 0.0
  %2965 = vmatprep.subr.mxu0 0.0
  %2966 = vmatpush2.msra.mxu0 0.0
  %2967 = vmatprep.subr.mxu0 0.0
  %2968 = vmatpush2.msra.mxu0 0.0
  %2969 = vmatprep.subr.mxu0 0.0
  %2970 = vmatpush2.msra.mxu0 0.0
  %2971 = vmatprep.subr.mxu0 0.0
  %2972 = vmatpush2.msra.mxu0 0.0
  %2973 = vmatprep.subr.mxu0 0.0
  %2974 = vmatpush2.msra.mxu0 0.0
  %2975 = vmatprep.subr.mxu0 0.0
  %2976 = vmatpush2.msra.mxu0 0.0
  %2977 = vmatprep.subr.mxu0 0.0
  %2978 = vmatpush2.msra.mxu0 0.0
  %2979 = vmatprep.mubr.f32.mxu0 0.0
  %2980 = vmatmul.mubr.f32.gmra.mxu0 %v2913
  %v2981 = vpop.f32.mrf.mxu0
  %v2982 = vadd.f32 %v371, %v2981
  %v2983 = vpop.f32.mrf.mxu0
  %2984 = vdwg.mxu0
  %v2985 = vxor.u32 %v2982, 2147483648
  %v2986 = vmul.f32 %v2985, 1.442695
  %v2987 = vpow.pop %v2986
  %v2988 = vadd.f32 %v2987, 1.0
  %v2989 = vrcp.pop %v2988
  %v2990 = vmul.f32 1.0, %v2989
  %v2991 = vtanh.pop %v2982
  %v2992 = vmul.f32 %v2990, %v2579
  %2994 = vrot.lane.b32.xlu0 %v2991, 64
  %v2995 = vpop.permute.xlu0 %2994
  %v2997 = vmul.f32 %v2990, %v2995
  %2999 = vrot.lane.b32.xlu0 %v2997, 32
  %v3000 = vpop.permute.xlu0 %2999
  %v3002 = vadd.f32 %v2992, %v3000
  %v3003 = vtanh.pop %v3002
  %3005 = vrot.lane.b32.xlu0 %v3003, 64
  %v3006 = vpop.permute.xlu0 %3005
  %v3008 = vmul.f32 %v2990, %v3006
  %v3009 = vld [vmem:[%s0 + $0x7] sm:$0x1]
  %v3010 = vld [vmem:[%s0 + $0xf] sm:$0x1]
  %v3011 = vld [vmem:[%s0 + $0x17] sm:$0x1]
  %v3012 = vld [vmem:[%s0 + $0x1f] sm:$0x1]
  %v3013 = vld [vmem:[%s0 + $0x27] sm:$0x1]
  %v3014 = vld [vmem:[%s0 + $0x2f] sm:$0x1]
  %v3015 = vld [vmem:[%s0 + $0x37] sm:$0x1]
  %v3016 = vld [vmem:[%s0 + $0x3f] sm:$0x1]
  %v3017 = vsel %vm44, %v2905, 0
  %3019 = vmatprep.subr.mxu0 0.0
  %3020 = vmatpush1.msra.mxu0 0.0
  %3021 = vmatprep.subr.mxu0 0.0
  %3022 = vmatpush1.msra.mxu0 0.0
  %3023 = vmatprep.subr.mxu0 0.0
  %3024 = vmatpush1.msra.mxu0 0.0
  %3025 = vmatprep.subr.mxu0 0.0
  %3026 = vmatpush1.msra.mxu0 0.0
  %3027 = vmatprep.subr.mxu0 0.0
  %3028 = vmatpush1.msra.mxu0 0.0
  %3029 = vmatprep.subr.mxu0 0.0
  %3030 = vmatpush1.msra.mxu0 0.0
  %3031 = vmatprep.subr.mxu0 0.0
  %3032 = vmatpush1.msra.mxu0 0.0
  %3033 = vmatprep.subr.mxu0 0.0
  %3034 = vmatpush1.msra.mxu0 0.0
  %3035 = vmatprep.subr.mxu0 0.0
  %3036 = vmatpush1.msra.mxu0 0.0
  %3037 = vmatprep.subr.mxu0 0.0
  %3038 = vmatpush1.msra.mxu0 0.0
  %3039 = vmatprep.subr.mxu0 0.0
  %3040 = vmatpush1.msra.mxu0 0.0
  %3041 = vmatprep.subr.mxu0 0.0
  %3042 = vmatpush1.msra.mxu0 0.0
  %3043 = vmatprep.subr.mxu0 0.0
  %3044 = vmatpush1.msra.mxu0 %v26
  %3045 = vmatprep.subr.mxu0 0.0
  %3046 = vmatpush1.msra.mxu0 %v25
  %3047 = vmatprep.subr.mxu0 0.0
  %3048 = vmatpush1.msra.mxu0 %v24
  %3049 = vmatprep.subr.mxu0 0.0
  %3050 = vmatpush1.msra.mxu0 %v23
  %3051 = vmatprep.subr.mxu0 0.0
  %3052 = vmatpush2.msra.mxu0 0.0
  %3053 = vmatprep.subr.mxu0 0.0
  %3054 = vmatpush2.msra.mxu0 0.0
  %3055 = vmatprep.subr.mxu0 0.0
  %3056 = vmatpush2.msra.mxu0 0.0
  %3057 = vmatprep.subr.mxu0 0.0
  %3058 = vmatpush2.msra.mxu0 0.0
  %3059 = vmatprep.subr.mxu0 0.0
  %3060 = vmatpush2.msra.mxu0 0.0
  %3061 = vmatprep.subr.mxu0 0.0
  %3062 = vmatpush2.msra.mxu0 0.0
  %3063 = vmatprep.subr.mxu0 0.0
  %3064 = vmatpush2.msra.mxu0 0.0
  %3065 = vmatprep.subr.mxu0 0.0
  %3066 = vmatpush2.msra.mxu0 0.0
  %3067 = vmatprep.subr.mxu0 0.0
  %3068 = vmatpush2.msra.mxu0 0.0
  %3069 = vmatprep.subr.mxu0 0.0
  %3070 = vmatpush2.msra.mxu0 0.0
  %3071 = vmatprep.subr.mxu0 0.0
  %3072 = vmatpush2.msra.mxu0 0.0
  %3073 = vmatprep.subr.mxu0 0.0
  %3074 = vmatpush2.msra.mxu0 0.0
  %3075 = vmatprep.subr.mxu0 0.0
  %3076 = vmatpush2.msra.mxu0 0.0
  %3077 = vmatprep.subr.mxu0 0.0
  %3078 = vmatpush2.msra.mxu0 0.0
  %3079 = vmatprep.subr.mxu0 0.0
  %3080 = vmatpush2.msra.mxu0 0.0
  %3081 = vmatprep.subr.mxu0 0.0
  %3082 = vmatpush2.msra.mxu0 0.0
  %3083 = vmatprep.mubr.f32.mxu0 0.0
  %3084 = vmatmul.mubr.f32.gmra.mxu0 %v3017
  %v3085 = vpop.f32.mrf.mxu0
  %v3086 = vadd.f32 0.0, %v3085
  %v3087 = vpop.f32.mrf.mxu0
  %3088 = vdwg.mxu0
  %v3090 = vrot.slane %v3086, 1
  %v3091 = vrot.slane %v3086, 2
  %v3092 = vrot.slane %v3086, 3
  %v3093 = vrot.slane %v3086, 4
  %v3094 = vrot.slane %v3086, 5
  %v3095 = vrot.slane %v3086, 6
  %v3096 = vrot.slane %v3086, 7
  %v3105 = vadd.f32 %v3009, %v3086
  %v3106 = vadd.f32 %v3010, %v3090
  %v3107 = vadd.f32 %v3011, %v3091
  %v3108 = vadd.f32 %v3012, %v3092
  %v3109 = vadd.f32 %v3013, %v3093
  %v3110 = vadd.f32 %v3014, %v3094
  %v3111 = vadd.f32 %v3015, %v3095
  %v3112 = vadd.f32 %v3016, %v3096
  %v3113 = vxor.u32 %v3105, 2147483648
  %v3114 = vxor.u32 %v3106, 2147483648
  %v3115 = vxor.u32 %v3107, 2147483648
  %v3116 = vxor.u32 %v3108, 2147483648
  %v3117 = vxor.u32 %v3109, 2147483648
  %v3118 = vxor.u32 %v3110, 2147483648
  %v3119 = vxor.u32 %v3111, 2147483648
  %v3120 = vxor.u32 %v3112, 2147483648
  %v3121 = vmul.f32 %v3113, 1.442695
  %v3122 = vpow.pop %v3121
  %v3123 = vmul.f32 %v3114, 1.442695
  %v3124 = vpow.pop %v3123
  %v3125 = vmul.f32 %v3115, 1.442695
  %v3126 = vpow.pop %v3125
  %v3127 = vmul.f32 %v3116, 1.442695
  %v3128 = vpow.pop %v3127
  %v3129 = vmul.f32 %v3117, 1.442695
  %v3130 = vpow.pop %v3129
  %v3131 = vmul.f32 %v3118, 1.442695
  %v3132 = vpow.pop %v3131
  %v3133 = vmul.f32 %v3119, 1.442695
  %v3134 = vpow.pop %v3133
  %v3135 = vmul.f32 %v3120, 1.442695
  %v3136 = vpow.pop %v3135
  %v3137 = vadd.f32 %v3122, 1.0
  %v3138 = vadd.f32 %v3124, 1.0
  %v3139 = vadd.f32 %v3126, 1.0
  %v3140 = vadd.f32 %v3128, 1.0
  %v3141 = vadd.f32 %v3130, 1.0
  %v3142 = vadd.f32 %v3132, 1.0
  %v3143 = vadd.f32 %v3134, 1.0
  %v3144 = vadd.f32 %v3136, 1.0
  %v3145 = vrcp.pop %v3137
  %v3146 = vmul.f32 1.0, %v3145
  %v3147 = vrcp.pop %v3138
  %v3148 = vmul.f32 1.0, %v3147
  %v3149 = vrcp.pop %v3139
  %v3150 = vmul.f32 1.0, %v3149
  %v3151 = vrcp.pop %v3140
  %v3152 = vmul.f32 1.0, %v3151
  %v3153 = vrcp.pop %v3141
  %v3154 = vmul.f32 1.0, %v3153
  %v3155 = vrcp.pop %v3142
  %v3156 = vmul.f32 1.0, %v3155
  %v3157 = vrcp.pop %v3143
  %v3158 = vmul.f32 1.0, %v3157
  %v3159 = vrcp.pop %v3144
  %v3160 = vmul.f32 1.0, %v3159
  %v3161 = vtanh.pop %v3105
  %v3162 = vtanh.pop %v3106
  %v3163 = vtanh.pop %v3107
  %v3164 = vtanh.pop %v3108
  %v3165 = vtanh.pop %v3109
  %v3166 = vtanh.pop %v3110
  %v3167 = vtanh.pop %v3111
  %v3168 = vtanh.pop %v3112
  %v3169 = vmul.f32 %v3146, %v2826
  %v3170 = vmul.f32 %v3148, %v2827
  %v3171 = vmul.f32 %v3150, %v2828
  %v3172 = vmul.f32 %v3152, %v2829
  %v3173 = vmul.f32 %v3154, %v2830
  %v3174 = vmul.f32 %v3156, %v2831
  %v3175 = vmul.f32 %v3158, %v2832
  %v3176 = vmul.f32 %v3160, %v2833
  %3185 = vrot.lane.b32.xlu0 %v3161, 64
  %v3186 = vpop.permute.xlu0 %3185
  %3187 = vrot.lane.b32.xlu0 %v3162, 64
  %v3188 = vpop.permute.xlu0 %3187
  %3189 = vrot.lane.b32.xlu0 %v3163, 64
  %v3190 = vpop.permute.xlu0 %3189
  %3191 = vrot.lane.b32.xlu0 %v3164, 64
  %v3192 = vpop.permute.xlu0 %3191
  %3193 = vrot.lane.b32.xlu0 %v3165, 64
  %v3194 = vpop.permute.xlu0 %3193
  %3195 = vrot.lane.b32.xlu0 %v3166, 64
  %v3196 = vpop.permute.xlu0 %3195
  %3197 = vrot.lane.b32.xlu0 %v3167, 64
  %v3198 = vpop.permute.xlu0 %3197
  %3199 = vrot.lane.b32.xlu0 %v3168, 64
  %v3200 = vpop.permute.xlu0 %3199
  %v3209 = vmul.f32 %v3146, %v3186
  %v3210 = vmul.f32 %v3148, %v3188
  %v3211 = vmul.f32 %v3150, %v3190
  %v3212 = vmul.f32 %v3152, %v3192
  %v3213 = vmul.f32 %v3154, %v3194
  %v3214 = vmul.f32 %v3156, %v3196
  %v3215 = vmul.f32 %v3158, %v3198
  %v3216 = vmul.f32 %v3160, %v3200
  %3225 = vrot.lane.b32.xlu0 %v3209, 32
  %v3226 = vpop.permute.xlu0 %3225
  %3227 = vrot.lane.b32.xlu0 %v3210, 32
  %v3228 = vpop.permute.xlu0 %3227
  %3229 = vrot.lane.b32.xlu0 %v3211, 32
  %v3230 = vpop.permute.xlu0 %3229
  %3231 = vrot.lane.b32.xlu0 %v3212, 32
  %v3232 = vpop.permute.xlu0 %3231
  %3233 = vrot.lane.b32.xlu0 %v3213, 32
  %v3234 = vpop.permute.xlu0 %3233
  %3235 = vrot.lane.b32.xlu0 %v3214, 32
  %v3236 = vpop.permute.xlu0 %3235
  %3237 = vrot.lane.b32.xlu0 %v3215, 32
  %v3238 = vpop.permute.xlu0 %3237
  %3239 = vrot.lane.b32.xlu0 %v3216, 32
  %v3240 = vpop.permute.xlu0 %3239
  %v3249 = vadd.f32 %v3169, %v3226
  %v3250 = vadd.f32 %v3170, %v3228
  %v3251 = vadd.f32 %v3171, %v3230
  %v3252 = vadd.f32 %v3172, %v3232
  %v3253 = vadd.f32 %v3173, %v3234
  %v3254 = vadd.f32 %v3174, %v3236
  %v3255 = vadd.f32 %v3175, %v3238
  %v3256 = vadd.f32 %v3176, %v3240
  %v3257 = vtanh.pop %v3249
  %v3258 = vtanh.pop %v3250
  %v3259 = vtanh.pop %v3251
  %v3260 = vtanh.pop %v3252
  %v3261 = vtanh.pop %v3253
  %v3262 = vtanh.pop %v3254
  %v3263 = vtanh.pop %v3255
  %v3264 = vtanh.pop %v3256
  %3273 = vrot.lane.b32.xlu0 %v3257, 64
  %v3274 = vpop.permute.xlu0 %3273
  %3275 = vrot.lane.b32.xlu0 %v3258, 64
  %v3276 = vpop.permute.xlu0 %3275
  %3277 = vrot.lane.b32.xlu0 %v3259, 64
  %v3278 = vpop.permute.xlu0 %3277
  %3279 = vrot.lane.b32.xlu0 %v3260, 64
  %v3280 = vpop.permute.xlu0 %3279
  %3281 = vrot.lane.b32.xlu0 %v3261, 64
  %v3282 = vpop.permute.xlu0 %3281
  %3283 = vrot.lane.b32.xlu0 %v3262, 64
  %v3284 = vpop.permute.xlu0 %3283
  %3285 = vrot.lane.b32.xlu0 %v3263, 64
  %v3286 = vpop.permute.xlu0 %3285
  %3287 = vrot.lane.b32.xlu0 %v3264, 64
  %v3288 = vpop.permute.xlu0 %3287
  %v3297 = vmul.f32 %v3146, %v3274
  %v3298 = vmul.f32 %v3148, %v3276
  %v3299 = vmul.f32 %v3150, %v3278
  %v3300 = vmul.f32 %v3152, %v3280
  %v3301 = vmul.f32 %v3154, %v3282
  %v3302 = vmul.f32 %v3156, %v3284
  %v3303 = vmul.f32 %v3158, %v3286
  %v3304 = vmul.f32 %v3160, %v3288
  %v3313 = vrot.slane %v3298, 7
  %v3314 = vsel %vm343, %v3313, %v3297
  %v3315 = vrot.slane %v3299, 6
  %v3316 = vsel %vm346, %v3315, %v3314
  %v3317 = vrot.slane %v3300, 5
  %v3318 = vsel %vm349, %v3317, %v3316
  %v3319 = vrot.slane %v3301, 4
  %v3320 = vsel %vm352, %v3319, %v3318
  %v3321 = vrot.slane %v3302, 3
  %v3322 = vsel %vm355, %v3321, %v3320
  %v3323 = vrot.slane %v3303, 2
  %v3324 = vsel %vm358, %v3323, %v3322
  %v3325 = vrot.slane %v3304, 1
  %v3326 = vsel %vm361, %v3325, %v3324
  %3327 = vrot.lane.b32.xlu0 %v3326, 32
  %v3328 = vpop.permute.xlu0 %3327
  %3331 = vrot.lane.b32.xlu0 %v3008, 64
  %v3332 = vpop.permute.xlu0 %3331
  %v3334 = vsel %vm44, %v3328, %v3332
  %v3336 = vsel %vm373, %v3334, 0
  %3338 = vmatprep.subr.mxu0 0.0
  %3339 = vmatpush1.msra.mxu0 0.0
  %3340 = vmatprep.subr.mxu0 0.0
  %3341 = vmatpush1.msra.mxu0 0.0
  %3342 = vmatprep.subr.mxu0 0.0
  %3343 = vmatpush1.msra.mxu0 0.0
  %3344 = vmatprep.subr.mxu0 0.0
  %3345 = vmatpush1.msra.mxu0 0.0
  %3346 = vmatprep.subr.mxu0 0.0
  %3347 = vmatpush1.msra.mxu0 0.0
  %3348 = vmatprep.subr.mxu0 0.0
  %3349 = vmatpush1.msra.mxu0 0.0
  %3350 = vmatprep.subr.mxu0 0.0
  %3351 = vmatpush1.msra.mxu0 0.0
  %3352 = vmatprep.subr.mxu0 0.0
  %3353 = vmatpush1.msra.mxu0 0.0
  %3354 = vmatprep.subr.mxu0 0.0
  %3355 = vmatpush1.msra.mxu0 %v34
  %3356 = vmatprep.subr.mxu0 0.0
  %3357 = vmatpush1.msra.mxu0 %v33
  %3358 = vmatprep.subr.mxu0 0.0
  %3359 = vmatpush1.msra.mxu0 %v32
  %3360 = vmatprep.subr.mxu0 0.0
  %3361 = vmatpush1.msra.mxu0 %v31
  %3362 = vmatprep.subr.mxu0 0.0
  %3363 = vmatpush1.msra.mxu0 %v30
  %3364 = vmatprep.subr.mxu0 0.0
  %3365 = vmatpush1.msra.mxu0 %v29
  %3366 = vmatprep.subr.mxu0 0.0
  %3367 = vmatpush1.msra.mxu0 %v28
  %3368 = vmatprep.subr.mxu0 0.0
  %3369 = vmatpush1.msra.mxu0 %v27
  %3370 = vmatprep.subr.mxu0 0.0
  %3371 = vmatpush2.msra.mxu0 0.0
  %3372 = vmatprep.subr.mxu0 0.0
  %3373 = vmatpush2.msra.mxu0 0.0
  %3374 = vmatprep.subr.mxu0 0.0
  %3375 = vmatpush2.msra.mxu0 0.0
  %3376 = vmatprep.subr.mxu0 0.0
  %3377 = vmatpush2.msra.mxu0 0.0
  %3378 = vmatprep.subr.mxu0 0.0
  %3379 = vmatpush2.msra.mxu0 0.0
  %3380 = vmatprep.subr.mxu0 0.0
  %3381 = vmatpush2.msra.mxu0 0.0
  %3382 = vmatprep.subr.mxu0 0.0
  %3383 = vmatpush2.msra.mxu0 0.0
  %3384 = vmatprep.subr.mxu0 0.0
  %3385 = vmatpush2.msra.mxu0 0.0
  %3386 = vmatprep.subr.mxu0 0.0
  %3387 = vmatpush2.msra.mxu0 0.0
  %3388 = vmatprep.subr.mxu0 0.0
  %3389 = vmatpush2.msra.mxu0 0.0
  %3390 = vmatprep.subr.mxu0 0.0
  %3391 = vmatpush2.msra.mxu0 0.0
  %3392 = vmatprep.subr.mxu0 0.0
  %3393 = vmatpush2.msra.mxu0 0.0
  %3394 = vmatprep.subr.mxu0 0.0
  %3395 = vmatpush2.msra.mxu0 0.0
  %3396 = vmatprep.subr.mxu0 0.0
  %3397 = vmatpush2.msra.mxu0 0.0
  %3398 = vmatprep.subr.mxu0 0.0
  %3399 = vmatpush2.msra.mxu0 0.0
  %3400 = vmatprep.subr.mxu0 0.0
  %3401 = vmatpush2.msra.mxu0 0.0
  %3402 = vmatprep.mubr.f32.mxu0 0.0
  %3403 = vmatmul.mubr.f32.gmra.mxu0 %v3336
  %v3404 = vpop.f32.mrf.mxu0
  %v3405 = vadd.f32 %v371, %v3404
  %v3406 = vpop.f32.mrf.mxu0
  %3407 = vdwg.mxu0
  %v3408 = vxor.u32 %v3405, 2147483648
  %v3409 = vmul.f32 %v3408, 1.442695
  %v3410 = vpow.pop %v3409
  %v3411 = vadd.f32 %v3410, 1.0
  %v3412 = vrcp.pop %v3411
  %v3413 = vmul.f32 1.0, %v3412
  %v3414 = vtanh.pop %v3405
  %v3415 = vmul.f32 %v3413, %v3002
  %3417 = vrot.lane.b32.xlu0 %v3414, 64
  %v3418 = vpop.permute.xlu0 %3417
  %v3420 = vmul.f32 %v3413, %v3418
  %3422 = vrot.lane.b32.xlu0 %v3420, 32
  %v3423 = vpop.permute.xlu0 %3422
  %v3425 = vadd.f32 %v3415, %v3423
  %v3426 = vtanh.pop %v3425
  %3428 = vrot.lane.b32.xlu0 %v3426, 64
  %v3429 = vpop.permute.xlu0 %3428
  %v3431 = vmul.f32 %v3413, %v3429
  %v3432 = vld [vmem:[%s4] sm:$0xff]
  %v3433 = vld [vmem:[%s4 + $0x8] sm:$0xff]
  %v3434 = vld [vmem:[%s4 + $0x10] sm:$0xff]
  %v3435 = vld [vmem:[%s4 + $0x18] sm:$0xff]
  %v3436 = vld [vmem:[%s5] sm:$0x1]
  %v3438 = vlaneseq
  %v3439 = vshrl.u32 %v3438, 7
  %v3440 = vsub.s32 0, %v3439
  %v3441 = vrot.slane %v3436, %v3440
  %3444 = vrot.lane.b32.xlu0 %v3431, 32
  %v3445 = vpop.permute.xlu0 %3444
  %v3446 = vsel %vm44, %v3445, 0
  %3448 = vmatprep.subr.mxu0 0.0
  %3449 = vmatpush1.msra.mxu0 0.0
  %3450 = vmatprep.subr.mxu0 0.0
  %3451 = vmatpush1.msra.mxu0 0.0
  %3452 = vmatprep.subr.mxu0 0.0
  %3453 = vmatpush1.msra.mxu0 0.0
  %3454 = vmatprep.subr.mxu0 0.0
  %3455 = vmatpush1.msra.mxu0 0.0
  %3456 = vmatprep.subr.mxu0 0.0
  %3457 = vmatpush1.msra.mxu0 0.0
  %3458 = vmatprep.subr.mxu0 0.0
  %3459 = vmatpush1.msra.mxu0 0.0
  %3460 = vmatprep.subr.mxu0 0.0
  %3461 = vmatpush1.msra.mxu0 0.0
  %3462 = vmatprep.subr.mxu0 0.0
  %3463 = vmatpush1.msra.mxu0 0.0
  %3464 = vmatprep.subr.mxu0 0.0
  %3465 = vmatpush1.msra.mxu0 0.0
  %3466 = vmatprep.subr.mxu0 0.0
  %3467 = vmatpush1.msra.mxu0 0.0
  %3468 = vmatprep.subr.mxu0 0.0
  %3469 = vmatpush1.msra.mxu0 0.0
  %3470 = vmatprep.subr.mxu0 0.0
  %3471 = vmatpush1.msra.mxu0 0.0
  %3472 = vmatprep.subr.mxu0 0.0
  %3473 = vmatpush1.msra.mxu0 %v3435
  %3474 = vmatprep.subr.mxu0 0.0
  %3475 = vmatpush1.msra.mxu0 %v3434
  %3476 = vmatprep.subr.mxu0 0.0
  %3477 = vmatpush1.msra.mxu0 %v3433
  %3478 = vmatprep.subr.mxu0 0.0
  %3479 = vmatpush1.msra.mxu0 %v3432
  %3480 = vmatprep.subr.mxu0 0.0
  %3481 = vmatpush2.msra.mxu0 0.0
  %3482 = vmatprep.subr.mxu0 0.0
  %3483 = vmatpush2.msra.mxu0 0.0
  %3484 = vmatprep.subr.mxu0 0.0
  %3485 = vmatpush2.msra.mxu0 0.0
  %3486 = vmatprep.subr.mxu0 0.0
  %3487 = vmatpush2.msra.mxu0 0.0
  %3488 = vmatprep.subr.mxu0 0.0
  %3489 = vmatpush2.msra.mxu0 0.0
  %3490 = vmatprep.subr.mxu0 0.0
  %3491 = vmatpush2.msra.mxu0 0.0
  %3492 = vmatprep.subr.mxu0 0.0
  %3493 = vmatpush2.msra.mxu0 0.0
  %3494 = vmatprep.subr.mxu0 0.0
  %3495 = vmatpush2.msra.mxu0 0.0
  %3496 = vmatprep.subr.mxu0 0.0
  %3497 = vmatpush2.msra.mxu0 0.0
  %3498 = vmatprep.subr.mxu0 0.0
  %3499 = vmatpush2.msra.mxu0 0.0
  %3500 = vmatprep.subr.mxu0 0.0
  %3501 = vmatpush2.msra.mxu0 0.0
  %3502 = vmatprep.subr.mxu0 0.0
  %3503 = vmatpush2.msra.mxu0 0.0
  %3504 = vmatprep.subr.mxu0 0.0
  %3505 = vmatpush2.msra.mxu0 0.0
  %3506 = vmatprep.subr.mxu0 0.0
  %3507 = vmatpush2.msra.mxu0 0.0
  %3508 = vmatprep.subr.mxu0 0.0
  %3509 = vmatpush2.msra.mxu0 0.0
  %3510 = vmatprep.subr.mxu0 0.0
  %3511 = vmatpush2.msra.mxu0 0.0
  %3512 = vmatprep.mubr.f32.mxu0 0.0
  %3513 = vmatmul.mubr.f32.gmra.mxu0 %v3446
  %v3514 = vpop.f32.mrf.mxu0
  %v3515 = vadd.f32 %v3441, %v3514
  %v3516 = vpop.f32.mrf.mxu0
  %3517 = vdwg.mxu0
  %3518 = vmax.xlane.f32.xlu0 %v3515
  %v3519 = vpop.xlane.xlu0 %3518
  %v3520 = vsub.f32 %v3515, %v3519
  %v3521 = vmul.f32 %v3520, 1.442695
  %v3522 = vpow.pop %v3521
  %3523 = vadd.xlane.f32.xlu0 %v3522
  %v3524 = vpop.xlane.xlu0 %3523
  %v3525 = vrcp.pop %v3524
  %v3526 = vmul.f32 %v3522, %v3525
  %3527 = vst [vmem:[%s6] sm:$0xff] %v3526
  // Predicated region
  $region26: #{lstm_classifier_forward.1} parent=0 // pred_check
    _
  $region27: #{lstm_classifier_forward.1} parent=0 // pred_check_branch
    %3529 = sbr.rel (0) target = $region29
  $region28: #{lstm_classifier_forward.1} parent=0 // pred_region
    _
  $region29: #{lstm_classifier_forward.1} parent=0 // pred_fallthru
    _
  // Predicated region
  $region30: #{lstm_classifier_forward.1} parent=0 // pred_check
    _
  $region31: #{lstm_classifier_forward.1} parent=0 // pred_check_branch
    %3531 = sbr.rel (0) target = $region33
  $region32: #{lstm_classifier_forward.1} parent=0 // pred_region
    _
  $region33: #{lstm_classifier_forward.1} parent=0 // pred_fallthru
    _

</llo_original>
